<compile_context>
chip_gen: v7x
topology: tpu7x:2x2x1
jax: 0.10.0
libtpu: 0.0.40
codegen_flags: <defaults>
</compile_context>

<pallas_src>
import math
import numpy as np
import jax
import jax.numpy as jnp
from jax import lax
from jax.experimental import pallas as pl
from jax.experimental.pallas import tpu as pltpu

# ----------------------------- model config ---------------------------------
BATCH       = 2
IMG         = 16                      # chw_shape = (1, 16, 16)
NUM_PATCHES = 4                       # 4x4 grid of patches
NUM_BLOCKS  = 2
HIDDEN      = 32
NUM_HEADS   = 4
NUM_CLASSES = 2
PATCH       = IMG // NUM_PATCHES      # 4
FLAT_PATCH  = PATCH * PATCH           # 16 (single channel)
SEQ         = NUM_PATCHES ** 2 + 1    # 17 tokens (cls + 16 patches)
HEAD_D      = HIDDEN // NUM_HEADS     # 8
MLP_HID     = 4 * HIDDEN              # 128
LN_EPS      = 1e-5
INV_SCALE   = 1.0 / math.sqrt(HEAD_D)
WDT         = jnp.bfloat16            # weight / MXU-input dtype
F32         = jnp.float32


# --------------------- helpers traced inside the kernel ---------------------
def _mm(a, b):
    # bf16 multiplies on the MXU, f32 accumulation.
    return jnp.dot(a.astype(WDT), b.astype(WDT), preferred_element_type=F32)


def _layernorm(x, g, b):
    mu = jnp.mean(x, axis=-1, keepdims=True)
    var = jnp.mean((x - mu) ** 2, axis=-1, keepdims=True)   # biased, like nn.LayerNorm
    return (x - mu) * lax.rsqrt(var + LN_EPS) * g + b


def _gelu_tanh(x):
    # tanh-approximate GELU (EUP); |err| vs exact GELU < ~1e-3.
    c = math.sqrt(2.0 / math.pi)
    return 0.5 * x * (1.0 + jnp.tanh(c * (x + 0.044715 * (x * x * x))))


# ----------------------------- fused ViT kernel ------------------------------
# One grid step == one image.  All weight slabs are VMEM-resident (constant
# index_maps); only the (SEQ, 16) patch slab changes per step.
def vit_kernel(patches_ref, embed_ref, wqkv_ref, wo_ref, ln_ref,
               w1_ref, w2_ref, head_ref, out_ref):
    # ---- patch embedding; cls token / pos embedding / patch-proj bias folded
    #      into the additive rows of the embed slab ----
    patches = patches_ref[0]                                         # (SEQ, 16) bf16
    wp      = embed_ref[0:FLAT_PATCH, :]                             # (16, D)  bf16
    eadd    = embed_ref[FLAT_PATCH:FLAT_PATCH + SEQ, :].astype(F32)  # (SEQ, D)
    x = _mm(patches, wp) + eadd                                      # (SEQ, D) f32

    for blk in range(NUM_BLOCKS):                                    # static unroll (2)
        last = blk == NUM_BLOCKS - 1
        ln = ln_ref[blk].astype(F32)                                 # (4, D)
        ln1_g, ln1_b, ln2_g, ln2_b = ln[0:1], ln[1:2], ln[2:3], ln[3:4]

        # ----- multi-head self-attention -----
        xn = _layernorm(x, ln1_g, ln1_b)                             # (SEQ, D) f32
        # fused Q/K/V: one (SEQ,32)@(32,96) GEMM + one bias-row add
        qkv = _mm(xn, wqkv_ref[blk, 0:HIDDEN, :]) \
            + wqkv_ref[blk, HIDDEN:HIDDEN + 1, :].astype(F32)        # (SEQ, 3D) f32

        # only the cls query row is needed in the last block
        nq = 1 if last else SEQ
        heads = []
        for h in range(NUM_HEADS):
            q_h = qkv[0:nq, h * HEAD_D:(h + 1) * HEAD_D].astype(WDT)
            k_h = qkv[:, HIDDEN + h * HEAD_D:HIDDEN + (h + 1) * HEAD_D].astype(WDT)
            v_h = qkv[:, 2 * HIDDEN + h * HEAD_D:2 * HIDDEN + (h + 1) * HEAD_D].astype(WDT)
            lg = jnp.einsum('nd,md->nm', q_h, k_h,
                            preferred_element_type=F32) * INV_SCALE  # (nq, SEQ) f32
            lg = lg - jnp.max(lg, axis=-1, keepdims=True)
            e = jnp.exp(lg)
            a = (e / jnp.sum(e, axis=-1, keepdims=True)).astype(WDT)
            heads.append(jnp.einsum('nm,md->nd', a, v_h,
                                    preferred_element_type=F32))     # (nq, dh) f32
        cat = jnp.concatenate(heads, axis=-1)                        # (nq, D) == hstack(heads)
        # collapsed output projection: one (nq,32)@(32,32) GEMM
        mha = _mm(cat, wo_ref[blk, 0:HIDDEN, :]) \
            + wo_ref[blk, HIDDEN:HIDDEN + 1, :].astype(F32)
        r1 = x[0:nq, :] + mha                                        # residual 1

        # ----- MLP (only the cls row in the last block) -----
        x2 = _layernorm(r1, ln2_g, ln2_b)
        hdn = _gelu_tanh(_mm(x2, w1_ref[blk, 0:HIDDEN, :])
                         + w1_ref[blk, HIDDEN:HIDDEN + 1, :].astype(F32))
        x = r1 + _mm(hdn, w2_ref[blk, 0:MLP_HID, :]) \
               + w2_ref[blk, MLP_HID:MLP_HID + 1, :].astype(F32)     # residual 2

    # ---- classifier head; after the last block x is the (1, D) cls row ----
    logits = _mm(x, head_ref[0:HIDDEN, :]) + head_ref[HIDDEN:HIDDEN + 1, :].astype(F32)
    out_ref[0, :, :] = logits                                        # (1, NUM_CLASSES)


# ----------------------------- glue (plain JAX) ------------------------------
def patchify_jax(images, n_patches):
    B, H, W = images.shape
    ps = H // n_patches
    p = images.reshape(B, n_patches, ps, n_patches, ps)
    p = p.transpose(0, 1, 3, 2, 4).reshape(B, n_patches * n_patches, ps * ps)
    return p


@jax.jit
def vit_forward(X, kp):
    B = X.shape[0]
    patches = patchify_jax(X, NUM_PATCHES)                           # (B, 16, 16)
    # zero "patch" in the cls slot; the embed slab's additive rows already hold
    # cls + pos[0] for that row.
    patches_pad = jnp.concatenate(
        [jnp.zeros((B, 1, FLAT_PATCH), X.dtype), patches], axis=1
    ).astype(WDT)                                                    # (B, SEQ, 16)

    out = pl.pallas_call(
        vit_kernel,
        out_shape=jax.ShapeDtypeStruct((B, 1, NUM_CLASSES), jnp.float32),
        grid_spec=pltpu.PrefetchScalarGridSpec(
            num_scalar_prefetch=0,
            grid=(B,),
            in_specs=[
                pl.BlockSpec((1, SEQ, FLAT_PATCH), lambda b: (b, 0, 0)),                 # patches
                pl.BlockSpec((FLAT_PATCH + SEQ, HIDDEN), lambda b: (0, 0)),              # wp + embed_add
                pl.BlockSpec((NUM_BLOCKS, HIDDEN + 1, 3 * HIDDEN), lambda b: (0, 0, 0)), # wqkv + bias
                pl.BlockSpec((NUM_BLOCKS, HIDDEN + 1, HIDDEN), lambda b: (0, 0, 0)),     # wo + bias
                pl.BlockSpec((NUM_BLOCKS, 4, HIDDEN), lambda b: (0, 0, 0)),              # LN params
                pl.BlockSpec((NUM_BLOCKS, HIDDEN + 1, MLP_HID), lambda b: (0, 0, 0)),    # w1 + bias
                pl.BlockSpec((NUM_BLOCKS, MLP_HID + 1, HIDDEN), lambda b: (0, 0, 0)),    # w2 + bias
                pl.BlockSpec((HIDDEN + 1, NUM_CLASSES), lambda b: (0, 0)),               # classifier
            ],
            out_specs=pl.BlockSpec((1, 1, NUM_CLASSES), lambda b: (b, 0, 0)),
        ),
        compiler_params=pltpu.CompilerParams(
            dimension_semantics=("parallel",)),
    )(patches_pad, kp["embed"], kp["wqkv"], kp["wo"], kp["ln"],
      kp["w1"], kp["w2"], kp["head"])
    return out[:, 0, :]


# ----------------------------- parameters ------------------------------------
def get_positional_embeddings(seq_len, d):
    i = np.arange(seq_len, dtype=np.float64)[:, None]
    j = np.arange(d, dtype=np.float64)[None, :]
    angle = i / np.power(10000.0, (j - (j % 2)) / d)
    pe = np.where(j % 2 == 0, np.sin(angle), np.cos(angle))
    return jnp.asarray(pe.astype(np.float32))


def _linear(key, fan_in, fan_out):
    kw, kb = jax.random.split(key)
    bound = 1.0 / math.sqrt(fan_in)
    w = jax.random.uniform(kw, (fan_out, fan_in), jnp.float32, -bound, bound)
    b = jax.random.uniform(kb, (fan_out,), jnp.float32, -bound, bound)
    return w, b


def init_params(key):
    keys = list(jax.random.split(key, 4 + NUM_BLOCKS))
    p = {}
    wp, bp = _linear(keys[0], FLAT_PATCH, HIDDEN)
    p["wp_t"] = wp.T
    p["bp"] = bp[None, :]
    p["cls"] = jax.random.uniform(keys[1], (1, HIDDEN), jnp.float32)   # torch.rand
    p["pos"] = get_positional_embeddings(SEQ, HIDDEN)
    blocks = []
    for bidx in range(NUM_BLOCKS):
        bk = jax.random.split(keys[2 + bidx], 3 * NUM_HEADS + 3)
        qws, qbs, kws, kbs, vws, vbs = [], [], [], [], [], []
        for h in range(NUM_HEADS):   # per-head Linear(HIDDEN -> HEAD_D), stacked like hstack
            qw, qb = _linear(bk[3 * h + 0], HIDDEN, HEAD_D)
            kw, kb_ = _linear(bk[3 * h + 1], HIDDEN, HEAD_D)
            vw, vb = _linear(bk[3 * h + 2], HIDDEN, HEAD_D)
            qws.append(qw); qbs.append(qb)
            kws.append(kw); kbs.append(kb_)
            vws.append(vw); vbs.append(vb)
        wo, bo = _linear(bk[3 * NUM_HEADS + 0], HIDDEN, HIDDEN)
        w1, b1 = _linear(bk[3 * NUM_HEADS + 1], HIDDEN, MLP_HID)
        w2, b2 = _linear(bk[3 * NUM_HEADS + 2], MLP_HID, HIDDEN)
        blocks.append(dict(
            ln1_g=jnp.ones((1, HIDDEN), jnp.float32),
            ln1_b=jnp.zeros((1, HIDDEN), jnp.float32),
            wq_t=jnp.concatenate(qws, 0).T, bq=jnp.concatenate(qbs)[None, :],
            wk_t=jnp.concatenate(kws, 0).T, bk=jnp.concatenate(kbs)[None, :],
            wv_t=jnp.concatenate(vws, 0).T, bv=jnp.concatenate(vbs)[None, :],
            wo_t=wo.T, bo=bo[None, :],
            ln2_g=jnp.ones((1, HIDDEN), jnp.float32),
            ln2_b=jnp.zeros((1, HIDDEN), jnp.float32),
            w1_t=w1.T, b1=b1[None, :],
            w2_t=w2.T, b2=b2[None, :],
        ))
    p["blocks"] = blocks
    wc, bc = _linear(keys[2 + NUM_BLOCKS], HIDDEN, NUM_CLASSES)
    p["wc_t"] = wc.T
    p["bc"] = bc[None, :]
    return p


def pack_params(p):
    """Pack the natural (torch-like) parameters into 7 bf16 slabs (each weight
    matrix carries its bias as an appended row) + 1 tiny f32 LayerNorm slab."""
    pos, cls, bp = p["pos"], p["cls"], p["bp"]
    # additive rows folding cls token, positional embedding and patch-proj bias:
    #   tokens = [0 ; patches] @ Wp^T + embed_add
    embed_add = jnp.concatenate([cls + pos[0:1], pos[1:] + bp], axis=0)      # (SEQ, D)
    embed = jnp.concatenate([p["wp_t"], embed_add], axis=0).astype(WDT)      # (16+SEQ, D)

    blocks = p["blocks"]
    wqkv = jnp.stack([
        jnp.concatenate(
            [jnp.concatenate([b["wq_t"], b["wk_t"], b["wv_t"]], axis=1),
             jnp.concatenate([b["bq"], b["bk"], b["bv"]], axis=1)], axis=0)
        for b in blocks], axis=0).astype(WDT)                                # (NB, 33, 96)
    wo = jnp.stack([jnp.concatenate([b["wo_t"], b["bo"]], axis=0)
                    for b in blocks], axis=0).astype(WDT)                    # (NB, 33, 32)
    ln = jnp.stack([jnp.concatenate([b["ln1_g"], b["ln1_b"],
                                     b["ln2_g"], b["ln2_b"]], axis=0)
                    for b in blocks], axis=0).astype(F32)                    # (NB, 4, 32)
    w1 = jnp.stack([jnp.concatenate([b["w1_t"], b["b1"]], axis=0)
                    for b in blocks], axis=0).astype(WDT)                    # (NB, 33, 128)
    w2 = jnp.stack([jnp.concatenate([b["w2_t"], b["b2"]], axis=0)
                    for b in blocks], axis=0).astype(WDT)                    # (NB, 129, 32)
    head = jnp.concatenate([p["wc_t"], p["bc"]], axis=0).astype(WDT)         # (33, 2)
    return dict(embed=embed, wqkv=wqkv, wo=wo, ln=ln, w1=w1, w2=w2, head=head)


# ----------------------------- pure-JAX reference ----------------------------
def _ln_ref(x, g, b):
    mu = jnp.mean(x, -1, keepdims=True)
    var = jnp.mean((x - mu) ** 2, -1, keepdims=True)
    return (x - mu) / jnp.sqrt(var + LN_EPS) * g + b


def vit_reference(X, p):
    with jax.default_matmul_precision("highest"):
        B = X.shape[0]
        patches = patchify_jax(X, NUM_PATCHES)
        emb = patches @ p["wp_t"] + p["bp"]
        cls = jnp.broadcast_to(p["cls"][None, :, :], (B, 1, HIDDEN))
        tokens = jnp.concatenate([cls, emb], axis=1) + p["pos"][None]
        for bp in p["blocks"]:
            xn = _ln_ref(tokens, bp["ln1_g"], bp["ln1_b"])
            q = xn @ bp["wq_t"] + bp["bq"]
            k = xn @ bp["wk_t"] + bp["bk"]
            v = xn @ bp["wv_t"] + bp["bv"]
            qh = q.reshape(B, SEQ, NUM_HEADS, HEAD_D)
            kh = k.reshape(B, SEQ, NUM_HEADS, HEAD_D)
            vh = v.reshape(B, SEQ, NUM_HEADS, HEAD_D)
            s = jnp.einsum("bthd,bshd->bhts", qh, kh) / math.sqrt(HEAD_D)
            a = jax.nn.softmax(s, axis=-1)
            o = jnp.einsum("bhts,bshd->bthd", a, vh).reshape(B, SEQ, HIDDEN)
            mha = o @ bp["wo_t"] + bp["bo"]
            r1 = tokens + mha
            x2 = _ln_ref(r1, bp["ln2_g"], bp["ln2_b"])
            h = x2 @ bp["w1_t"] + bp["b1"]
            h = jax.nn.gelu(h, approximate=False)
            mlp = h @ bp["w2_t"] + bp["b2"]
            tokens = r1 + mlp
        return tokens[:, 0, :] @ p["wc_t"] + p["bc"]


# ----------------------------- main -------------------------------------------
if __name__ == "__main__":
    key = jax.random.PRNGKey(0)
    k_x, k_p = jax.random.split(key)
    X = jax.random.uniform(k_x, (BATCH, IMG, IMG), jnp.float32)   # (B, H, W), 1 channel
    params = init_params(k_p)
    kp = pack_params(params)

    logits = vit_forward(X, kp)
    logits = jax.block_until_ready(logits)
    assert logits.shape == (BATCH, NUM_CLASSES)

    ref = np.asarray(vit_reference(X, params))
    got = np.asarray(logits)
    # Kernel uses bf16 weights / MXU multiplies (f32 accumulation) and tanh-GELU;
    # the reference is full-f32 highest-precision exact-GELU, so allow 3e-2.
    if not np.allclose(got, ref, atol=3e-2, rtol=3e-2):
        raise AssertionError(f"mismatch: max |diff| = {np.max(np.abs(got - ref))}")

    print("KERNEL_OK")
</pallas_src>

<mosaic_0001>
module attributes {stable_mosaic.version = 11 : i64} {
  func.func @vit_kernel(%arg0: i32, %arg1: memref<1x17x16xbf16, #tpu.memory_space<vmem>>, %arg2: memref<33x32xbf16, #tpu.memory_space<vmem>>, %arg3: memref<2x33x96xbf16, #tpu.memory_space<vmem>>, %arg4: memref<2x33x32xbf16, #tpu.memory_space<vmem>>, %arg5: memref<2x4x32xf32, #tpu.memory_space<vmem>>, %arg6: memref<2x33x128xbf16, #tpu.memory_space<vmem>>, %arg7: memref<2x129x32xbf16, #tpu.memory_space<vmem>>, %arg8: memref<33x2xbf16, #tpu.memory_space<vmem>>, %arg9: memref<1x1x2xf32, #tpu.memory_space<vmem>>) attributes {dimension_semantics = [#tpu.dimension_semantics<parallel>], iteration_bounds = array<i64: 2>, scalar_prefetch = 0 : i64, scratch_operands = 0 : i64, tpu.core_type = #tpu.core_type<tc>, window_params = [{transform_indices = @transform_0, window_bounds = array<i64: 1, 17, 16>}, {pipeline_mode = #tpu.pipeline_mode<synchronous>, transform_indices = @transform_1, window_bounds = array<i64: 33, 32>}, {pipeline_mode = #tpu.pipeline_mode<synchronous>, transform_indices = @transform_2, window_bounds = array<i64: 2, 33, 96>}, {pipeline_mode = #tpu.pipeline_mode<synchronous>, transform_indices = @transform_3, window_bounds = array<i64: 2, 33, 32>}, {pipeline_mode = #tpu.pipeline_mode<synchronous>, transform_indices = @transform_4, window_bounds = array<i64: 2, 4, 32>}, {pipeline_mode = #tpu.pipeline_mode<synchronous>, transform_indices = @transform_5, window_bounds = array<i64: 2, 33, 128>}, {pipeline_mode = #tpu.pipeline_mode<synchronous>, transform_indices = @transform_6, window_bounds = array<i64: 2, 129, 32>}, {pipeline_mode = #tpu.pipeline_mode<synchronous>, transform_indices = @transform_7, window_bounds = array<i64: 33, 2>}, {transform_indices = @transform_8, window_bounds = array<i64: 1, 1, 2>}]} {
    %c0 = arith.constant 0 : index
    %c0_0 = arith.constant 0 : index
    %c0_1 = arith.constant 0 : index
    %0 = vector.load %arg1[%c0, %c0_0, %c0_1] : memref<1x17x16xbf16, #tpu.memory_space<vmem>>, vector<1x17x16xbf16>
    %1 = vector.shape_cast %0 : vector<1x17x16xbf16> to vector<17x16xbf16>
    %c0_2 = arith.constant 0 : index
    %c0_3 = arith.constant 0 : index
    %2 = vector.load %arg2[%c0_2, %c0_3] : memref<33x32xbf16, #tpu.memory_space<vmem>>, vector<16x32xbf16>
    %c16 = arith.constant 16 : index
    %c0_4 = arith.constant 0 : index
    %3 = vector.load %arg2[%c16, %c0_4] : memref<33x32xbf16, #tpu.memory_space<vmem>>, vector<17x32xbf16>
    %4 = arith.extf %3 : vector<17x32xbf16> to vector<17x32xf32>
    %cst = arith.constant dense<0.000000e+00> : vector<17x32xf32>
    %5 = tpu.matmul %1, %2, %cst {dimension_numbers = #tpu.dot_dimension_numbers<[1], [0], [0], [1], [0, 0, 1, 1], [], []>} : vector<17x16xbf16>, vector<16x32xbf16>, vector<17x32xf32> -> vector<17x32xf32>
    %6 = arith.addf %5, %4 : vector<17x32xf32>
    %c0_5 = arith.constant 0 : index
    %c0_6 = arith.constant 0 : index
    %c0_7 = arith.constant 0 : index
    %7 = vector.load %arg5[%c0_5, %c0_6, %c0_7] : memref<2x4x32xf32, #tpu.memory_space<vmem>>, vector<1x4x32xf32>
    %8 = vector.shape_cast %7 : vector<1x4x32xf32> to vector<4x32xf32>
    %9 = vector.extract_strided_slice %8 {offsets = [0, 0], sizes = [1, 32], strides = [1, 1]} : vector<4x32xf32> to vector<1x32xf32>
    %10 = vector.extract_strided_slice %8 {offsets = [1, 0], sizes = [1, 32], strides = [1, 1]} : vector<4x32xf32> to vector<1x32xf32>
    %11 = vector.extract_strided_slice %8 {offsets = [2, 0], sizes = [1, 32], strides = [1, 1]} : vector<4x32xf32> to vector<1x32xf32>
    %12 = vector.extract_strided_slice %8 {offsets = [3, 0], sizes = [1, 32], strides = [1, 1]} : vector<4x32xf32> to vector<1x32xf32>
    %cst_8 = arith.constant dense<0.000000e+00> : vector<17xf32>
    %13 = vector.multi_reduction <add>, %6, %cst_8 [1] : vector<17x32xf32> to vector<17xf32>
    %14 = vector.shape_cast %13 : vector<17xf32> to vector<17x1xf32>
    %cst_9 = arith.constant 3.200000e+01 : f32
    %15 = vector.broadcast %cst_9 : f32 to vector<17x1xf32>
    %16 = arith.divf %14, %15 : vector<17x1xf32>
    %17 = vector.broadcast %16 : vector<17x1xf32> to vector<17x32xf32>
    %18 = arith.subf %6, %17 : vector<17x32xf32>
    %19 = arith.mulf %18, %18 : vector<17x32xf32>
    %cst_10 = arith.constant dense<0.000000e+00> : vector<17xf32>
    %20 = vector.multi_reduction <add>, %19, %cst_10 [1] : vector<17x32xf32> to vector<17xf32>
    %21 = vector.shape_cast %20 : vector<17xf32> to vector<17x1xf32>
    %cst_11 = arith.constant 3.200000e+01 : f32
    %22 = vector.broadcast %cst_11 : f32 to vector<17x1xf32>
    %23 = arith.divf %21, %22 : vector<17x1xf32>
    %24 = vector.broadcast %16 : vector<17x1xf32> to vector<17x32xf32>
    %25 = arith.subf %6, %24 : vector<17x32xf32>
    %cst_12 = arith.constant 9.99999974E-6 : f32
    %26 = vector.broadcast %cst_12 : f32 to vector<17x1xf32>
    %27 = arith.addf %23, %26 : vector<17x1xf32>
    %28 = math.rsqrt %27 : vector<17x1xf32>
    %29 = vector.broadcast %28 : vector<17x1xf32> to vector<17x32xf32>
    %30 = arith.mulf %25, %29 : vector<17x32xf32>
    %31 = vector.broadcast %9 : vector<1x32xf32> to vector<17x32xf32>
    %32 = arith.mulf %30, %31 : vector<17x32xf32>
    %33 = vector.broadcast %10 : vector<1x32xf32> to vector<17x32xf32>
    %34 = arith.addf %32, %33 : vector<17x32xf32>
    %c0_13 = arith.constant 0 : index
    %c0_14 = arith.constant 0 : index
    %c0_15 = arith.constant 0 : index
    %35 = vector.load %arg3[%c0_13, %c0_14, %c0_15] : memref<2x33x96xbf16, #tpu.memory_space<vmem>>, vector<1x32x96xbf16>
    %36 = vector.shape_cast %35 : vector<1x32x96xbf16> to vector<32x96xbf16>
    %37 = arith.truncf %34 : vector<17x32xf32> to vector<17x32xbf16>
    %cst_16 = arith.constant dense<0.000000e+00> : vector<17x96xf32>
    %38 = tpu.matmul %37, %36, %cst_16 {dimension_numbers = #tpu.dot_dimension_numbers<[1], [0], [0], [1], [0, 0, 1, 1], [], []>} : vector<17x32xbf16>, vector<32x96xbf16>, vector<17x96xf32> -> vector<17x96xf32>
    %c0_17 = arith.constant 0 : index
    %c32 = arith.constant 32 : index
    %c0_18 = arith.constant 0 : index
    %39 = vector.load %arg3[%c0_17, %c32, %c0_18] : memref<2x33x96xbf16, #tpu.memory_space<vmem>>, vector<1x1x96xbf16>
    %40 = vector.shape_cast %39 : vector<1x1x96xbf16> to vector<1x96xbf16>
    %41 = arith.extf %40 : vector<1x96xbf16> to vector<1x96xf32>
    %42 = vector.broadcast %41 : vector<1x96xf32> to vector<17x96xf32>
    %43 = arith.addf %38, %42 : vector<17x96xf32>
    %44 = vector.extract_strided_slice %43 {offsets = [0, 0], sizes = [17, 8], strides = [1, 1]} : vector<17x96xf32> to vector<17x8xf32>
    %45 = arith.truncf %44 : vector<17x8xf32> to vector<17x8xbf16>
    %46 = vector.extract_strided_slice %43 {offsets = [0, 32], sizes = [17, 8], strides = [1, 1]} : vector<17x96xf32> to vector<17x8xf32>
    %47 = arith.truncf %46 : vector<17x8xf32> to vector<17x8xbf16>
    %48 = vector.extract_strided_slice %43 {offsets = [0, 64], sizes = [17, 8], strides = [1, 1]} : vector<17x96xf32> to vector<17x8xf32>
    %49 = arith.truncf %48 : vector<17x8xf32> to vector<17x8xbf16>
    "tpu.trace_start"() <{level = 10 : i32, message = "nd,md->nm"}> : () -> ()
    %cst_19 = arith.constant dense<0.000000e+00> : vector<17x17xf32>
    %50 = tpu.matmul %45, %47, %cst_19 {dimension_numbers = #tpu.dot_dimension_numbers<[1], [1], [0], [0], [0, 0, 1, 0], [], []>} : vector<17x8xbf16>, vector<17x8xbf16>, vector<17x17xf32> -> vector<17x17xf32>
    "tpu.trace_stop"() : () -> ()
    %cst_20 = arith.constant 0.353553385 : f32
    %51 = vector.broadcast %cst_20 : f32 to vector<17x17xf32>
    %52 = arith.mulf %50, %51 : vector<17x17xf32>
    %cst_21 = arith.constant dense<0xFF800000> : vector<17xf32>
    %53 = vector.multi_reduction <maximumf>, %52, %cst_21 [1] : vector<17x17xf32> to vector<17xf32>
    %54 = vector.shape_cast %53 : vector<17xf32> to vector<17x1xf32>
    %55 = vector.broadcast %54 : vector<17x1xf32> to vector<17x17xf32>
    %56 = arith.subf %52, %55 : vector<17x17xf32>
    %57 = math.exp %56 : vector<17x17xf32>
    %cst_22 = arith.constant dense<0.000000e+00> : vector<17xf32>
    %58 = vector.multi_reduction <add>, %57, %cst_22 [1] : vector<17x17xf32> to vector<17xf32>
    %59 = vector.shape_cast %58 : vector<17xf32> to vector<17x1xf32>
    %60 = vector.broadcast %59 : vector<17x1xf32> to vector<17x17xf32>
    %61 = arith.divf %57, %60 : vector<17x17xf32>
    %62 = arith.truncf %61 : vector<17x17xf32> to vector<17x17xbf16>
    "tpu.trace_start"() <{level = 10 : i32, message = "nm,md->nd"}> : () -> ()
    %cst_23 = arith.constant dense<0.000000e+00> : vector<17x8xf32>
    %63 = tpu.matmul %62, %49, %cst_23 {dimension_numbers = #tpu.dot_dimension_numbers<[1], [0], [0], [1], [0, 0, 1, 1], [], []>} : vector<17x17xbf16>, vector<17x8xbf16>, vector<17x8xf32> -> vector<17x8xf32>
    "tpu.trace_stop"() : () -> ()
    %64 = vector.extract_strided_slice %43 {offsets = [0, 8], sizes = [17, 8], strides = [1, 1]} : vector<17x96xf32> to vector<17x8xf32>
    %65 = arith.truncf %64 : vector<17x8xf32> to vector<17x8xbf16>
    %66 = vector.extract_strided_slice %43 {offsets = [0, 40], sizes = [17, 8], strides = [1, 1]} : vector<17x96xf32> to vector<17x8xf32>
    %67 = arith.truncf %66 : vector<17x8xf32> to vector<17x8xbf16>
    %68 = vector.extract_strided_slice %43 {offsets = [0, 72], sizes = [17, 8], strides = [1, 1]} : vector<17x96xf32> to vector<17x8xf32>
    %69 = arith.truncf %68 : vector<17x8xf32> to vector<17x8xbf16>
    "tpu.trace_start"() <{level = 10 : i32, message = "nd,md->nm"}> : () -> ()
    %cst_24 = arith.constant dense<0.000000e+00> : vector<17x17xf32>
    %70 = tpu.matmul %65, %67, %cst_24 {dimension_numbers = #tpu.dot_dimension_numbers<[1], [1], [0], [0], [0, 0, 1, 0], [], []>} : vector<17x8xbf16>, vector<17x8xbf16>, vector<17x17xf32> -> vector<17x17xf32>
    "tpu.trace_stop"() : () -> ()
    %cst_25 = arith.constant 0.353553385 : f32
    %71 = vector.broadcast %cst_25 : f32 to vector<17x17xf32>
    %72 = arith.mulf %70, %71 : vector<17x17xf32>
    %cst_26 = arith.constant dense<0xFF800000> : vector<17xf32>
    %73 = vector.multi_reduction <maximumf>, %72, %cst_26 [1] : vector<17x17xf32> to vector<17xf32>
    %74 = vector.shape_cast %73 : vector<17xf32> to vector<17x1xf32>
    %75 = vector.broadcast %74 : vector<17x1xf32> to vector<17x17xf32>
    %76 = arith.subf %72, %75 : vector<17x17xf32>
    %77 = math.exp %76 : vector<17x17xf32>
    %cst_27 = arith.constant dense<0.000000e+00> : vector<17xf32>
    %78 = vector.multi_reduction <add>, %77, %cst_27 [1] : vector<17x17xf32> to vector<17xf32>
    %79 = vector.shape_cast %78 : vector<17xf32> to vector<17x1xf32>
    %80 = vector.broadcast %79 : vector<17x1xf32> to vector<17x17xf32>
    %81 = arith.divf %77, %80 : vector<17x17xf32>
    %82 = arith.truncf %81 : vector<17x17xf32> to vector<17x17xbf16>
    "tpu.trace_start"() <{level = 10 : i32, message = "nm,md->nd"}> : () -> ()
    %cst_28 = arith.constant dense<0.000000e+00> : vector<17x8xf32>
    %83 = tpu.matmul %82, %69, %cst_28 {dimension_numbers = #tpu.dot_dimension_numbers<[1], [0], [0], [1], [0, 0, 1, 1], [], []>} : vector<17x17xbf16>, vector<17x8xbf16>, vector<17x8xf32> -> vector<17x8xf32>
    "tpu.trace_stop"() : () -> ()
    %84 = vector.extract_strided_slice %43 {offsets = [0, 16], sizes = [17, 8], strides = [1, 1]} : vector<17x96xf32> to vector<17x8xf32>
    %85 = arith.truncf %84 : vector<17x8xf32> to vector<17x8xbf16>
    %86 = vector.extract_strided_slice %43 {offsets = [0, 48], sizes = [17, 8], strides = [1, 1]} : vector<17x96xf32> to vector<17x8xf32>
    %87 = arith.truncf %86 : vector<17x8xf32> to vector<17x8xbf16>
    %88 = vector.extract_strided_slice %43 {offsets = [0, 80], sizes = [17, 8], strides = [1, 1]} : vector<17x96xf32> to vector<17x8xf32>
    %89 = arith.truncf %88 : vector<17x8xf32> to vector<17x8xbf16>
    "tpu.trace_start"() <{level = 10 : i32, message = "nd,md->nm"}> : () -> ()
    %cst_29 = arith.constant dense<0.000000e+00> : vector<17x17xf32>
    %90 = tpu.matmul %85, %87, %cst_29 {dimension_numbers = #tpu.dot_dimension_numbers<[1], [1], [0], [0], [0, 0, 1, 0], [], []>} : vector<17x8xbf16>, vector<17x8xbf16>, vector<17x17xf32> -> vector<17x17xf32>
    "tpu.trace_stop"() : () -> ()
    %cst_30 = arith.constant 0.353553385 : f32
    %91 = vector.broadcast %cst_30 : f32 to vector<17x17xf32>
    %92 = arith.mulf %90, %91 : vector<17x17xf32>
    %cst_31 = arith.constant dense<0xFF800000> : vector<17xf32>
    %93 = vector.multi_reduction <maximumf>, %92, %cst_31 [1] : vector<17x17xf32> to vector<17xf32>
    %94 = vector.shape_cast %93 : vector<17xf32> to vector<17x1xf32>
    %95 = vector.broadcast %94 : vector<17x1xf32> to vector<17x17xf32>
    %96 = arith.subf %92, %95 : vector<17x17xf32>
    %97 = math.exp %96 : vector<17x17xf32>
    %cst_32 = arith.constant dense<0.000000e+00> : vector<17xf32>
    %98 = vector.multi_reduction <add>, %97, %cst_32 [1] : vector<17x17xf32> to vector<17xf32>
    %99 = vector.shape_cast %98 : vector<17xf32> to vector<17x1xf32>
    %100 = vector.broadcast %99 : vector<17x1xf32> to vector<17x17xf32>
    %101 = arith.divf %97, %100 : vector<17x17xf32>
    %102 = arith.truncf %101 : vector<17x17xf32> to vector<17x17xbf16>
    "tpu.trace_start"() <{level = 10 : i32, message = "nm,md->nd"}> : () -> ()
    %cst_33 = arith.constant dense<0.000000e+00> : vector<17x8xf32>
    %103 = tpu.matmul %102, %89, %cst_33 {dimension_numbers = #tpu.dot_dimension_numbers<[1], [0], [0], [1], [0, 0, 1, 1], [], []>} : vector<17x17xbf16>, vector<17x8xbf16>, vector<17x8xf32> -> vector<17x8xf32>
    "tpu.trace_stop"() : () -> ()
    %104 = vector.extract_strided_slice %43 {offsets = [0, 24], sizes = [17, 8], strides = [1, 1]} : vector<17x96xf32> to vector<17x8xf32>
    %105 = arith.truncf %104 : vector<17x8xf32> to vector<17x8xbf16>
    %106 = vector.extract_strided_slice %43 {offsets = [0, 56], sizes = [17, 8], strides = [1, 1]} : vector<17x96xf32> to vector<17x8xf32>
    %107 = arith.truncf %106 : vector<17x8xf32> to vector<17x8xbf16>
    %108 = vector.extract_strided_slice %43 {offsets = [0, 88], sizes = [17, 8], strides = [1, 1]} : vector<17x96xf32> to vector<17x8xf32>
    %109 = arith.truncf %108 : vector<17x8xf32> to vector<17x8xbf16>
    "tpu.trace_start"() <{level = 10 : i32, message = "nd,md->nm"}> : () -> ()
    %cst_34 = arith.constant dense<0.000000e+00> : vector<17x17xf32>
    %110 = tpu.matmul %105, %107, %cst_34 {dimension_numbers = #tpu.dot_dimension_numbers<[1], [1], [0], [0], [0, 0, 1, 0], [], []>} : vector<17x8xbf16>, vector<17x8xbf16>, vector<17x17xf32> -> vector<17x17xf32>
    "tpu.trace_stop"() : () -> ()
    %cst_35 = arith.constant 0.353553385 : f32
    %111 = vector.broadcast %cst_35 : f32 to vector<17x17xf32>
    %112 = arith.mulf %110, %111 : vector<17x17xf32>
    %cst_36 = arith.constant dense<0xFF800000> : vector<17xf32>
    %113 = vector.multi_reduction <maximumf>, %112, %cst_36 [1] : vector<17x17xf32> to vector<17xf32>
    %114 = vector.shape_cast %113 : vector<17xf32> to vector<17x1xf32>
    %115 = vector.broadcast %114 : vector<17x1xf32> to vector<17x17xf32>
    %116 = arith.subf %112, %115 : vector<17x17xf32>
    %117 = math.exp %116 : vector<17x17xf32>
    %cst_37 = arith.constant dense<0.000000e+00> : vector<17xf32>
    %118 = vector.multi_reduction <add>, %117, %cst_37 [1] : vector<17x17xf32> to vector<17xf32>
    %119 = vector.shape_cast %118 : vector<17xf32> to vector<17x1xf32>
    %120 = vector.broadcast %119 : vector<17x1xf32> to vector<17x17xf32>
    %121 = arith.divf %117, %120 : vector<17x17xf32>
    %122 = arith.truncf %121 : vector<17x17xf32> to vector<17x17xbf16>
    "tpu.trace_start"() <{level = 10 : i32, message = "nm,md->nd"}> : () -> ()
    %cst_38 = arith.constant dense<0.000000e+00> : vector<17x8xf32>
    %123 = tpu.matmul %122, %109, %cst_38 {dimension_numbers = #tpu.dot_dimension_numbers<[1], [0], [0], [1], [0, 0, 1, 1], [], []>} : vector<17x17xbf16>, vector<17x8xbf16>, vector<17x8xf32> -> vector<17x8xf32>
    "tpu.trace_stop"() : () -> ()
    %124 = tpu.concatenate %63, %83, %103, %123 in 1 : vector<17x8xf32>, vector<17x8xf32>, vector<17x8xf32>, vector<17x8xf32> -> vector<17x32xf32>
    %c0_39 = arith.constant 0 : index
    %c0_40 = arith.constant 0 : index
    %c0_41 = arith.constant 0 : index
    %125 = vector.load %arg4[%c0_39, %c0_40, %c0_41] : memref<2x33x32xbf16, #tpu.memory_space<vmem>>, vector<1x32x32xbf16>
    %126 = vector.shape_cast %125 : vector<1x32x32xbf16> to vector<32x32xbf16>
    %127 = arith.truncf %124 : vector<17x32xf32> to vector<17x32xbf16>
    %cst_42 = arith.constant dense<0.000000e+00> : vector<17x32xf32>
    %128 = tpu.matmul %127, %126, %cst_42 {dimension_numbers = #tpu.dot_dimension_numbers<[1], [0], [0], [1], [0, 0, 1, 1], [], []>} : vector<17x32xbf16>, vector<32x32xbf16>, vector<17x32xf32> -> vector<17x32xf32>
    %c0_43 = arith.constant 0 : index
    %c32_44 = arith.constant 32 : index
    %c0_45 = arith.constant 0 : index
    %129 = vector.load %arg4[%c0_43, %c32_44, %c0_45] : memref<2x33x32xbf16, #tpu.memory_space<vmem>>, vector<1x1x32xbf16>
    %130 = vector.shape_cast %129 : vector<1x1x32xbf16> to vector<1x32xbf16>
    %131 = arith.extf %130 : vector<1x32xbf16> to vector<1x32xf32>
    %132 = vector.broadcast %131 : vector<1x32xf32> to vector<17x32xf32>
    %133 = arith.addf %128, %132 : vector<17x32xf32>
    %134 = arith.addf %6, %133 : vector<17x32xf32>
    %cst_46 = arith.constant dense<0.000000e+00> : vector<17xf32>
    %135 = vector.multi_reduction <add>, %134, %cst_46 [1] : vector<17x32xf32> to vector<17xf32>
    %136 = vector.shape_cast %135 : vector<17xf32> to vector<17x1xf32>
    %cst_47 = arith.constant 3.200000e+01 : f32
    %137 = vector.broadcast %cst_47 : f32 to vector<17x1xf32>
    %138 = arith.divf %136, %137 : vector<17x1xf32>
    %139 = vector.broadcast %138 : vector<17x1xf32> to vector<17x32xf32>
    %140 = arith.subf %134, %139 : vector<17x32xf32>
    %141 = arith.mulf %140, %140 : vector<17x32xf32>
    %cst_48 = arith.constant dense<0.000000e+00> : vector<17xf32>
    %142 = vector.multi_reduction <add>, %141, %cst_48 [1] : vector<17x32xf32> to vector<17xf32>
    %143 = vector.shape_cast %142 : vector<17xf32> to vector<17x1xf32>
    %cst_49 = arith.constant 3.200000e+01 : f32
    %144 = vector.broadcast %cst_49 : f32 to vector<17x1xf32>
    %145 = arith.divf %143, %144 : vector<17x1xf32>
    %146 = vector.broadcast %138 : vector<17x1xf32> to vector<17x32xf32>
    %147 = arith.subf %134, %146 : vector<17x32xf32>
    %cst_50 = arith.constant 9.99999974E-6 : f32
    %148 = vector.broadcast %cst_50 : f32 to vector<17x1xf32>
    %149 = arith.addf %145, %148 : vector<17x1xf32>
    %150 = math.rsqrt %149 : vector<17x1xf32>
    %151 = vector.broadcast %150 : vector<17x1xf32> to vector<17x32xf32>
    %152 = arith.mulf %147, %151 : vector<17x32xf32>
    %153 = vector.broadcast %11 : vector<1x32xf32> to vector<17x32xf32>
    %154 = arith.mulf %152, %153 : vector<17x32xf32>
    %155 = vector.broadcast %12 : vector<1x32xf32> to vector<17x32xf32>
    %156 = arith.addf %154, %155 : vector<17x32xf32>
    %c0_51 = arith.constant 0 : index
    %c0_52 = arith.constant 0 : index
    %c0_53 = arith.constant 0 : index
    %157 = vector.load %arg6[%c0_51, %c0_52, %c0_53] : memref<2x33x128xbf16, #tpu.memory_space<vmem>>, vector<1x32x128xbf16>
    %158 = vector.shape_cast %157 : vector<1x32x128xbf16> to vector<32x128xbf16>
    %159 = arith.truncf %156 : vector<17x32xf32> to vector<17x32xbf16>
    %cst_54 = arith.constant dense<0.000000e+00> : vector<17x128xf32>
    %160 = tpu.matmul %159, %158, %cst_54 {dimension_numbers = #tpu.dot_dimension_numbers<[1], [0], [0], [1], [0, 0, 1, 1], [], []>} : vector<17x32xbf16>, vector<32x128xbf16>, vector<17x128xf32> -> vector<17x128xf32>
    %c0_55 = arith.constant 0 : index
    %c32_56 = arith.constant 32 : index
    %c0_57 = arith.constant 0 : index
    %161 = vector.load %arg6[%c0_55, %c32_56, %c0_57] : memref<2x33x128xbf16, #tpu.memory_space<vmem>>, vector<1x1x128xbf16>
    %162 = vector.shape_cast %161 : vector<1x1x128xbf16> to vector<1x128xbf16>
    %163 = arith.extf %162 : vector<1x128xbf16> to vector<1x128xf32>
    %164 = vector.broadcast %163 : vector<1x128xf32> to vector<17x128xf32>
    %165 = arith.addf %160, %164 : vector<17x128xf32>
    %cst_58 = arith.constant 5.000000e-01 : f32
    %166 = vector.broadcast %cst_58 : f32 to vector<17x128xf32>
    %167 = arith.mulf %166, %165 : vector<17x128xf32>
    %168 = arith.mulf %165, %165 : vector<17x128xf32>
    %169 = arith.mulf %168, %165 : vector<17x128xf32>
    %cst_59 = arith.constant 4.471500e-02 : f32
    %170 = vector.broadcast %cst_59 : f32 to vector<17x128xf32>
    %171 = arith.mulf %170, %169 : vector<17x128xf32>
    %172 = arith.addf %165, %171 : vector<17x128xf32>
    %cst_60 = arith.constant 0.797884583 : f32
    %173 = vector.broadcast %cst_60 : f32 to vector<17x128xf32>
    %174 = arith.mulf %173, %172 : vector<17x128xf32>
    %175 = math.tanh %174 : vector<17x128xf32>
    %cst_61 = arith.constant 1.000000e+00 : f32
    %176 = vector.broadcast %cst_61 : f32 to vector<17x128xf32>
    %177 = arith.addf %176, %175 : vector<17x128xf32>
    %178 = arith.mulf %167, %177 : vector<17x128xf32>
    %c0_62 = arith.constant 0 : index
    %c0_63 = arith.constant 0 : index
    %c0_64 = arith.constant 0 : index
    %179 = vector.load %arg7[%c0_62, %c0_63, %c0_64] : memref<2x129x32xbf16, #tpu.memory_space<vmem>>, vector<1x128x32xbf16>
    %180 = vector.shape_cast %179 : vector<1x128x32xbf16> to vector<128x32xbf16>
    %181 = arith.truncf %178 : vector<17x128xf32> to vector<17x128xbf16>
    %cst_65 = arith.constant dense<0.000000e+00> : vector<17x32xf32>
    %182 = tpu.matmul %181, %180, %cst_65 {dimension_numbers = #tpu.dot_dimension_numbers<[1], [0], [0], [1], [0, 0, 1, 1], [], []>} : vector<17x128xbf16>, vector<128x32xbf16>, vector<17x32xf32> -> vector<17x32xf32>
    %183 = arith.addf %134, %182 : vector<17x32xf32>
    %c0_66 = arith.constant 0 : index
    %c128 = arith.constant 128 : index
    %c0_67 = arith.constant 0 : index
    %184 = vector.load %arg7[%c0_66, %c128, %c0_67] : memref<2x129x32xbf16, #tpu.memory_space<vmem>>, vector<1x1x32xbf16>
    %185 = vector.shape_cast %184 : vector<1x1x32xbf16> to vector<1x32xbf16>
    %186 = arith.extf %185 : vector<1x32xbf16> to vector<1x32xf32>
    %187 = vector.broadcast %186 : vector<1x32xf32> to vector<17x32xf32>
    %188 = arith.addf %183, %187 : vector<17x32xf32>
    %c1 = arith.constant 1 : index
    %c0_68 = arith.constant 0 : index
    %c0_69 = arith.constant 0 : index
    %189 = vector.load %arg5[%c1, %c0_68, %c0_69] : memref<2x4x32xf32, #tpu.memory_space<vmem>>, vector<1x4x32xf32>
    %190 = vector.shape_cast %189 : vector<1x4x32xf32> to vector<4x32xf32>
    %191 = vector.extract_strided_slice %190 {offsets = [0, 0], sizes = [1, 32], strides = [1, 1]} : vector<4x32xf32> to vector<1x32xf32>
    %192 = vector.extract_strided_slice %190 {offsets = [1, 0], sizes = [1, 32], strides = [1, 1]} : vector<4x32xf32> to vector<1x32xf32>
    %193 = vector.extract_strided_slice %190 {offsets = [2, 0], sizes = [1, 32], strides = [1, 1]} : vector<4x32xf32> to vector<1x32xf32>
    %194 = vector.extract_strided_slice %190 {offsets = [3, 0], sizes = [1, 32], strides = [1, 1]} : vector<4x32xf32> to vector<1x32xf32>
    %cst_70 = arith.constant dense<0.000000e+00> : vector<17xf32>
    %195 = vector.multi_reduction <add>, %188, %cst_70 [1] : vector<17x32xf32> to vector<17xf32>
    %196 = vector.shape_cast %195 : vector<17xf32> to vector<17x1xf32>
    %cst_71 = arith.constant 3.200000e+01 : f32
    %197 = vector.broadcast %cst_71 : f32 to vector<17x1xf32>
    %198 = arith.divf %196, %197 : vector<17x1xf32>
    %199 = vector.broadcast %198 : vector<17x1xf32> to vector<17x32xf32>
    %200 = arith.subf %188, %199 : vector<17x32xf32>
    %201 = arith.mulf %200, %200 : vector<17x32xf32>
    %cst_72 = arith.constant dense<0.000000e+00> : vector<17xf32>
    %202 = vector.multi_reduction <add>, %201, %cst_72 [1] : vector<17x32xf32> to vector<17xf32>
    %203 = vector.shape_cast %202 : vector<17xf32> to vector<17x1xf32>
    %cst_73 = arith.constant 3.200000e+01 : f32
    %204 = vector.broadcast %cst_73 : f32 to vector<17x1xf32>
    %205 = arith.divf %203, %204 : vector<17x1xf32>
    %206 = vector.broadcast %198 : vector<17x1xf32> to vector<17x32xf32>
    %207 = arith.subf %188, %206 : vector<17x32xf32>
    %cst_74 = arith.constant 9.99999974E-6 : f32
    %208 = vector.broadcast %cst_74 : f32 to vector<17x1xf32>
    %209 = arith.addf %205, %208 : vector<17x1xf32>
    %210 = math.rsqrt %209 : vector<17x1xf32>
    %211 = vector.broadcast %210 : vector<17x1xf32> to vector<17x32xf32>
    %212 = arith.mulf %207, %211 : vector<17x32xf32>
    %213 = vector.broadcast %191 : vector<1x32xf32> to vector<17x32xf32>
    %214 = arith.mulf %212, %213 : vector<17x32xf32>
    %215 = vector.broadcast %192 : vector<1x32xf32> to vector<17x32xf32>
    %216 = arith.addf %214, %215 : vector<17x32xf32>
    %c1_75 = arith.constant 1 : index
    %c0_76 = arith.constant 0 : index
    %c0_77 = arith.constant 0 : index
    %217 = vector.load %arg3[%c1_75, %c0_76, %c0_77] : memref<2x33x96xbf16, #tpu.memory_space<vmem>>, vector<1x32x96xbf16>
    %218 = vector.shape_cast %217 : vector<1x32x96xbf16> to vector<32x96xbf16>
    %219 = arith.truncf %216 : vector<17x32xf32> to vector<17x32xbf16>
    %cst_78 = arith.constant dense<0.000000e+00> : vector<17x96xf32>
    %220 = tpu.matmul %219, %218, %cst_78 {dimension_numbers = #tpu.dot_dimension_numbers<[1], [0], [0], [1], [0, 0, 1, 1], [], []>} : vector<17x32xbf16>, vector<32x96xbf16>, vector<17x96xf32> -> vector<17x96xf32>
    %c1_79 = arith.constant 1 : index
    %c32_80 = arith.constant 32 : index
    %c0_81 = arith.constant 0 : index
    %221 = vector.load %arg3[%c1_79, %c32_80, %c0_81] : memref<2x33x96xbf16, #tpu.memory_space<vmem>>, vector<1x1x96xbf16>
    %222 = vector.shape_cast %221 : vector<1x1x96xbf16> to vector<1x96xbf16>
    %223 = arith.extf %222 : vector<1x96xbf16> to vector<1x96xf32>
    %224 = vector.broadcast %223 : vector<1x96xf32> to vector<17x96xf32>
    %225 = arith.addf %220, %224 : vector<17x96xf32>
    %226 = vector.extract_strided_slice %225 {offsets = [0, 0], sizes = [1, 8], strides = [1, 1]} : vector<17x96xf32> to vector<1x8xf32>
    %227 = arith.truncf %226 : vector<1x8xf32> to vector<1x8xbf16>
    %228 = vector.extract_strided_slice %225 {offsets = [0, 32], sizes = [17, 8], strides = [1, 1]} : vector<17x96xf32> to vector<17x8xf32>
    %229 = arith.truncf %228 : vector<17x8xf32> to vector<17x8xbf16>
    %230 = vector.extract_strided_slice %225 {offsets = [0, 64], sizes = [17, 8], strides = [1, 1]} : vector<17x96xf32> to vector<17x8xf32>
    %231 = arith.truncf %230 : vector<17x8xf32> to vector<17x8xbf16>
    "tpu.trace_start"() <{level = 10 : i32, message = "nd,md->nm"}> : () -> ()
    %cst_82 = arith.constant dense<0.000000e+00> : vector<1x17xf32>
    %232 = tpu.matmul %227, %229, %cst_82 {dimension_numbers = #tpu.dot_dimension_numbers<[1], [1], [0], [0], [0, 0, 1, 0], [], []>} : vector<1x8xbf16>, vector<17x8xbf16>, vector<1x17xf32> -> vector<1x17xf32>
    "tpu.trace_stop"() : () -> ()
    %cst_83 = arith.constant 0.353553385 : f32
    %233 = vector.broadcast %cst_83 : f32 to vector<1x17xf32>
    %234 = arith.mulf %232, %233 : vector<1x17xf32>
    %cst_84 = arith.constant dense<0xFF800000> : vector<1xf32>
    %235 = vector.multi_reduction <maximumf>, %234, %cst_84 [1] : vector<1x17xf32> to vector<1xf32>
    %236 = vector.shape_cast %235 : vector<1xf32> to vector<1x1xf32>
    %237 = vector.broadcast %236 : vector<1x1xf32> to vector<1x17xf32>
    %238 = arith.subf %234, %237 : vector<1x17xf32>
    %239 = math.exp %238 : vector<1x17xf32>
    %cst_85 = arith.constant dense<0.000000e+00> : vector<1xf32>
    %240 = vector.multi_reduction <add>, %239, %cst_85 [1] : vector<1x17xf32> to vector<1xf32>
    %241 = vector.shape_cast %240 : vector<1xf32> to vector<1x1xf32>
    %242 = vector.broadcast %241 : vector<1x1xf32> to vector<1x17xf32>
    %243 = arith.divf %239, %242 : vector<1x17xf32>
    %244 = arith.truncf %243 : vector<1x17xf32> to vector<1x17xbf16>
    "tpu.trace_start"() <{level = 10 : i32, message = "nm,md->nd"}> : () -> ()
    %cst_86 = arith.constant dense<0.000000e+00> : vector<1x8xf32>
    %245 = tpu.matmul %244, %231, %cst_86 {dimension_numbers = #tpu.dot_dimension_numbers<[1], [0], [0], [1], [0, 0, 1, 1], [], []>} : vector<1x17xbf16>, vector<17x8xbf16>, vector<1x8xf32> -> vector<1x8xf32>
    "tpu.trace_stop"() : () -> ()
    %246 = vector.extract_strided_slice %225 {offsets = [0, 8], sizes = [1, 8], strides = [1, 1]} : vector<17x96xf32> to vector<1x8xf32>
    %247 = arith.truncf %246 : vector<1x8xf32> to vector<1x8xbf16>
    %248 = vector.extract_strided_slice %225 {offsets = [0, 40], sizes = [17, 8], strides = [1, 1]} : vector<17x96xf32> to vector<17x8xf32>
    %249 = arith.truncf %248 : vector<17x8xf32> to vector<17x8xbf16>
    %250 = vector.extract_strided_slice %225 {offsets = [0, 72], sizes = [17, 8], strides = [1, 1]} : vector<17x96xf32> to vector<17x8xf32>
    %251 = arith.truncf %250 : vector<17x8xf32> to vector<17x8xbf16>
    "tpu.trace_start"() <{level = 10 : i32, message = "nd,md->nm"}> : () -> ()
    %cst_87 = arith.constant dense<0.000000e+00> : vector<1x17xf32>
    %252 = tpu.matmul %247, %249, %cst_87 {dimension_numbers = #tpu.dot_dimension_numbers<[1], [1], [0], [0], [0, 0, 1, 0], [], []>} : vector<1x8xbf16>, vector<17x8xbf16>, vector<1x17xf32> -> vector<1x17xf32>
    "tpu.trace_stop"() : () -> ()
    %cst_88 = arith.constant 0.353553385 : f32
    %253 = vector.broadcast %cst_88 : f32 to vector<1x17xf32>
    %254 = arith.mulf %252, %253 : vector<1x17xf32>
    %cst_89 = arith.constant dense<0xFF800000> : vector<1xf32>
    %255 = vector.multi_reduction <maximumf>, %254, %cst_89 [1] : vector<1x17xf32> to vector<1xf32>
    %256 = vector.shape_cast %255 : vector<1xf32> to vector<1x1xf32>
    %257 = vector.broadcast %256 : vector<1x1xf32> to vector<1x17xf32>
    %258 = arith.subf %254, %257 : vector<1x17xf32>
    %259 = math.exp %258 : vector<1x17xf32>
    %cst_90 = arith.constant dense<0.000000e+00> : vector<1xf32>
    %260 = vector.multi_reduction <add>, %259, %cst_90 [1] : vector<1x17xf32> to vector<1xf32>
    %261 = vector.shape_cast %260 : vector<1xf32> to vector<1x1xf32>
    %262 = vector.broadcast %261 : vector<1x1xf32> to vector<1x17xf32>
    %263 = arith.divf %259, %262 : vector<1x17xf32>
    %264 = arith.truncf %263 : vector<1x17xf32> to vector<1x17xbf16>
    "tpu.trace_start"() <{level = 10 : i32, message = "nm,md->nd"}> : () -> ()
    %cst_91 = arith.constant dense<0.000000e+00> : vector<1x8xf32>
    %265 = tpu.matmul %264, %251, %cst_91 {dimension_numbers = #tpu.dot_dimension_numbers<[1], [0], [0], [1], [0, 0, 1, 1], [], []>} : vector<1x17xbf16>, vector<17x8xbf16>, vector<1x8xf32> -> vector<1x8xf32>
    "tpu.trace_stop"() : () -> ()
    %266 = vector.extract_strided_slice %225 {offsets = [0, 16], sizes = [1, 8], strides = [1, 1]} : vector<17x96xf32> to vector<1x8xf32>
    %267 = arith.truncf %266 : vector<1x8xf32> to vector<1x8xbf16>
    %268 = vector.extract_strided_slice %225 {offsets = [0, 48], sizes = [17, 8], strides = [1, 1]} : vector<17x96xf32> to vector<17x8xf32>
    %269 = arith.truncf %268 : vector<17x8xf32> to vector<17x8xbf16>
    %270 = vector.extract_strided_slice %225 {offsets = [0, 80], sizes = [17, 8], strides = [1, 1]} : vector<17x96xf32> to vector<17x8xf32>
    %271 = arith.truncf %270 : vector<17x8xf32> to vector<17x8xbf16>
    "tpu.trace_start"() <{level = 10 : i32, message = "nd,md->nm"}> : () -> ()
    %cst_92 = arith.constant dense<0.000000e+00> : vector<1x17xf32>
    %272 = tpu.matmul %267, %269, %cst_92 {dimension_numbers = #tpu.dot_dimension_numbers<[1], [1], [0], [0], [0, 0, 1, 0], [], []>} : vector<1x8xbf16>, vector<17x8xbf16>, vector<1x17xf32> -> vector<1x17xf32>
    "tpu.trace_stop"() : () -> ()
    %cst_93 = arith.constant 0.353553385 : f32
    %273 = vector.broadcast %cst_93 : f32 to vector<1x17xf32>
    %274 = arith.mulf %272, %273 : vector<1x17xf32>
    %cst_94 = arith.constant dense<0xFF800000> : vector<1xf32>
    %275 = vector.multi_reduction <maximumf>, %274, %cst_94 [1] : vector<1x17xf32> to vector<1xf32>
    %276 = vector.shape_cast %275 : vector<1xf32> to vector<1x1xf32>
    %277 = vector.broadcast %276 : vector<1x1xf32> to vector<1x17xf32>
    %278 = arith.subf %274, %277 : vector<1x17xf32>
    %279 = math.exp %278 : vector<1x17xf32>
    %cst_95 = arith.constant dense<0.000000e+00> : vector<1xf32>
    %280 = vector.multi_reduction <add>, %279, %cst_95 [1] : vector<1x17xf32> to vector<1xf32>
    %281 = vector.shape_cast %280 : vector<1xf32> to vector<1x1xf32>
    %282 = vector.broadcast %281 : vector<1x1xf32> to vector<1x17xf32>
    %283 = arith.divf %279, %282 : vector<1x17xf32>
    %284 = arith.truncf %283 : vector<1x17xf32> to vector<1x17xbf16>
    "tpu.trace_start"() <{level = 10 : i32, message = "nm,md->nd"}> : () -> ()
    %cst_96 = arith.constant dense<0.000000e+00> : vector<1x8xf32>
    %285 = tpu.matmul %284, %271, %cst_96 {dimension_numbers = #tpu.dot_dimension_numbers<[1], [0], [0], [1], [0, 0, 1, 1], [], []>} : vector<1x17xbf16>, vector<17x8xbf16>, vector<1x8xf32> -> vector<1x8xf32>
    "tpu.trace_stop"() : () -> ()
    %286 = vector.extract_strided_slice %225 {offsets = [0, 24], sizes = [1, 8], strides = [1, 1]} : vector<17x96xf32> to vector<1x8xf32>
    %287 = arith.truncf %286 : vector<1x8xf32> to vector<1x8xbf16>
    %288 = vector.extract_strided_slice %225 {offsets = [0, 56], sizes = [17, 8], strides = [1, 1]} : vector<17x96xf32> to vector<17x8xf32>
    %289 = arith.truncf %288 : vector<17x8xf32> to vector<17x8xbf16>
    %290 = vector.extract_strided_slice %225 {offsets = [0, 88], sizes = [17, 8], strides = [1, 1]} : vector<17x96xf32> to vector<17x8xf32>
    %291 = arith.truncf %290 : vector<17x8xf32> to vector<17x8xbf16>
    "tpu.trace_start"() <{level = 10 : i32, message = "nd,md->nm"}> : () -> ()
    %cst_97 = arith.constant dense<0.000000e+00> : vector<1x17xf32>
    %292 = tpu.matmul %287, %289, %cst_97 {dimension_numbers = #tpu.dot_dimension_numbers<[1], [1], [0], [0], [0, 0, 1, 0], [], []>} : vector<1x8xbf16>, vector<17x8xbf16>, vector<1x17xf32> -> vector<1x17xf32>
    "tpu.trace_stop"() : () -> ()
    %cst_98 = arith.constant 0.353553385 : f32
    %293 = vector.broadcast %cst_98 : f32 to vector<1x17xf32>
    %294 = arith.mulf %292, %293 : vector<1x17xf32>
    %cst_99 = arith.constant dense<0xFF800000> : vector<1xf32>
    %295 = vector.multi_reduction <maximumf>, %294, %cst_99 [1] : vector<1x17xf32> to vector<1xf32>
    %296 = vector.shape_cast %295 : vector<1xf32> to vector<1x1xf32>
    %297 = vector.broadcast %296 : vector<1x1xf32> to vector<1x17xf32>
    %298 = arith.subf %294, %297 : vector<1x17xf32>
    %299 = math.exp %298 : vector<1x17xf32>
    %cst_100 = arith.constant dense<0.000000e+00> : vector<1xf32>
    %300 = vector.multi_reduction <add>, %299, %cst_100 [1] : vector<1x17xf32> to vector<1xf32>
    %301 = vector.shape_cast %300 : vector<1xf32> to vector<1x1xf32>
    %302 = vector.broadcast %301 : vector<1x1xf32> to vector<1x17xf32>
    %303 = arith.divf %299, %302 : vector<1x17xf32>
    %304 = arith.truncf %303 : vector<1x17xf32> to vector<1x17xbf16>
    "tpu.trace_start"() <{level = 10 : i32, message = "nm,md->nd"}> : () -> ()
    %cst_101 = arith.constant dense<0.000000e+00> : vector<1x8xf32>
    %305 = tpu.matmul %304, %291, %cst_101 {dimension_numbers = #tpu.dot_dimension_numbers<[1], [0], [0], [1], [0, 0, 1, 1], [], []>} : vector<1x17xbf16>, vector<17x8xbf16>, vector<1x8xf32> -> vector<1x8xf32>
    "tpu.trace_stop"() : () -> ()
    %306 = tpu.concatenate %245, %265, %285, %305 in 1 : vector<1x8xf32>, vector<1x8xf32>, vector<1x8xf32>, vector<1x8xf32> -> vector<1x32xf32>
    %c1_102 = arith.constant 1 : index
    %c0_103 = arith.constant 0 : index
    %c0_104 = arith.constant 0 : index
    %307 = vector.load %arg4[%c1_102, %c0_103, %c0_104] : memref<2x33x32xbf16, #tpu.memory_space<vmem>>, vector<1x32x32xbf16>
    %308 = vector.shape_cast %307 : vector<1x32x32xbf16> to vector<32x32xbf16>
    %309 = arith.truncf %306 : vector<1x32xf32> to vector<1x32xbf16>
    %cst_105 = arith.constant dense<0.000000e+00> : vector<1x32xf32>
    %310 = tpu.matmul %309, %308, %cst_105 {dimension_numbers = #tpu.dot_dimension_numbers<[1], [0], [0], [1], [0, 0, 1, 1], [], []>} : vector<1x32xbf16>, vector<32x32xbf16>, vector<1x32xf32> -> vector<1x32xf32>
    %c1_106 = arith.constant 1 : index
    %c32_107 = arith.constant 32 : index
    %c0_108 = arith.constant 0 : index
    %311 = vector.load %arg4[%c1_106, %c32_107, %c0_108] : memref<2x33x32xbf16, #tpu.memory_space<vmem>>, vector<1x1x32xbf16>
    %312 = vector.shape_cast %311 : vector<1x1x32xbf16> to vector<1x32xbf16>
    %313 = arith.extf %312 : vector<1x32xbf16> to vector<1x32xf32>
    %314 = arith.addf %310, %313 : vector<1x32xf32>
    %315 = vector.extract_strided_slice %188 {offsets = [0, 0], sizes = [1, 32], strides = [1, 1]} : vector<17x32xf32> to vector<1x32xf32>
    %316 = arith.addf %315, %314 : vector<1x32xf32>
    %cst_109 = arith.constant dense<0.000000e+00> : vector<1xf32>
    %317 = vector.multi_reduction <add>, %316, %cst_109 [1] : vector<1x32xf32> to vector<1xf32>
    %318 = vector.shape_cast %317 : vector<1xf32> to vector<1x1xf32>
    %cst_110 = arith.constant 3.200000e+01 : f32
    %319 = vector.broadcast %cst_110 : f32 to vector<1x1xf32>
    %320 = arith.divf %318, %319 : vector<1x1xf32>
    %321 = vector.broadcast %320 : vector<1x1xf32> to vector<1x32xf32>
    %322 = arith.subf %316, %321 : vector<1x32xf32>
    %323 = arith.mulf %322, %322 : vector<1x32xf32>
    %cst_111 = arith.constant dense<0.000000e+00> : vector<1xf32>
    %324 = vector.multi_reduction <add>, %323, %cst_111 [1] : vector<1x32xf32> to vector<1xf32>
    %325 = vector.shape_cast %324 : vector<1xf32> to vector<1x1xf32>
    %cst_112 = arith.constant 3.200000e+01 : f32
    %326 = vector.broadcast %cst_112 : f32 to vector<1x1xf32>
    %327 = arith.divf %325, %326 : vector<1x1xf32>
    %328 = vector.broadcast %320 : vector<1x1xf32> to vector<1x32xf32>
    %329 = arith.subf %316, %328 : vector<1x32xf32>
    %cst_113 = arith.constant 9.99999974E-6 : f32
    %330 = vector.broadcast %cst_113 : f32 to vector<1x1xf32>
    %331 = arith.addf %327, %330 : vector<1x1xf32>
    %332 = math.rsqrt %331 : vector<1x1xf32>
    %333 = vector.broadcast %332 : vector<1x1xf32> to vector<1x32xf32>
    %334 = arith.mulf %329, %333 : vector<1x32xf32>
    %335 = arith.mulf %334, %193 : vector<1x32xf32>
    %336 = arith.addf %335, %194 : vector<1x32xf32>
    %c1_114 = arith.constant 1 : index
    %c0_115 = arith.constant 0 : index
    %c0_116 = arith.constant 0 : index
    %337 = vector.load %arg6[%c1_114, %c0_115, %c0_116] : memref<2x33x128xbf16, #tpu.memory_space<vmem>>, vector<1x32x128xbf16>
    %338 = vector.shape_cast %337 : vector<1x32x128xbf16> to vector<32x128xbf16>
    %339 = arith.truncf %336 : vector<1x32xf32> to vector<1x32xbf16>
    %cst_117 = arith.constant dense<0.000000e+00> : vector<1x128xf32>
    %340 = tpu.matmul %339, %338, %cst_117 {dimension_numbers = #tpu.dot_dimension_numbers<[1], [0], [0], [1], [0, 0, 1, 1], [], []>} : vector<1x32xbf16>, vector<32x128xbf16>, vector<1x128xf32> -> vector<1x128xf32>
    %c1_118 = arith.constant 1 : index
    %c32_119 = arith.constant 32 : index
    %c0_120 = arith.constant 0 : index
    %341 = vector.load %arg6[%c1_118, %c32_119, %c0_120] : memref<2x33x128xbf16, #tpu.memory_space<vmem>>, vector<1x1x128xbf16>
    %342 = vector.shape_cast %341 : vector<1x1x128xbf16> to vector<1x128xbf16>
    %343 = arith.extf %342 : vector<1x128xbf16> to vector<1x128xf32>
    %344 = arith.addf %340, %343 : vector<1x128xf32>
    %cst_121 = arith.constant 5.000000e-01 : f32
    %345 = vector.broadcast %cst_121 : f32 to vector<1x128xf32>
    %346 = arith.mulf %345, %344 : vector<1x128xf32>
    %347 = arith.mulf %344, %344 : vector<1x128xf32>
    %348 = arith.mulf %347, %344 : vector<1x128xf32>
    %cst_122 = arith.constant 4.471500e-02 : f32
    %349 = vector.broadcast %cst_122 : f32 to vector<1x128xf32>
    %350 = arith.mulf %349, %348 : vector<1x128xf32>
    %351 = arith.addf %344, %350 : vector<1x128xf32>
    %cst_123 = arith.constant 0.797884583 : f32
    %352 = vector.broadcast %cst_123 : f32 to vector<1x128xf32>
    %353 = arith.mulf %352, %351 : vector<1x128xf32>
    %354 = math.tanh %353 : vector<1x128xf32>
    %cst_124 = arith.constant 1.000000e+00 : f32
    %355 = vector.broadcast %cst_124 : f32 to vector<1x128xf32>
    %356 = arith.addf %355, %354 : vector<1x128xf32>
    %357 = arith.mulf %346, %356 : vector<1x128xf32>
    %c1_125 = arith.constant 1 : index
    %c0_126 = arith.constant 0 : index
    %c0_127 = arith.constant 0 : index
    %358 = vector.load %arg7[%c1_125, %c0_126, %c0_127] : memref<2x129x32xbf16, #tpu.memory_space<vmem>>, vector<1x128x32xbf16>
    %359 = vector.shape_cast %358 : vector<1x128x32xbf16> to vector<128x32xbf16>
    %360 = arith.truncf %357 : vector<1x128xf32> to vector<1x128xbf16>
    %cst_128 = arith.constant dense<0.000000e+00> : vector<1x32xf32>
    %361 = tpu.matmul %360, %359, %cst_128 {dimension_numbers = #tpu.dot_dimension_numbers<[1], [0], [0], [1], [0, 0, 1, 1], [], []>} : vector<1x128xbf16>, vector<128x32xbf16>, vector<1x32xf32> -> vector<1x32xf32>
    %362 = arith.addf %316, %361 : vector<1x32xf32>
    %c1_129 = arith.constant 1 : index
    %c128_130 = arith.constant 128 : index
    %c0_131 = arith.constant 0 : index
    %363 = vector.load %arg7[%c1_129, %c128_130, %c0_131] : memref<2x129x32xbf16, #tpu.memory_space<vmem>>, vector<1x1x32xbf16>
    %364 = vector.shape_cast %363 : vector<1x1x32xbf16> to vector<1x32xbf16>
    %365 = arith.extf %364 : vector<1x32xbf16> to vector<1x32xf32>
    %366 = arith.addf %362, %365 : vector<1x32xf32>
    %c0_132 = arith.constant 0 : index
    %c0_133 = arith.constant 0 : index
    %367 = vector.load %arg8[%c0_132, %c0_133] : memref<33x2xbf16, #tpu.memory_space<vmem>>, vector<32x2xbf16>
    %368 = arith.truncf %366 : vector<1x32xf32> to vector<1x32xbf16>
    %cst_134 = arith.constant dense<0.000000e+00> : vector<1x2xf32>
    %369 = tpu.matmul %368, %367, %cst_134 {dimension_numbers = #tpu.dot_dimension_numbers<[1], [0], [0], [1], [0, 0, 1, 1], [], []>} : vector<1x32xbf16>, vector<32x2xbf16>, vector<1x2xf32> -> vector<1x2xf32>
    %c32_135 = arith.constant 32 : index
    %c0_136 = arith.constant 0 : index
    %370 = vector.load %arg8[%c32_135, %c0_136] : memref<33x2xbf16, #tpu.memory_space<vmem>>, vector<1x2xbf16>
    %371 = arith.extf %370 : vector<1x2xbf16> to vector<1x2xf32>
    %372 = arith.addf %369, %371 : vector<1x2xf32>
    %c0_137 = arith.constant 0 : index
    %c0_138 = arith.constant 0 : index
    %c0_139 = arith.constant 0 : index
    %373 = vector.load %arg9[%c0_137, %c0_138, %c0_139] : memref<1x1x2xf32, #tpu.memory_space<vmem>>, vector<1x1x2xf32>
    %374 = vector.shape_cast %373 : vector<1x1x2xf32> to vector<1x2xf32>
    %375 = vector.shape_cast %372 : vector<1x2xf32> to vector<1x1x2xf32>
    tpu.vector_store %arg9[%c0_137, %c0_138, %c0_139], %375 {strides = array<i32>} : memref<1x1x2xf32, #tpu.memory_space<vmem>>, vector<1x1x2xf32>,
    return
  }
  func.func @transform_0(%arg0: i32) -> (i32, i32, i32) {
    %c0_i32 = arith.constant 0 : i32
    %c0_i32_0 = arith.constant 0 : i32
    %c0_i32_1 = arith.constant 0 : i32
    return %arg0, %c0_i32, %c0_i32_0 : i32, i32, i32
  }
  func.func @transform_1(%arg0: i32) -> (i32, i32) {
    %c0_i32 = arith.constant 0 : i32
    %c0_i32_0 = arith.constant 0 : i32
    %c0_i32_1 = arith.constant 0 : i32
    return %c0_i32, %c0_i32_0 : i32, i32
  }
  func.func @transform_2(%arg0: i32) -> (i32, i32, i32) {
    %c0_i32 = arith.constant 0 : i32
    %c0_i32_0 = arith.constant 0 : i32
    %c0_i32_1 = arith.constant 0 : i32
    %c0_i32_2 = arith.constant 0 : i32
    return %c0_i32, %c0_i32_0, %c0_i32_1 : i32, i32, i32
  }
  func.func @transform_3(%arg0: i32) -> (i32, i32, i32) {
    %c0_i32 = arith.constant 0 : i32
    %c0_i32_0 = arith.constant 0 : i32
    %c0_i32_1 = arith.constant 0 : i32
    %c0_i32_2 = arith.constant 0 : i32
    return %c0_i32, %c0_i32_0, %c0_i32_1 : i32, i32, i32
  }
  func.func @transform_4(%arg0: i32) -> (i32, i32, i32) {
    %c0_i32 = arith.constant 0 : i32
    %c0_i32_0 = arith.constant 0 : i32
    %c0_i32_1 = arith.constant 0 : i32
    %c0_i32_2 = arith.constant 0 : i32
    return %c0_i32, %c0_i32_0, %c0_i32_1 : i32, i32, i32
  }
  func.func @transform_5(%arg0: i32) -> (i32, i32, i32) {
    %c0_i32 = arith.constant 0 : i32
    %c0_i32_0 = arith.constant 0 : i32
    %c0_i32_1 = arith.constant 0 : i32
    %c0_i32_2 = arith.constant 0 : i32
    return %c0_i32, %c0_i32_0, %c0_i32_1 : i32, i32, i32
  }
  func.func @transform_6(%arg0: i32) -> (i32, i32, i32) {
    %c0_i32 = arith.constant 0 : i32
    %c0_i32_0 = arith.constant 0 : i32
    %c0_i32_1 = arith.constant 0 : i32
    %c0_i32_2 = arith.constant 0 : i32
    return %c0_i32, %c0_i32_0, %c0_i32_1 : i32, i32, i32
  }
  func.func @transform_7(%arg0: i32) -> (i32, i32) {
    %c0_i32 = arith.constant 0 : i32
    %c0_i32_0 = arith.constant 0 : i32
    %c0_i32_1 = arith.constant 0 : i32
    return %c0_i32, %c0_i32_0 : i32, i32
  }
  func.func @transform_8(%arg0: i32) -> (i32, i32, i32) {
    %c0_i32 = arith.constant 0 : i32
    %c0_i32_0 = arith.constant 0 : i32
    %c0_i32_1 = arith.constant 0 : i32
    return %arg0, %c0_i32, %c0_i32_0 : i32, i32, i32
  }
}

</mosaic_0001>

<llo_original>
// kernel: vit_forward.1
$region0: #{vit_forward.1}
  #allocation0 [shape = 'u32[]', space=smem, size = 0x4, offset = 0x4, fixed_abs, tag = 'smem constant byte address 0x4 - core index']
  #allocation1 [shape = 'u32[144,128]{1,0:T(1,128)}', space=vmem, size = 0x12000, scoped, tag = 'internal scratch']
  %s0 = inlined_call_operand.vmem [shape: bf16[2,17,16], index: 0, kind: input, shape index: {}]
  %s1 = inlined_call_operand.vmem [shape: bf16[33,32], index: 1, kind: input, shape index: {}]
  %s2 = inlined_call_operand.vmem [shape: bf16[2,33,96], index: 2, kind: input, shape index: {}]
  %s3 = inlined_call_operand.vmem [shape: bf16[2,33,32], index: 3, kind: input, shape index: {}]
  %s4 = inlined_call_operand.vmem [shape: f32[2,4,32], index: 4, kind: input, shape index: {}]
  %s5 = inlined_call_operand.vmem [shape: bf16[2,33,128], index: 5, kind: input, shape index: {}]
  %s6 = inlined_call_operand.vmem [shape: bf16[2,129,32], index: 6, kind: input, shape index: {}]
  %s7 = inlined_call_operand.vmem [shape: bf16[33,2], index: 7, kind: input, shape index: {}]
  %s8 = inlined_call_operand.hbm [shape: f32[2,1,2], index: 8, kind: output, shape index: {}]
  %s9 = sld [smem:[#allocation0]]
  $region65: #{vit_forward.1} parent=0
    _
  %s11 = ssub.s32 1, %s9
  %s12 = scalar_select 0, %s11, %s9
  $region1: #{vit_forward.1} parent=0
    #allocation2 [shape = 'u8[1024]{0}', space=vmem, size = 0x400, scoped, tag = 'output window, operand 0']
    #allocation3 [shape = 's32[2]{0}', space=sflag, size = 0x8, scoped, tag = 'scoped memory for vit_forward.1']
    %13 = vsyncpa [#allocation3], 0
    %s14 = scalar_lea.sflag [#allocation3], 1
    %15 = vsyncpa %s14, 0
    loop: start=0, step=1, limit=4
    $region2: #{vit_forward.1} parent=1 // loop_pre_header
      _
    $region3: #{vit_forward.1} parent=1 // loop_header
      %s17 = sphi 0, %s21
      %p18 = scmp.ge.s32.totalorder %s17, 4
      %s27 = sphi 0, %s29
      %s30 = sphi 0, %s27
      %s31 = sphi 0, %s30
      %s47 = sphi 0, %s31
      %s51 = sphi 0, %s51
      %s53 = sphi 0, %s51
      %s54 = sphi 0, %s53
      %s68 = sphi 0, %s54
      %s72 = sphi 0, %s72
      %s74 = sphi 0, %s72
      %s75 = sphi 0, %s74
      %s89 = sphi 0, %s75
      %s93 = sphi 0, %s93
      %s95 = sphi 0, %s93
      %s96 = sphi 0, %s95
      %s110 = sphi 0, %s96
      %s114 = sphi 0, %s114
      %s116 = sphi 0, %s114
      %s117 = sphi 0, %s116
      %s131 = sphi 0, %s117
      %s135 = sphi 0, %s135
      %s137 = sphi 0, %s135
      %s138 = sphi 0, %s137
      %s152 = sphi 0, %s138
      %s156 = sphi 0, %s156
      %s158 = sphi 0, %s156
      %s159 = sphi 0, %s158
      %s173 = sphi 0, %s159
      %s177 = sphi 0, %s177
      %s179 = sphi 0, %s177
      %s180 = sphi 0, %s179
      %s194 = sphi 0, %s180
      %s200 = sphi 0, %s202
      %s203 = sphi 0, %s200
      %s204 = sphi 0, %s203
      %s220 = sphi 0, %s204
    $region4: #{vit_forward.1} parent=1 // loop_header_branch
      %20 = sbr.rel (%p18) target = $region8
    $region5: #{vit_forward.1} parent=1 // loop_body
      %s22 = ssub.s32 %s17, 1
      %s23 = ssub.s32 %s17, 2
      %s24 = sadd.s32 %s17, 1
      %s25 = ssub.s32 %s17, %s24
      %p26 = scmp.eq.s32.totalorder %s25, 0
      %s28 = sadd.s32 %s27, 1
      %s29 = scalar_select %p26, %s27, %s28
      %p32 = pneg %p26
      %p33 = scmp.eq.s32.totalorder %s17, 1
      %p34 = por %p32, %p33
      %p35 = scmp.ne.s32.totalorder %s27, %s30
      %p36 = scmp.eq.s32.totalorder %s17, 0
      %p37 = por %p35, %p36
      %p38 = scmp.ne.s32.totalorder %s27, %s30
      %p39 = scmp.eq.s32.totalorder %s22, 1
      %p40 = por %p38, %p39
      %p41 = scmp.ne.s32.totalorder %s30, %s31
      %p42 = scmp.eq.s32.totalorder %s22, 0
      %p43 = por %p41, %p42
      %p44 = scmp.ne.s32.totalorder %s30, %s31
      %p45 = scmp.eq.s32.totalorder %s23, 1
      %p46 = por %p44, %p45
      %p48 = scmp.ne.s32.totalorder %s31, %s47
      %p49 = scmp.eq.s32.totalorder %s23, 0
      %p50 = por %p48, %p49
      %s52 = sadd.s32 %s51, 1
      %p55 = scmp.eq.s32.totalorder %s17, 1
      %p56 = scmp.ne.s32.totalorder %s51, %s53
      %p57 = scmp.eq.s32.totalorder %s17, 0
      %p58 = por %p56, %p57
      %p59 = scmp.ne.s32.totalorder %s51, %s53
      %p60 = scmp.eq.s32.totalorder %s22, 1
      %p61 = por %p59, %p60
      %p62 = scmp.ne.s32.totalorder %s53, %s54
      %p63 = scmp.eq.s32.totalorder %s22, 0
      %p64 = por %p62, %p63
      %p65 = scmp.ne.s32.totalorder %s53, %s54
      %p66 = scmp.eq.s32.totalorder %s23, 1
      %p67 = por %p65, %p66
      %p69 = scmp.ne.s32.totalorder %s54, %s68
      %p70 = scmp.eq.s32.totalorder %s23, 0
      %p71 = por %p69, %p70
      %s73 = sadd.s32 %s72, 1
      %p76 = scmp.eq.s32.totalorder %s17, 1
      %p77 = scmp.ne.s32.totalorder %s72, %s74
      %p78 = scmp.eq.s32.totalorder %s17, 0
      %p79 = por %p77, %p78
      %p80 = scmp.ne.s32.totalorder %s72, %s74
      %p81 = scmp.eq.s32.totalorder %s22, 1
      %p82 = por %p80, %p81
      %p83 = scmp.ne.s32.totalorder %s74, %s75
      %p84 = scmp.eq.s32.totalorder %s22, 0
      %p85 = por %p83, %p84
      %p86 = scmp.ne.s32.totalorder %s74, %s75
      %p87 = scmp.eq.s32.totalorder %s23, 1
      %p88 = por %p86, %p87
      %p90 = scmp.ne.s32.totalorder %s75, %s89
      %p91 = scmp.eq.s32.totalorder %s23, 0
      %p92 = por %p90, %p91
      %s94 = sadd.s32 %s93, 1
      %p97 = scmp.eq.s32.totalorder %s17, 1
      %p98 = scmp.ne.s32.totalorder %s93, %s95
      %p99 = scmp.eq.s32.totalorder %s17, 0
      %p100 = por %p98, %p99
      %p101 = scmp.ne.s32.totalorder %s93, %s95
      %p102 = scmp.eq.s32.totalorder %s22, 1
      %p103 = por %p101, %p102
      %p104 = scmp.ne.s32.totalorder %s95, %s96
      %p105 = scmp.eq.s32.totalorder %s22, 0
      %p106 = por %p104, %p105
      %p107 = scmp.ne.s32.totalorder %s95, %s96
      %p108 = scmp.eq.s32.totalorder %s23, 1
      %p109 = por %p107, %p108
      %p111 = scmp.ne.s32.totalorder %s96, %s110
      %p112 = scmp.eq.s32.totalorder %s23, 0
      %p113 = por %p111, %p112
      %s115 = sadd.s32 %s114, 1
      %p118 = scmp.eq.s32.totalorder %s17, 1
      %p119 = scmp.ne.s32.totalorder %s114, %s116
      %p120 = scmp.eq.s32.totalorder %s17, 0
      %p121 = por %p119, %p120
      %p122 = scmp.ne.s32.totalorder %s114, %s116
      %p123 = scmp.eq.s32.totalorder %s22, 1
      %p124 = por %p122, %p123
      %p125 = scmp.ne.s32.totalorder %s116, %s117
      %p126 = scmp.eq.s32.totalorder %s22, 0
      %p127 = por %p125, %p126
      %p128 = scmp.ne.s32.totalorder %s116, %s117
      %p129 = scmp.eq.s32.totalorder %s23, 1
      %p130 = por %p128, %p129
      %p132 = scmp.ne.s32.totalorder %s117, %s131
      %p133 = scmp.eq.s32.totalorder %s23, 0
      %p134 = por %p132, %p133
      %s136 = sadd.s32 %s135, 1
      %p139 = scmp.eq.s32.totalorder %s17, 1
      %p140 = scmp.ne.s32.totalorder %s135, %s137
      %p141 = scmp.eq.s32.totalorder %s17, 0
      %p142 = por %p140, %p141
      %p143 = scmp.ne.s32.totalorder %s135, %s137
      %p144 = scmp.eq.s32.totalorder %s22, 1
      %p145 = por %p143, %p144
      %p146 = scmp.ne.s32.totalorder %s137, %s138
      %p147 = scmp.eq.s32.totalorder %s22, 0
      %p148 = por %p146, %p147
      %p149 = scmp.ne.s32.totalorder %s137, %s138
      %p150 = scmp.eq.s32.totalorder %s23, 1
      %p151 = por %p149, %p150
      %p153 = scmp.ne.s32.totalorder %s138, %s152
      %p154 = scmp.eq.s32.totalorder %s23, 0
      %p155 = por %p153, %p154
      %s157 = sadd.s32 %s156, 1
      %p160 = scmp.eq.s32.totalorder %s17, 1
      %p161 = scmp.ne.s32.totalorder %s156, %s158
      %p162 = scmp.eq.s32.totalorder %s17, 0
      %p163 = por %p161, %p162
      %p164 = scmp.ne.s32.totalorder %s156, %s158
      %p165 = scmp.eq.s32.totalorder %s22, 1
      %p166 = por %p164, %p165
      %p167 = scmp.ne.s32.totalorder %s158, %s159
      %p168 = scmp.eq.s32.totalorder %s22, 0
      %p169 = por %p167, %p168
      %p170 = scmp.ne.s32.totalorder %s158, %s159
      %p171 = scmp.eq.s32.totalorder %s23, 1
      %p172 = por %p170, %p171
      %p174 = scmp.ne.s32.totalorder %s159, %s173
      %p175 = scmp.eq.s32.totalorder %s23, 0
      %p176 = por %p174, %p175
      %s178 = sadd.s32 %s177, 1
      %p181 = scmp.eq.s32.totalorder %s17, 1
      %p182 = scmp.ne.s32.totalorder %s177, %s179
      %p183 = scmp.eq.s32.totalorder %s17, 0
      %p184 = por %p182, %p183
      %p185 = scmp.ne.s32.totalorder %s177, %s179
      %p186 = scmp.eq.s32.totalorder %s22, 1
      %p187 = por %p185, %p186
      %p188 = scmp.ne.s32.totalorder %s179, %s180
      %p189 = scmp.eq.s32.totalorder %s22, 0
      %p190 = por %p188, %p189
      %p191 = scmp.ne.s32.totalorder %s179, %s180
      %p192 = scmp.eq.s32.totalorder %s23, 1
      %p193 = por %p191, %p192
      %p195 = scmp.ne.s32.totalorder %s180, %s194
      %p196 = scmp.eq.s32.totalorder %s23, 0
      %p197 = por %p195, %p196
      %s198 = ssub.s32 %s17, %s24
      %p199 = scmp.eq.s32.totalorder %s198, 0
      %s201 = sadd.s32 %s200, 1
      %s202 = scalar_select %p199, %s200, %s201
      %p205 = pneg %p199
      %p206 = scmp.eq.s32.totalorder %s17, 1
      %p207 = por %p205, %p206
      %p208 = scmp.ne.s32.totalorder %s200, %s203
      %p209 = scmp.eq.s32.totalorder %s17, 0
      %p210 = por %p208, %p209
      %p211 = scmp.ne.s32.totalorder %s200, %s203
      %p212 = scmp.eq.s32.totalorder %s22, 1
      %p213 = por %p211, %p212
      %p214 = scmp.ne.s32.totalorder %s203, %s204
      %p215 = scmp.eq.s32.totalorder %s22, 0
      %p216 = por %p214, %p215
      %p217 = scmp.ne.s32.totalorder %s203, %s204
      %p218 = scmp.eq.s32.totalorder %s23, 1
      %p219 = por %p217, %p218
      %p221 = scmp.ne.s32.totalorder %s204, %s220
      %p222 = scmp.eq.s32.totalorder %s23, 0
      %p223 = por %p221, %p222
      %p224 = scmp.le.s32.totalorder 1, %s17
      %p225 = scmp.lt.s32.totalorder %s17, 3
      %p226 = pnand %p224, %p225
      %p227 = pneg %p226
      // Predicated region
      $region9: #{vit_forward.1} parent=5 // pred_check
        _
      $region10: #{vit_forward.1} parent=5 // pred_check_branch
        %229 = sbr.rel (%p226) target = $region12
      $region11: #{vit_forward.1} parent=5 // pred_region
        %s230 = ssub.s32 %s17, 1
        // Predicated region
        $region13: #{vit_forward.1} parent=11 // pred_check
          %p231 = pneg %p64
        $region14: #{vit_forward.1} parent=11 // pred_check_branch
          %233 = sbr.rel (%p231) target = $region16
        $region15: #{vit_forward.1} parent=11 // pred_region
          _
        $region16: #{vit_forward.1} parent=11 // pred_fallthru
          _
        // Predicated region
        $region17: #{vit_forward.1} parent=11 // pred_check
          %p234 = pneg %p85
        $region18: #{vit_forward.1} parent=11 // pred_check_branch
          %236 = sbr.rel (%p234) target = $region20
        $region19: #{vit_forward.1} parent=11 // pred_region
          _
        $region20: #{vit_forward.1} parent=11 // pred_fallthru
          _
        // Predicated region
        $region21: #{vit_forward.1} parent=11 // pred_check
          %p237 = pneg %p106
        $region22: #{vit_forward.1} parent=11 // pred_check_branch
          %239 = sbr.rel (%p237) target = $region24
        $region23: #{vit_forward.1} parent=11 // pred_region
          _
        $region24: #{vit_forward.1} parent=11 // pred_fallthru
          _
        // Predicated region
        $region25: #{vit_forward.1} parent=11 // pred_check
          %p240 = pneg %p127
        $region26: #{vit_forward.1} parent=11 // pred_check_branch
          %242 = sbr.rel (%p240) target = $region28
        $region27: #{vit_forward.1} parent=11 // pred_region
          _
        $region28: #{vit_forward.1} parent=11 // pred_fallthru
          _
        // Predicated region
        $region29: #{vit_forward.1} parent=11 // pred_check
          %p243 = pneg %p148
        $region30: #{vit_forward.1} parent=11 // pred_check_branch
          %245 = sbr.rel (%p243) target = $region32
        $region31: #{vit_forward.1} parent=11 // pred_region
          _
        $region32: #{vit_forward.1} parent=11 // pred_fallthru
          _
        // Predicated region
        $region33: #{vit_forward.1} parent=11 // pred_check
          %p246 = pneg %p169
        $region34: #{vit_forward.1} parent=11 // pred_check_branch
          %248 = sbr.rel (%p246) target = $region36
        $region35: #{vit_forward.1} parent=11 // pred_region
          _
        $region36: #{vit_forward.1} parent=11 // pred_fallthru
          _
        // Predicated region
        $region37: #{vit_forward.1} parent=11 // pred_check
          %p249 = pneg %p190
        $region38: #{vit_forward.1} parent=11 // pred_check_branch
          %251 = sbr.rel (%p249) target = $region40
        $region39: #{vit_forward.1} parent=11 // pred_region
          _
        $region40: #{vit_forward.1} parent=11 // pred_fallthru
          _
      $region12: #{vit_forward.1} parent=5 // pred_fallthru
        _
      %p252 = scmp.lt.s32.totalorder %s17, 2
      // Predicated region
      $region41: #{vit_forward.1} parent=5 // pred_check
        %p253 = pneg %p252
      $region42: #{vit_forward.1} parent=5 // pred_check_branch
        %255 = sbr.rel (%p253) target = $region44
      $region43: #{vit_forward.1} parent=5 // pred_region
        // Predicated region
        $region45: #{vit_forward.1} parent=43 // pred_check
          %p256 = pneg %p37
        $region46: #{vit_forward.1} parent=43 // pred_check_branch
          %258 = sbr.rel (%p256) target = $region48
        $region47: #{vit_forward.1} parent=43 // pred_region
          %p259 = scmp.lt.s32.totalorder %s17, 1
          %s260 = scalar_select %p259, %s17, 1
          %s261 = smul.addr %s260, 3
          %s262 = smul.addr %s261, 4
          %s263 = scalar_lea.vmem %s0, %s262
        $region48: #{vit_forward.1} parent=43 // pred_fallthru
          _
      $region44: #{vit_forward.1} parent=5 // pred_fallthru
        _
      %p264 = scmp.le.s32.totalorder 1, %s17
      %p265 = scmp.lt.s32.totalorder %s17, 3
      %p266 = pnand %p264, %p265
      %p267 = pneg %p266
      // Predicated region
      $region49: #{vit_forward.1} parent=5 // pred_check
        _
      $region50: #{vit_forward.1} parent=5 // pred_check_branch
        %269 = sbr.rel (%p266) target = $region52
      $region51: #{vit_forward.1} parent=5 // pred_region
        %s270 = ssub.s32 %s17, 1
        %p271 = scmp.lt.s32.totalorder %s22, 1
        %s272 = scalar_select %p271, %s22, 1
        %s273 = smul.addr %s272, 3
        %s274 = smul.addr %s273, 4
        %s275 = scalar_lea.vmem %s0, %s274
        %p276 = pneg %p43
        %p277 = pneg %p40
        %p278 = pneg %p64
        %p279 = pneg %p61
        %p280 = pneg %p85
        %p281 = pneg %p82
        %p282 = pneg %p106
        %p283 = pneg %p103
        %p284 = pneg %p127
        %p285 = pneg %p124
        %p286 = pneg %p148
        %p287 = pneg %p145
        %p288 = pneg %p169
        %p289 = pneg %p166
        %p290 = pneg %p190
        %p291 = pneg %p187
        %p292 = pneg %p216
        %p293 = pneg %p213
        %s294 = sand.u32 %s203, 1
        %s295 = scalar_lea.sflag [#allocation3], %s294
        %s296 = sand.u32 %s203, 1
        %s297 = scalar_lea.vmem [#allocation2], %s296
        %p298 = scmp.lt.s32.totalorder %s22, 1
        %s299 = scalar_select %p298, %s22, 1
        %s300 = smul.addr %s299, 3
        %s301 = smul.addr %s300, 4
        %s302 = scalar_lea.vmem %s0, %s301
        %v304 = vld [vmem:[%s302] sm:$0xf]
        %v305 = vld [vmem:[%s302 + $0x4] sm:$0xf]
        %v306 = vld [vmem:[%s302 + $0x8] sm:$0x1]
        %v307 = vld [vmem:[%s1] sm:$0xf]
        %v308 = vld [vmem:[%s1 + $0x4] sm:$0xf]
        %v309 = vld [vmem:[%s1 + $0x8] sm:$0xf]
        %v310 = vld [vmem:[%s1 + $0xc] sm:$0xf]
        %v311 = vld [vmem:[%s1 + $0x10] sm:$0x1]
        %v312 = vunpack.c.l.bf16 %v309
        %v313 = vunpack.c.l.bf16 %v310
        %v314 = vunpack.c.l.bf16 %v311
        %v318 = vunpack.c.l.b16 %v304
        %v319 = vunpack.c.l.b16 %v305
        %v320 = vunpack.c.l.b16 %v306
        %v321 = vpack.c.b16 %v319, %v318
        %v322 = vpack.c.b16 %v320, %v320
        %v325 = vunpack.c.l.b16 %v307
        %v326 = vunpack.c.l.b16 %v308
        %v327 = vpack.c.b16 %v326, %v325
        %vm329 = vcmask 130048
        %v331 = vsel %vm329, %v321, 0
        %v334 = vsel %vm329, %v322, 0
        %336 = vmatprep.subr.bf16.mxu0 0
        %337 = vmatpush1.bf16.msra.mxu0 %v327
        %338 = vmatprep.subr.bf16.mxu0 0
        %339 = vmatpush1.bf16.msra.mxu0 0
        %340 = vmatprep.subr.bf16.mxu0 0
        %341 = vmatpush1.bf16.msra.mxu0 0
        %342 = vmatprep.subr.bf16.mxu0 0
        %343 = vmatpush1.bf16.msra.mxu0 0
        %344 = vmatprep.subr.bf16.mxu0 0
        %345 = vmatpush1.bf16.msra.mxu0 0
        %346 = vmatprep.subr.bf16.mxu0 0
        %347 = vmatpush1.bf16.msra.mxu0 0
        %348 = vmatprep.subr.bf16.mxu0 0
        %349 = vmatpush1.bf16.msra.mxu0 0
        %350 = vmatprep.subr.bf16.mxu0 0
        %351 = vmatpush1.bf16.msra.mxu0 0
        %352 = vmatprep.subr.bf16.mxu0 0
        %353 = vmatpush1.bf16.msra.mxu0 0
        %354 = vmatprep.subr.bf16.mxu0 0
        %355 = vmatpush1.bf16.msra.mxu0 0
        %356 = vmatprep.subr.bf16.mxu0 0
        %357 = vmatpush1.bf16.msra.mxu0 0
        %358 = vmatprep.subr.bf16.mxu0 0
        %359 = vmatpush1.bf16.msra.mxu0 0
        %360 = vmatprep.subr.bf16.mxu0 0
        %361 = vmatpush1.bf16.msra.mxu0 0
        %362 = vmatprep.subr.bf16.mxu0 0
        %363 = vmatpush1.bf16.msra.mxu0 0
        %364 = vmatprep.subr.bf16.mxu0 0
        %365 = vmatpush1.bf16.msra.mxu0 0
        %366 = vmatprep.subr.bf16.mxu0 0
        %367 = vmatpush1.bf16.msra.mxu0 0
        %368 = vmatprep.mubr.bf16.mxu0 0
        %369 = vmatmul.mubr.bf16.gmra.mrb[0].mxu0 %v331
        %v370 = vpop.f32.mrb[0].mxu0
        %v371 = vadd.f32 %v312, %v370
        %v372 = vpop.f32.mrb[0].mxu0
        %v373 = vpop.f32.mrb[0].mxu0
        %v374 = vadd.f32 %v313, %v373
        %v375 = vpop.f32.mrb[0].mxu0
        %376 = vmatprep.mubr.bf16.mxu0 0
        %377 = vmatmul.mubr.bf16.gmra.mrb[0].mxu0 %v334
        %v378 = vpop.f32.mrb[0].mxu0
        %v379 = vadd.f32 %v314, %v378
        %v380 = vpop.f32.mrb[0].mxu0
        %v381 = vpop.f32.mrb[0].mxu0
        %v382 = vpop.f32.mrb[0].mxu0
        %383 = vdwg.mxu0
        %v384 = vld [vmem:[%s4] sm:$0xf]
        %vm385 = vcmask 261120
        %v386 = vsel %vm385, %v371, 0.0
        %387 = vadd.xlane.f32.xlu0 %v386
        %v388 = vpop.xlane.xlu0 %387
        %v389 = vsel %vm385, %v374, 0.0
        %390 = vadd.xlane.f32.xlu0 %v389
        %v391 = vpop.xlane.xlu0 %390
        %vm392 = vcmask 253952
        %v393 = vsel %vm392, %v379, 0.0
        %394 = vadd.xlane.f32.xlu0 %v393
        %v395 = vpop.xlane.xlu0 %394
        %v396 = vrcp.pop 32.0
        %v397 = vmul.f32 %v388, %v396
        %v398 = vmul.f32 %v391, %v396
        %v399 = vmul.f32 %v395, %v396
        %v400 = vsub.f32 %v371, %v397
        %v401 = vsub.f32 %v374, %v398
        %v402 = vsub.f32 %v379, %v399
        %v403 = vmul.f32 %v400, %v400
        %v404 = vmul.f32 %v401, %v401
        %v405 = vmul.f32 %v402, %v402
        %v406 = vsel %vm385, %v403, 0.0
        %407 = vadd.xlane.f32.xlu0 %v406
        %v408 = vpop.xlane.xlu0 %407
        %v409 = vsel %vm385, %v404, 0.0
        %410 = vadd.xlane.f32.xlu0 %v409
        %v411 = vpop.xlane.xlu0 %410
        %v412 = vsel %vm392, %v405, 0.0
        %413 = vadd.xlane.f32.xlu0 %v412
        %v414 = vpop.xlane.xlu0 %413
        %v415 = vmul.f32 %v408, %v396
        %v416 = vmul.f32 %v411, %v396
        %v417 = vmul.f32 %v414, %v396
        %v418 = vadd.f32 %v415, 1e-05
        %v419 = vadd.f32 %v416, 1e-05
        %v420 = vadd.f32 %v417, 1e-05
        %v421 = vrsqrt.pop %v418
        %v422 = vrsqrt.pop %v419
        %v423 = vrsqrt.pop %v420
        %v424 = vmul.f32 %v400, %v421
        %v425 = vmul.f32 %v401, %v422
        %v426 = vmul.f32 %v402, %v423
        %v427 = vlaneseq
        %v428 = vshrl.u32 %v427, 7
        %v429 = vsub.s32 0, %v428
        %v430 = vrot.slane %v384, %v429
        %v431 = vmul.f32 %v424, %v430
        %v432 = vmul.f32 %v425, %v430
        %v433 = vmul.f32 %v426, %v430
        %v434 = vlaneseq
        %v435 = vshrl.u32 %v434, 7
        %v436 = vsub.s32 1, %v435
        %v437 = vrot.slane %v384, %v436
        %v438 = vadd.f32 %v431, %v437
        %v439 = vadd.f32 %v432, %v437
        %v440 = vadd.f32 %v433, %v437
        %v441 = vld [vmem:[%s2] sm:$0xf]
        %v442 = vld [vmem:[%s2 + $0x4] sm:$0xf]
        %v443 = vld [vmem:[%s2 + $0x8] sm:$0xf]
        %v444 = vld [vmem:[%s2 + $0xc] sm:$0xf]
        %v445 = vpack.c.bf16 %v439, %v438
        %v446 = vpack.c.bf16 %v440, %v440
        %v447 = vld [vmem:[%s2 + $0x10] sm:$0x1]
        %v448 = vunpack.c.l.bf16 %v447
        %v449 = vlaneseq
        %v450 = vshrl.u32 %v449, 7
        %v451 = vsub.s32 0, %v450
        %v452 = vrot.slane %v448, %v451
        %v457 = vunpack.c.l.b16 %v441
        %v458 = vunpack.c.l.b16 %v442
        %v459 = vunpack.c.l.b16 %v443
        %v460 = vunpack.c.l.b16 %v444
        %v461 = vpack.c.b16 %v458, %v457
        %v462 = vpack.c.b16 %v460, %v459
        %v466 = vsel %vm385, %v445, 0
        %v469 = vsel %vm385, %v446, 0
        %471 = vmatprep.subr.bf16.mxu0 0
        %472 = vmatpush1.bf16.msra.mxu0 %v461
        %473 = vmatprep.subr.bf16.mxu0 0
        %474 = vmatpush1.bf16.msra.mxu0 %v462
        %475 = vmatprep.subr.bf16.mxu0 0
        %476 = vmatpush1.bf16.msra.mxu0 0
        %477 = vmatprep.subr.bf16.mxu0 0
        %478 = vmatpush1.bf16.msra.mxu0 0
        %479 = vmatprep.subr.bf16.mxu0 0
        %480 = vmatpush1.bf16.msra.mxu0 0
        %481 = vmatprep.subr.bf16.mxu0 0
        %482 = vmatpush1.bf16.msra.mxu0 0
        %483 = vmatprep.subr.bf16.mxu0 0
        %484 = vmatpush1.bf16.msra.mxu0 0
        %485 = vmatprep.subr.bf16.mxu0 0
        %486 = vmatpush1.bf16.msra.mxu0 0
        %487 = vmatprep.subr.bf16.mxu0 0
        %488 = vmatpush1.bf16.msra.mxu0 0
        %489 = vmatprep.subr.bf16.mxu0 0
        %490 = vmatpush1.bf16.msra.mxu0 0
        %491 = vmatprep.subr.bf16.mxu0 0
        %492 = vmatpush1.bf16.msra.mxu0 0
        %493 = vmatprep.subr.bf16.mxu0 0
        %494 = vmatpush1.bf16.msra.mxu0 0
        %495 = vmatprep.subr.bf16.mxu0 0
        %496 = vmatpush1.bf16.msra.mxu0 0
        %497 = vmatprep.subr.bf16.mxu0 0
        %498 = vmatpush1.bf16.msra.mxu0 0
        %499 = vmatprep.subr.bf16.mxu0 0
        %500 = vmatpush1.bf16.msra.mxu0 0
        %501 = vmatprep.subr.bf16.mxu0 0
        %502 = vmatpush1.bf16.msra.mxu0 0
        %503 = vmatprep.mubr.bf16.mxu0 0
        %504 = vmatmul.mubr.bf16.gmra.mrb[0].mxu0 %v466
        %v505 = vpop.f32.mrb[0].mxu0
        %v506 = vadd.f32 %v452, %v505
        %v507 = vpop.f32.mrb[0].mxu0
        %v508 = vpop.f32.mrb[0].mxu0
        %v509 = vadd.f32 %v452, %v508
        %v510 = vpop.f32.mrb[0].mxu0
        %511 = vmatprep.mubr.bf16.mxu0 0
        %512 = vmatmul.mubr.bf16.gmra.mrb[0].mxu0 %v469
        %v513 = vpop.f32.mrb[0].mxu0
        %v514 = vadd.f32 %v452, %v513
        %v515 = vpop.f32.mrb[0].mxu0
        %v516 = vpop.f32.mrb[0].mxu0
        %v517 = vpop.f32.mrb[0].mxu0
        %518 = vdwg.mxu0
        %v519 = vpack.c.bf16 %v509, %v506
        %v520 = vpack.c.bf16 %v514, %v514
        %523 = vrot.lane.b32.xlu0 %v519, 96
        %v524 = vpop.permute.xlu0 %523
        %525 = vrot.lane.b32.xlu0 %v520, 96
        %v526 = vpop.permute.xlu0 %525
        %vm527 = vcmask 64512
        %v529 = vsel %vm527, %v519, 0
        %v532 = vsel %vm527, %v520, 0
        %v535 = vsel %vm527, %v524, 0
        %v538 = vsel %vm527, %v526, 0
        %540 = vmatprep.subr.bf16.mxu0 0
        %541 = vmatpush1.bf16.xpose.msra.mxu0 %v535
        %542 = vmatprep.subr.bf16.mxu0 0
        %543 = vmatpush1.bf16.xpose.msra.mxu0 %v538
        %544 = vmatprep.subr.bf16.mxu0 0
        %545 = vmatpush1.bf16.xpose.msra.mxu0 0
        %546 = vmatprep.subr.bf16.mxu0 0
        %547 = vmatpush1.bf16.xpose.msra.mxu0 0
        %548 = vmatprep.subr.bf16.mxu0 0
        %549 = vmatpush1.bf16.xpose.msra.mxu0 0
        %550 = vmatprep.subr.bf16.mxu0 0
        %551 = vmatpush1.bf16.xpose.msra.mxu0 0
        %552 = vmatprep.subr.bf16.mxu0 0
        %553 = vmatpush1.bf16.xpose.msra.mxu0 0
        %554 = vmatprep.subr.bf16.mxu0 0
        %555 = vmatpush1.bf16.xpose.msra.mxu0 0
        %556 = vmatprep.subr.bf16.mxu0 0
        %557 = vmatpush1.bf16.xpose.msra.mxu0 0
        %558 = vmatprep.subr.bf16.mxu0 0
        %559 = vmatpush1.bf16.xpose.msra.mxu0 0
        %560 = vmatprep.subr.bf16.mxu0 0
        %561 = vmatpush1.bf16.xpose.msra.mxu0 0
        %562 = vmatprep.subr.bf16.mxu0 0
        %563 = vmatpush1.bf16.xpose.msra.mxu0 0
        %564 = vmatprep.subr.bf16.mxu0 0
        %565 = vmatpush1.bf16.xpose.msra.mxu0 0
        %566 = vmatprep.subr.bf16.mxu0 0
        %567 = vmatpush1.bf16.xpose.msra.mxu0 0
        %568 = vmatprep.subr.bf16.mxu0 0
        %569 = vmatpush1.bf16.xpose.msra.mxu0 0
        %570 = vmatprep.subr.bf16.mxu0 0
        %571 = vmatpush1.bf16.xpose.msra.mxu0 0
        %572 = vmatprep.mubr.bf16.mxu0 0
        %573 = vmatmul.mubr.bf16.gmra.mrb[0].mxu0 %v529
        %v574 = vpop.f32.mrb[0].mxu0
        %v575 = vadd.f32 0.0, %v574
        %v576 = vpop.f32.mrb[0].mxu0
        %v577 = vpop.f32.mrb[0].mxu0
        %v578 = vadd.f32 0.0, %v577
        %v579 = vpop.f32.mrb[0].mxu0
        %580 = vmatprep.mubr.bf16.mxu0 0
        %581 = vmatmul.mubr.bf16.gmra.mrb[0].mxu0 %v532
        %v582 = vpop.f32.mrb[0].mxu0
        %v583 = vadd.f32 0.0, %v582
        %v584 = vpop.f32.mrb[0].mxu0
        %v585 = vpop.f32.mrb[0].mxu0
        %v586 = vpop.f32.mrb[0].mxu0
        %587 = vdwg.mxu0
        %v588 = vmul.f32 %v575, 0.35355338
        %v589 = vmul.f32 %v578, 0.35355338
        %v590 = vmul.f32 %v583, 0.35355338
        %vm591 = vcmask 138240
        %v592 = vsel %vm591, %v588, -inf
        %593 = vmax.xlane.f32.xlu0 %v592
        %v594 = vpop.xlane.xlu0 %593
        %v595 = vsel %vm591, %v589, -inf
        %596 = vmax.xlane.f32.xlu0 %v595
        %v597 = vpop.xlane.xlu0 %596
        %vm598 = vcmask 131072
        %v599 = vsel %vm598, %v590, -inf
        %600 = vmax.xlane.f32.xlu0 %v599
        %v601 = vpop.xlane.xlu0 %600
        %v602 = vsub.f32 %v588, %v594
        %v603 = vsub.f32 %v589, %v597
        %v604 = vsub.f32 %v590, %v601
        %v605 = vmul.f32 %v602, 1.442695
        %v606 = vpow.pop %v605
        %v607 = vmul.f32 %v603, 1.442695
        %v608 = vpow.pop %v607
        %v609 = vmul.f32 %v604, 1.442695
        %v610 = vpow.pop %v609
        %v611 = vsel %vm591, %v606, 0.0
        %612 = vadd.xlane.f32.xlu0 %v611
        %v613 = vpop.xlane.xlu0 %612
        %v614 = vsel %vm591, %v608, 0.0
        %615 = vadd.xlane.f32.xlu0 %v614
        %v616 = vpop.xlane.xlu0 %615
        %v617 = vsel %vm598, %v610, 0.0
        %618 = vadd.xlane.f32.xlu0 %v617
        %v619 = vpop.xlane.xlu0 %618
        %v620 = vrcp.pop %v613
        %v621 = vmul.f32 %v606, %v620
        %v622 = vrcp.pop %v616
        %v623 = vmul.f32 %v608, %v622
        %v624 = vrcp.pop %v619
        %v625 = vmul.f32 %v610, %v624
        %v626 = vpack.c.bf16 %v623, %v621
        %v627 = vpack.c.bf16 %v625, %v625
        %628 = vrot.lane.b32.xlu0 %v519, 64
        %v629 = vpop.permute.xlu0 %628
        %630 = vrot.lane.b32.xlu0 %v520, 64
        %v631 = vpop.permute.xlu0 %630
        %v634 = vsel %vm591, %v626, 0
        %v637 = vsel %vm591, %v627, 0
        %vm639 = vcmask 1040384
        %v640 = vsel 0, 4294967295, 65535
        %v641 = vsel %vm639, %v640, 0
        %v643 = vand.u32 %v631, %v641
        %645 = vmatprep.subr.bf16.mxu0 0
        %646 = vmatpush1.bf16.msra.mxu0 %v629
        %647 = vmatprep.subr.bf16.mxu0 0
        %648 = vmatpush1.bf16.msra.mxu0 %v643
        %649 = vmatprep.subr.bf16.mxu0 0
        %650 = vmatpush1.bf16.msra.mxu0 0
        %651 = vmatprep.subr.bf16.mxu0 0
        %652 = vmatpush1.bf16.msra.mxu0 0
        %653 = vmatprep.subr.bf16.mxu0 0
        %654 = vmatpush1.bf16.msra.mxu0 0
        %655 = vmatprep.subr.bf16.mxu0 0
        %656 = vmatpush1.bf16.msra.mxu0 0
        %657 = vmatprep.subr.bf16.mxu0 0
        %658 = vmatpush1.bf16.msra.mxu0 0
        %659 = vmatprep.subr.bf16.mxu0 0
        %660 = vmatpush1.bf16.msra.mxu0 0
        %661 = vmatprep.subr.bf16.mxu0 0
        %662 = vmatpush1.bf16.msra.mxu0 0
        %663 = vmatprep.subr.bf16.mxu0 0
        %664 = vmatpush1.bf16.msra.mxu0 0
        %665 = vmatprep.subr.bf16.mxu0 0
        %666 = vmatpush1.bf16.msra.mxu0 0
        %667 = vmatprep.subr.bf16.mxu0 0
        %668 = vmatpush1.bf16.msra.mxu0 0
        %669 = vmatprep.subr.bf16.mxu0 0
        %670 = vmatpush1.bf16.msra.mxu0 0
        %671 = vmatprep.subr.bf16.mxu0 0
        %672 = vmatpush1.bf16.msra.mxu0 0
        %673 = vmatprep.subr.bf16.mxu0 0
        %674 = vmatpush1.bf16.msra.mxu0 0
        %675 = vmatprep.subr.bf16.mxu0 0
        %676 = vmatpush1.bf16.msra.mxu0 0
        %677 = vmatprep.mubr.bf16.mxu0 0
        %678 = vmatmul.mubr.bf16.gmra.mrb[0].mxu0 %v634
        %v679 = vpop.f32.mrb[0].mxu0
        %v680 = vadd.f32 0.0, %v679
        %v681 = vpop.f32.mrb[0].mxu0
        %v682 = vpop.f32.mrb[0].mxu0
        %v683 = vadd.f32 0.0, %v682
        %v684 = vpop.f32.mrb[0].mxu0
        %685 = vmatprep.mubr.bf16.mxu0 0
        %686 = vmatmul.mubr.bf16.gmra.mrb[0].mxu0 %v637
        %v687 = vpop.f32.mrb[0].mxu0
        %v688 = vadd.f32 0.0, %v687
        %v689 = vpop.f32.mrb[0].mxu0
        %v690 = vpop.f32.mrb[0].mxu0
        %v691 = vpop.f32.mrb[0].mxu0
        %692 = vdwg.mxu0
        %693 = vrot.lane.b32.xlu0 %v519, 120
        %v694 = vpop.permute.xlu0 %693
        %695 = vrot.lane.b32.xlu0 %v520, 120
        %v696 = vpop.permute.xlu0 %695
        %697 = vrot.lane.b32.xlu0 %v519, 88
        %v698 = vpop.permute.xlu0 %697
        %699 = vrot.lane.b32.xlu0 %v520, 88
        %v700 = vpop.permute.xlu0 %699
        %v702 = vsel %vm527, %v694, 0
        %v705 = vsel %vm527, %v696, 0
        %v708 = vsel %vm527, %v698, 0
        %v711 = vsel %vm527, %v700, 0
        %713 = vmatprep.subr.bf16.mxu0 0
        %714 = vmatpush1.bf16.xpose.msra.mxu0 %v708
        %715 = vmatprep.subr.bf16.mxu0 0
        %716 = vmatpush1.bf16.xpose.msra.mxu0 %v711
        %717 = vmatprep.subr.bf16.mxu0 0
        %718 = vmatpush1.bf16.xpose.msra.mxu0 0
        %719 = vmatprep.subr.bf16.mxu0 0
        %720 = vmatpush1.bf16.xpose.msra.mxu0 0
        %721 = vmatprep.subr.bf16.mxu0 0
        %722 = vmatpush1.bf16.xpose.msra.mxu0 0
        %723 = vmatprep.subr.bf16.mxu0 0
        %724 = vmatpush1.bf16.xpose.msra.mxu0 0
        %725 = vmatprep.subr.bf16.mxu0 0
        %726 = vmatpush1.bf16.xpose.msra.mxu0 0
        %727 = vmatprep.subr.bf16.mxu0 0
        %728 = vmatpush1.bf16.xpose.msra.mxu0 0
        %729 = vmatprep.subr.bf16.mxu0 0
        %730 = vmatpush1.bf16.xpose.msra.mxu0 0
        %731 = vmatprep.subr.bf16.mxu0 0
        %732 = vmatpush1.bf16.xpose.msra.mxu0 0
        %733 = vmatprep.subr.bf16.mxu0 0
        %734 = vmatpush1.bf16.xpose.msra.mxu0 0
        %735 = vmatprep.subr.bf16.mxu0 0
        %736 = vmatpush1.bf16.xpose.msra.mxu0 0
        %737 = vmatprep.subr.bf16.mxu0 0
        %738 = vmatpush1.bf16.xpose.msra.mxu0 0
        %739 = vmatprep.subr.bf16.mxu0 0
        %740 = vmatpush1.bf16.xpose.msra.mxu0 0
        %741 = vmatprep.subr.bf16.mxu0 0
        %742 = vmatpush1.bf16.xpose.msra.mxu0 0
        %743 = vmatprep.subr.bf16.mxu0 0
        %744 = vmatpush1.bf16.xpose.msra.mxu0 0
        %745 = vmatprep.mubr.bf16.mxu0 0
        %746 = vmatmul.mubr.bf16.gmra.mrb[0].mxu0 %v702
        %v747 = vpop.f32.mrb[0].mxu0
        %v748 = vadd.f32 0.0, %v747
        %v749 = vpop.f32.mrb[0].mxu0
        %v750 = vpop.f32.mrb[0].mxu0
        %v751 = vadd.f32 0.0, %v750
        %v752 = vpop.f32.mrb[0].mxu0
        %753 = vmatprep.mubr.bf16.mxu0 0
        %754 = vmatmul.mubr.bf16.gmra.mrb[0].mxu0 %v705
        %v755 = vpop.f32.mrb[0].mxu0
        %v756 = vadd.f32 0.0, %v755
        %v757 = vpop.f32.mrb[0].mxu0
        %v758 = vpop.f32.mrb[0].mxu0
        %v759 = vpop.f32.mrb[0].mxu0
        %760 = vdwg.mxu0
        %v761 = vmul.f32 %v748, 0.35355338
        %v762 = vmul.f32 %v751, 0.35355338
        %v763 = vmul.f32 %v756, 0.35355338
        %v764 = vsel %vm591, %v761, -inf
        %765 = vmax.xlane.f32.xlu0 %v764
        %v766 = vpop.xlane.xlu0 %765
        %v767 = vsel %vm591, %v762, -inf
        %768 = vmax.xlane.f32.xlu0 %v767
        %v769 = vpop.xlane.xlu0 %768
        %v770 = vsel %vm598, %v763, -inf
        %771 = vmax.xlane.f32.xlu0 %v770
        %v772 = vpop.xlane.xlu0 %771
        %v773 = vsub.f32 %v761, %v766
        %v774 = vsub.f32 %v762, %v769
        %v775 = vsub.f32 %v763, %v772
        %v776 = vmul.f32 %v773, 1.442695
        %v777 = vpow.pop %v776
        %v778 = vmul.f32 %v774, 1.442695
        %v779 = vpow.pop %v778
        %v780 = vmul.f32 %v775, 1.442695
        %v781 = vpow.pop %v780
        %v782 = vsel %vm591, %v777, 0.0
        %783 = vadd.xlane.f32.xlu0 %v782
        %v784 = vpop.xlane.xlu0 %783
        %v785 = vsel %vm591, %v779, 0.0
        %786 = vadd.xlane.f32.xlu0 %v785
        %v787 = vpop.xlane.xlu0 %786
        %v788 = vsel %vm598, %v781, 0.0
        %789 = vadd.xlane.f32.xlu0 %v788
        %v790 = vpop.xlane.xlu0 %789
        %v791 = vrcp.pop %v784
        %v792 = vmul.f32 %v777, %v791
        %v793 = vrcp.pop %v787
        %v794 = vmul.f32 %v779, %v793
        %v795 = vrcp.pop %v790
        %v796 = vmul.f32 %v781, %v795
        %v797 = vpack.c.bf16 %v794, %v792
        %v798 = vpack.c.bf16 %v796, %v796
        %799 = vrot.lane.b32.xlu0 %v519, 56
        %v800 = vpop.permute.xlu0 %799
        %801 = vrot.lane.b32.xlu0 %v520, 56
        %v802 = vpop.permute.xlu0 %801
        %v805 = vsel %vm591, %v797, 0
        %v808 = vsel %vm591, %v798, 0
        %v811 = vand.u32 %v802, %v641
        %813 = vmatprep.subr.bf16.mxu0 0
        %814 = vmatpush1.bf16.msra.mxu0 %v800
        %815 = vmatprep.subr.bf16.mxu0 0
        %816 = vmatpush1.bf16.msra.mxu0 %v811
        %817 = vmatprep.subr.bf16.mxu0 0
        %818 = vmatpush1.bf16.msra.mxu0 0
        %819 = vmatprep.subr.bf16.mxu0 0
        %820 = vmatpush1.bf16.msra.mxu0 0
        %821 = vmatprep.subr.bf16.mxu0 0
        %822 = vmatpush1.bf16.msra.mxu0 0
        %823 = vmatprep.subr.bf16.mxu0 0
        %824 = vmatpush1.bf16.msra.mxu0 0
        %825 = vmatprep.subr.bf16.mxu0 0
        %826 = vmatpush1.bf16.msra.mxu0 0
        %827 = vmatprep.subr.bf16.mxu0 0
        %828 = vmatpush1.bf16.msra.mxu0 0
        %829 = vmatprep.subr.bf16.mxu0 0
        %830 = vmatpush1.bf16.msra.mxu0 0
        %831 = vmatprep.subr.bf16.mxu0 0
        %832 = vmatpush1.bf16.msra.mxu0 0
        %833 = vmatprep.subr.bf16.mxu0 0
        %834 = vmatpush1.bf16.msra.mxu0 0
        %835 = vmatprep.subr.bf16.mxu0 0
        %836 = vmatpush1.bf16.msra.mxu0 0
        %837 = vmatprep.subr.bf16.mxu0 0
        %838 = vmatpush1.bf16.msra.mxu0 0
        %839 = vmatprep.subr.bf16.mxu0 0
        %840 = vmatpush1.bf16.msra.mxu0 0
        %841 = vmatprep.subr.bf16.mxu0 0
        %842 = vmatpush1.bf16.msra.mxu0 0
        %843 = vmatprep.subr.bf16.mxu0 0
        %844 = vmatpush1.bf16.msra.mxu0 0
        %845 = vmatprep.mubr.bf16.mxu0 0
        %846 = vmatmul.mubr.bf16.gmra.mrb[0].mxu0 %v805
        %v847 = vpop.f32.mrb[0].mxu0
        %v848 = vadd.f32 0.0, %v847
        %v849 = vpop.f32.mrb[0].mxu0
        %v850 = vpop.f32.mrb[0].mxu0
        %v851 = vadd.f32 0.0, %v850
        %v852 = vpop.f32.mrb[0].mxu0
        %853 = vmatprep.mubr.bf16.mxu0 0
        %854 = vmatmul.mubr.bf16.gmra.mrb[0].mxu0 %v808
        %v855 = vpop.f32.mrb[0].mxu0
        %v856 = vadd.f32 0.0, %v855
        %v857 = vpop.f32.mrb[0].mxu0
        %v858 = vpop.f32.mrb[0].mxu0
        %v859 = vpop.f32.mrb[0].mxu0
        %860 = vdwg.mxu0
        %861 = vrot.lane.b32.xlu0 %v519, 112
        %v862 = vpop.permute.xlu0 %861
        %863 = vrot.lane.b32.xlu0 %v520, 112
        %v864 = vpop.permute.xlu0 %863
        %865 = vrot.lane.b32.xlu0 %v519, 80
        %v866 = vpop.permute.xlu0 %865
        %867 = vrot.lane.b32.xlu0 %v520, 80
        %v868 = vpop.permute.xlu0 %867
        %v870 = vsel %vm527, %v862, 0
        %v873 = vsel %vm527, %v864, 0
        %v876 = vsel %vm527, %v866, 0
        %v879 = vsel %vm527, %v868, 0
        %881 = vmatprep.subr.bf16.mxu0 0
        %882 = vmatpush1.bf16.xpose.msra.mxu0 %v876
        %883 = vmatprep.subr.bf16.mxu0 0
        %884 = vmatpush1.bf16.xpose.msra.mxu0 %v879
        %885 = vmatprep.subr.bf16.mxu0 0
        %886 = vmatpush1.bf16.xpose.msra.mxu0 0
        %887 = vmatprep.subr.bf16.mxu0 0
        %888 = vmatpush1.bf16.xpose.msra.mxu0 0
        %889 = vmatprep.subr.bf16.mxu0 0
        %890 = vmatpush1.bf16.xpose.msra.mxu0 0
        %891 = vmatprep.subr.bf16.mxu0 0
        %892 = vmatpush1.bf16.xpose.msra.mxu0 0
        %893 = vmatprep.subr.bf16.mxu0 0
        %894 = vmatpush1.bf16.xpose.msra.mxu0 0
        %895 = vmatprep.subr.bf16.mxu0 0
        %896 = vmatpush1.bf16.xpose.msra.mxu0 0
        %897 = vmatprep.subr.bf16.mxu0 0
        %898 = vmatpush1.bf16.xpose.msra.mxu0 0
        %899 = vmatprep.subr.bf16.mxu0 0
        %900 = vmatpush1.bf16.xpose.msra.mxu0 0
        %901 = vmatprep.subr.bf16.mxu0 0
        %902 = vmatpush1.bf16.xpose.msra.mxu0 0
        %903 = vmatprep.subr.bf16.mxu0 0
        %904 = vmatpush1.bf16.xpose.msra.mxu0 0
        %905 = vmatprep.subr.bf16.mxu0 0
        %906 = vmatpush1.bf16.xpose.msra.mxu0 0
        %907 = vmatprep.subr.bf16.mxu0 0
        %908 = vmatpush1.bf16.xpose.msra.mxu0 0
        %909 = vmatprep.subr.bf16.mxu0 0
        %910 = vmatpush1.bf16.xpose.msra.mxu0 0
        %911 = vmatprep.subr.bf16.mxu0 0
        %912 = vmatpush1.bf16.xpose.msra.mxu0 0
        %913 = vmatprep.mubr.bf16.mxu0 0
        %914 = vmatmul.mubr.bf16.gmra.mrb[0].mxu0 %v870
        %v915 = vpop.f32.mrb[0].mxu0
        %v916 = vadd.f32 0.0, %v915
        %v917 = vpop.f32.mrb[0].mxu0
        %v918 = vpop.f32.mrb[0].mxu0
        %v919 = vadd.f32 0.0, %v918
        %v920 = vpop.f32.mrb[0].mxu0
        %921 = vmatprep.mubr.bf16.mxu0 0
        %922 = vmatmul.mubr.bf16.gmra.mrb[0].mxu0 %v873
        %v923 = vpop.f32.mrb[0].mxu0
        %v924 = vadd.f32 0.0, %v923
        %v925 = vpop.f32.mrb[0].mxu0
        %v926 = vpop.f32.mrb[0].mxu0
        %v927 = vpop.f32.mrb[0].mxu0
        %928 = vdwg.mxu0
        %v929 = vmul.f32 %v916, 0.35355338
        %v930 = vmul.f32 %v919, 0.35355338
        %v931 = vmul.f32 %v924, 0.35355338
        %v932 = vsel %vm591, %v929, -inf
        %933 = vmax.xlane.f32.xlu0 %v932
        %v934 = vpop.xlane.xlu0 %933
        %v935 = vsel %vm591, %v930, -inf
        %936 = vmax.xlane.f32.xlu0 %v935
        %v937 = vpop.xlane.xlu0 %936
        %v938 = vsel %vm598, %v931, -inf
        %939 = vmax.xlane.f32.xlu0 %v938
        %v940 = vpop.xlane.xlu0 %939
        %v941 = vsub.f32 %v929, %v934
        %v942 = vsub.f32 %v930, %v937
        %v943 = vsub.f32 %v931, %v940
        %v944 = vmul.f32 %v941, 1.442695
        %v945 = vpow.pop %v944
        %v946 = vmul.f32 %v942, 1.442695
        %v947 = vpow.pop %v946
        %v948 = vmul.f32 %v943, 1.442695
        %v949 = vpow.pop %v948
        %v950 = vsel %vm591, %v945, 0.0
        %951 = vadd.xlane.f32.xlu0 %v950
        %v952 = vpop.xlane.xlu0 %951
        %v953 = vsel %vm591, %v947, 0.0
        %954 = vadd.xlane.f32.xlu0 %v953
        %v955 = vpop.xlane.xlu0 %954
        %v956 = vsel %vm598, %v949, 0.0
        %957 = vadd.xlane.f32.xlu0 %v956
        %v958 = vpop.xlane.xlu0 %957
        %v959 = vrcp.pop %v952
        %v960 = vmul.f32 %v945, %v959
        %v961 = vrcp.pop %v955
        %v962 = vmul.f32 %v947, %v961
        %v963 = vrcp.pop %v958
        %v964 = vmul.f32 %v949, %v963
        %v965 = vpack.c.bf16 %v962, %v960
        %v966 = vpack.c.bf16 %v964, %v964
        %967 = vrot.lane.b32.xlu0 %v519, 48
        %v968 = vpop.permute.xlu0 %967
        %969 = vrot.lane.b32.xlu0 %v520, 48
        %v970 = vpop.permute.xlu0 %969
        %v973 = vsel %vm591, %v965, 0
        %v976 = vsel %vm591, %v966, 0
        %v979 = vand.u32 %v970, %v641
        %981 = vmatprep.subr.bf16.mxu0 0
        %982 = vmatpush1.bf16.msra.mxu0 %v968
        %983 = vmatprep.subr.bf16.mxu0 0
        %984 = vmatpush1.bf16.msra.mxu0 %v979
        %985 = vmatprep.subr.bf16.mxu0 0
        %986 = vmatpush1.bf16.msra.mxu0 0
        %987 = vmatprep.subr.bf16.mxu0 0
        %988 = vmatpush1.bf16.msra.mxu0 0
        %989 = vmatprep.subr.bf16.mxu0 0
        %990 = vmatpush1.bf16.msra.mxu0 0
        %991 = vmatprep.subr.bf16.mxu0 0
        %992 = vmatpush1.bf16.msra.mxu0 0
        %993 = vmatprep.subr.bf16.mxu0 0
        %994 = vmatpush1.bf16.msra.mxu0 0
        %995 = vmatprep.subr.bf16.mxu0 0
        %996 = vmatpush1.bf16.msra.mxu0 0
        %997 = vmatprep.subr.bf16.mxu0 0
        %998 = vmatpush1.bf16.msra.mxu0 0
        %999 = vmatprep.subr.bf16.mxu0 0
        %1000 = vmatpush1.bf16.msra.mxu0 0
        %1001 = vmatprep.subr.bf16.mxu0 0
        %1002 = vmatpush1.bf16.msra.mxu0 0
        %1003 = vmatprep.subr.bf16.mxu0 0
        %1004 = vmatpush1.bf16.msra.mxu0 0
        %1005 = vmatprep.subr.bf16.mxu0 0
        %1006 = vmatpush1.bf16.msra.mxu0 0
        %1007 = vmatprep.subr.bf16.mxu0 0
        %1008 = vmatpush1.bf16.msra.mxu0 0
        %1009 = vmatprep.subr.bf16.mxu0 0
        %1010 = vmatpush1.bf16.msra.mxu0 0
        %1011 = vmatprep.subr.bf16.mxu0 0
        %1012 = vmatpush1.bf16.msra.mxu0 0
        %1013 = vmatprep.mubr.bf16.mxu0 0
        %1014 = vmatmul.mubr.bf16.gmra.mrb[0].mxu0 %v973
        %v1015 = vpop.f32.mrb[0].mxu0
        %v1016 = vadd.f32 0.0, %v1015
        %v1017 = vpop.f32.mrb[0].mxu0
        %v1018 = vpop.f32.mrb[0].mxu0
        %v1019 = vadd.f32 0.0, %v1018
        %v1020 = vpop.f32.mrb[0].mxu0
        %1021 = vmatprep.mubr.bf16.mxu0 0
        %1022 = vmatmul.mubr.bf16.gmra.mrb[0].mxu0 %v976
        %v1023 = vpop.f32.mrb[0].mxu0
        %v1024 = vadd.f32 0.0, %v1023
        %v1025 = vpop.f32.mrb[0].mxu0
        %v1026 = vpop.f32.mrb[0].mxu0
        %v1027 = vpop.f32.mrb[0].mxu0
        %1028 = vdwg.mxu0
        %1029 = vrot.lane.b32.xlu0 %v519, 104
        %v1030 = vpop.permute.xlu0 %1029
        %1031 = vrot.lane.b32.xlu0 %v520, 104
        %v1032 = vpop.permute.xlu0 %1031
        %1033 = vrot.lane.b32.xlu0 %v519, 72
        %v1034 = vpop.permute.xlu0 %1033
        %1035 = vrot.lane.b32.xlu0 %v520, 72
        %v1036 = vpop.permute.xlu0 %1035
        %v1038 = vsel %vm527, %v1030, 0
        %v1041 = vsel %vm527, %v1032, 0
        %v1044 = vsel %vm527, %v1034, 0
        %v1047 = vsel %vm527, %v1036, 0
        %1049 = vmatprep.subr.bf16.mxu0 0
        %1050 = vmatpush1.bf16.xpose.msra.mxu0 %v1044
        %1051 = vmatprep.subr.bf16.mxu0 0
        %1052 = vmatpush1.bf16.xpose.msra.mxu0 %v1047
        %1053 = vmatprep.subr.bf16.mxu0 0
        %1054 = vmatpush1.bf16.xpose.msra.mxu0 0
        %1055 = vmatprep.subr.bf16.mxu0 0
        %1056 = vmatpush1.bf16.xpose.msra.mxu0 0
        %1057 = vmatprep.subr.bf16.mxu0 0
        %1058 = vmatpush1.bf16.xpose.msra.mxu0 0
        %1059 = vmatprep.subr.bf16.mxu0 0
        %1060 = vmatpush1.bf16.xpose.msra.mxu0 0
        %1061 = vmatprep.subr.bf16.mxu0 0
        %1062 = vmatpush1.bf16.xpose.msra.mxu0 0
        %1063 = vmatprep.subr.bf16.mxu0 0
        %1064 = vmatpush1.bf16.xpose.msra.mxu0 0
        %1065 = vmatprep.subr.bf16.mxu0 0
        %1066 = vmatpush1.bf16.xpose.msra.mxu0 0
        %1067 = vmatprep.subr.bf16.mxu0 0
        %1068 = vmatpush1.bf16.xpose.msra.mxu0 0
        %1069 = vmatprep.subr.bf16.mxu0 0
        %1070 = vmatpush1.bf16.xpose.msra.mxu0 0
        %1071 = vmatprep.subr.bf16.mxu0 0
        %1072 = vmatpush1.bf16.xpose.msra.mxu0 0
        %1073 = vmatprep.subr.bf16.mxu0 0
        %1074 = vmatpush1.bf16.xpose.msra.mxu0 0
        %1075 = vmatprep.subr.bf16.mxu0 0
        %1076 = vmatpush1.bf16.xpose.msra.mxu0 0
        %1077 = vmatprep.subr.bf16.mxu0 0
        %1078 = vmatpush1.bf16.xpose.msra.mxu0 0
        %1079 = vmatprep.subr.bf16.mxu0 0
        %1080 = vmatpush1.bf16.xpose.msra.mxu0 0
        %1081 = vmatprep.mubr.bf16.mxu0 0
        %1082 = vmatmul.mubr.bf16.gmra.mrb[0].mxu0 %v1038
        %v1083 = vpop.f32.mrb[0].mxu0
        %v1084 = vadd.f32 0.0, %v1083
        %v1085 = vpop.f32.mrb[0].mxu0
        %v1086 = vpop.f32.mrb[0].mxu0
        %v1087 = vadd.f32 0.0, %v1086
        %v1088 = vpop.f32.mrb[0].mxu0
        %1089 = vmatprep.mubr.bf16.mxu0 0
        %1090 = vmatmul.mubr.bf16.gmra.mrb[0].mxu0 %v1041
        %v1091 = vpop.f32.mrb[0].mxu0
        %v1092 = vadd.f32 0.0, %v1091
        %v1093 = vpop.f32.mrb[0].mxu0
        %v1094 = vpop.f32.mrb[0].mxu0
        %v1095 = vpop.f32.mrb[0].mxu0
        %1096 = vdwg.mxu0
        %v1097 = vmul.f32 %v1084, 0.35355338
        %v1098 = vmul.f32 %v1087, 0.35355338
        %v1099 = vmul.f32 %v1092, 0.35355338
        %v1100 = vsel %vm591, %v1097, -inf
        %1101 = vmax.xlane.f32.xlu0 %v1100
        %v1102 = vpop.xlane.xlu0 %1101
        %v1103 = vsel %vm591, %v1098, -inf
        %1104 = vmax.xlane.f32.xlu0 %v1103
        %v1105 = vpop.xlane.xlu0 %1104
        %v1106 = vsel %vm598, %v1099, -inf
        %1107 = vmax.xlane.f32.xlu0 %v1106
        %v1108 = vpop.xlane.xlu0 %1107
        %v1109 = vsub.f32 %v1097, %v1102
        %v1110 = vsub.f32 %v1098, %v1105
        %v1111 = vsub.f32 %v1099, %v1108
        %v1112 = vmul.f32 %v1109, 1.442695
        %v1113 = vpow.pop %v1112
        %v1114 = vmul.f32 %v1110, 1.442695
        %v1115 = vpow.pop %v1114
        %v1116 = vmul.f32 %v1111, 1.442695
        %v1117 = vpow.pop %v1116
        %v1118 = vsel %vm591, %v1113, 0.0
        %1119 = vadd.xlane.f32.xlu0 %v1118
        %v1120 = vpop.xlane.xlu0 %1119
        %v1121 = vsel %vm591, %v1115, 0.0
        %1122 = vadd.xlane.f32.xlu0 %v1121
        %v1123 = vpop.xlane.xlu0 %1122
        %v1124 = vsel %vm598, %v1117, 0.0
        %1125 = vadd.xlane.f32.xlu0 %v1124
        %v1126 = vpop.xlane.xlu0 %1125
        %v1127 = vrcp.pop %v1120
        %v1128 = vmul.f32 %v1113, %v1127
        %v1129 = vrcp.pop %v1123
        %v1130 = vmul.f32 %v1115, %v1129
        %v1131 = vrcp.pop %v1126
        %v1132 = vmul.f32 %v1117, %v1131
        %v1133 = vpack.c.bf16 %v1130, %v1128
        %v1134 = vpack.c.bf16 %v1132, %v1132
        %1135 = vrot.lane.b32.xlu0 %v519, 40
        %v1136 = vpop.permute.xlu0 %1135
        %1137 = vrot.lane.b32.xlu0 %v520, 40
        %v1138 = vpop.permute.xlu0 %1137
        %v1141 = vsel %vm591, %v1133, 0
        %v1144 = vsel %vm591, %v1134, 0
        %v1147 = vand.u32 %v1138, %v641
        %1149 = vmatprep.subr.bf16.mxu0 0
        %1150 = vmatpush1.bf16.msra.mxu0 %v1136
        %1151 = vmatprep.subr.bf16.mxu0 0
        %1152 = vmatpush1.bf16.msra.mxu0 %v1147
        %1153 = vmatprep.subr.bf16.mxu0 0
        %1154 = vmatpush1.bf16.msra.mxu0 0
        %1155 = vmatprep.subr.bf16.mxu0 0
        %1156 = vmatpush1.bf16.msra.mxu0 0
        %1157 = vmatprep.subr.bf16.mxu0 0
        %1158 = vmatpush1.bf16.msra.mxu0 0
        %1159 = vmatprep.subr.bf16.mxu0 0
        %1160 = vmatpush1.bf16.msra.mxu0 0
        %1161 = vmatprep.subr.bf16.mxu0 0
        %1162 = vmatpush1.bf16.msra.mxu0 0
        %1163 = vmatprep.subr.bf16.mxu0 0
        %1164 = vmatpush1.bf16.msra.mxu0 0
        %1165 = vmatprep.subr.bf16.mxu0 0
        %1166 = vmatpush1.bf16.msra.mxu0 0
        %1167 = vmatprep.subr.bf16.mxu0 0
        %1168 = vmatpush1.bf16.msra.mxu0 0
        %1169 = vmatprep.subr.bf16.mxu0 0
        %1170 = vmatpush1.bf16.msra.mxu0 0
        %1171 = vmatprep.subr.bf16.mxu0 0
        %1172 = vmatpush1.bf16.msra.mxu0 0
        %1173 = vmatprep.subr.bf16.mxu0 0
        %1174 = vmatpush1.bf16.msra.mxu0 0
        %1175 = vmatprep.subr.bf16.mxu0 0
        %1176 = vmatpush1.bf16.msra.mxu0 0
        %1177 = vmatprep.subr.bf16.mxu0 0
        %1178 = vmatpush1.bf16.msra.mxu0 0
        %1179 = vmatprep.subr.bf16.mxu0 0
        %1180 = vmatpush1.bf16.msra.mxu0 0
        %1181 = vmatprep.mubr.bf16.mxu0 0
        %1182 = vmatmul.mubr.bf16.gmra.mrb[0].mxu0 %v1141
        %v1183 = vpop.f32.mrb[0].mxu0
        %v1184 = vadd.f32 0.0, %v1183
        %v1185 = vpop.f32.mrb[0].mxu0
        %v1186 = vpop.f32.mrb[0].mxu0
        %v1187 = vadd.f32 0.0, %v1186
        %v1188 = vpop.f32.mrb[0].mxu0
        %1189 = vmatprep.mubr.bf16.mxu0 0
        %1190 = vmatmul.mubr.bf16.gmra.mrb[0].mxu0 %v1144
        %v1191 = vpop.f32.mrb[0].mxu0
        %v1192 = vadd.f32 0.0, %v1191
        %v1193 = vpop.f32.mrb[0].mxu0
        %v1194 = vpop.f32.mrb[0].mxu0
        %v1195 = vpop.f32.mrb[0].mxu0
        %1196 = vdwg.mxu0
        %1200 = vrot.lane.b32.xlu0 %v848, 8
        %v1201 = vpop.permute.xlu0 %1200
        %1202 = vrot.lane.b32.xlu0 %v851, 8
        %v1203 = vpop.permute.xlu0 %1202
        %1204 = vrot.lane.b32.xlu0 %v856, 8
        %v1205 = vpop.permute.xlu0 %1204
        %1212 = vrot.lane.b32.xlu0 %v1016, 16
        %v1213 = vpop.permute.xlu0 %1212
        %1214 = vrot.lane.b32.xlu0 %v1019, 16
        %v1215 = vpop.permute.xlu0 %1214
        %1216 = vrot.lane.b32.xlu0 %v1024, 16
        %v1217 = vpop.permute.xlu0 %1216
        %1224 = vrot.lane.b32.xlu0 %v1184, 24
        %v1225 = vpop.permute.xlu0 %1224
        %1226 = vrot.lane.b32.xlu0 %v1187, 24
        %v1227 = vpop.permute.xlu0 %1226
        %1228 = vrot.lane.b32.xlu0 %v1192, 24
        %v1229 = vpop.permute.xlu0 %1228
        %v1233 = vsel %vm527, %v680, %v1201
        %v1234 = vsel %vm527, %v683, %v1203
        %v1235 = vsel %vm527, %v688, %v1205
        %v1236 = vsel %vm329, %v1233, %v1213
        %v1237 = vsel %vm329, %v1234, %v1215
        %v1238 = vsel %vm329, %v1235, %v1217
        %vm1239 = vcmask 195584
        %v1240 = vsel %vm1239, %v1236, %v1225
        %v1241 = vsel %vm1239, %v1237, %v1227
        %v1242 = vsel %vm1239, %v1238, %v1229
        %v1243 = vld [vmem:[%s3] sm:$0xf]
        %v1244 = vld [vmem:[%s3 + $0x4] sm:$0xf]
        %v1245 = vld [vmem:[%s3 + $0x8] sm:$0xf]
        %v1246 = vld [vmem:[%s3 + $0xc] sm:$0xf]
        %v1247 = vpack.c.bf16 %v1241, %v1240
        %v1248 = vpack.c.bf16 %v1242, %v1242
        %v1249 = vld [vmem:[%s3 + $0x10] sm:$0x1]
        %v1250 = vunpack.c.l.bf16 %v1249
        %v1251 = vlaneseq
        %v1252 = vshrl.u32 %v1251, 7
        %v1253 = vsub.s32 0, %v1252
        %v1254 = vrot.slane %v1250, %v1253
        %v1259 = vunpack.c.l.b16 %v1243
        %v1260 = vunpack.c.l.b16 %v1244
        %v1261 = vunpack.c.l.b16 %v1245
        %v1262 = vunpack.c.l.b16 %v1246
        %v1263 = vpack.c.b16 %v1260, %v1259
        %v1264 = vpack.c.b16 %v1262, %v1261
        %v1268 = vsel %vm385, %v1247, 0
        %v1271 = vsel %vm385, %v1248, 0
        %1273 = vmatprep.subr.bf16.mxu0 0
        %1274 = vmatpush1.bf16.msra.mxu0 %v1263
        %1275 = vmatprep.subr.bf16.mxu0 0
        %1276 = vmatpush1.bf16.msra.mxu0 %v1264
        %1277 = vmatprep.subr.bf16.mxu0 0
        %1278 = vmatpush1.bf16.msra.mxu0 0
        %1279 = vmatprep.subr.bf16.mxu0 0
        %1280 = vmatpush1.bf16.msra.mxu0 0
        %1281 = vmatprep.subr.bf16.mxu0 0
        %1282 = vmatpush1.bf16.msra.mxu0 0
        %1283 = vmatprep.subr.bf16.mxu0 0
        %1284 = vmatpush1.bf16.msra.mxu0 0
        %1285 = vmatprep.subr.bf16.mxu0 0
        %1286 = vmatpush1.bf16.msra.mxu0 0
        %1287 = vmatprep.subr.bf16.mxu0 0
        %1288 = vmatpush1.bf16.msra.mxu0 0
        %1289 = vmatprep.subr.bf16.mxu0 0
        %1290 = vmatpush1.bf16.msra.mxu0 0
        %1291 = vmatprep.subr.bf16.mxu0 0
        %1292 = vmatpush1.bf16.msra.mxu0 0
        %1293 = vmatprep.subr.bf16.mxu0 0
        %1294 = vmatpush1.bf16.msra.mxu0 0
        %1295 = vmatprep.subr.bf16.mxu0 0
        %1296 = vmatpush1.bf16.msra.mxu0 0
        %1297 = vmatprep.subr.bf16.mxu0 0
        %1298 = vmatpush1.bf16.msra.mxu0 0
        %1299 = vmatprep.subr.bf16.mxu0 0
        %1300 = vmatpush1.bf16.msra.mxu0 0
        %1301 = vmatprep.subr.bf16.mxu0 0
        %1302 = vmatpush1.bf16.msra.mxu0 0
        %1303 = vmatprep.subr.bf16.mxu0 0
        %1304 = vmatpush1.bf16.msra.mxu0 0
        %1305 = vmatprep.mubr.bf16.mxu0 0
        %1306 = vmatmul.mubr.bf16.gmra.mrb[0].mxu0 %v1268
        %v1307 = vpop.f32.mrb[0].mxu0
        %v1308 = vadd.f32 %v1254, %v1307
        %v1309 = vpop.f32.mrb[0].mxu0
        %v1310 = vpop.f32.mrb[0].mxu0
        %v1311 = vadd.f32 %v1254, %v1310
        %v1312 = vpop.f32.mrb[0].mxu0
        %1313 = vmatprep.mubr.bf16.mxu0 0
        %1314 = vmatmul.mubr.bf16.gmra.mrb[0].mxu0 %v1271
        %v1315 = vpop.f32.mrb[0].mxu0
        %v1316 = vadd.f32 %v1254, %v1315
        %v1317 = vpop.f32.mrb[0].mxu0
        %v1318 = vpop.f32.mrb[0].mxu0
        %v1319 = vpop.f32.mrb[0].mxu0
        %1320 = vdwg.mxu0
        %v1321 = vadd.f32 %v371, %v1308
        %v1322 = vadd.f32 %v374, %v1311
        %v1323 = vadd.f32 %v379, %v1316
        %v1324 = vsel %vm385, %v1321, 0.0
        %1325 = vadd.xlane.f32.xlu0 %v1324
        %v1326 = vpop.xlane.xlu0 %1325
        %v1327 = vsel %vm385, %v1322, 0.0
        %1328 = vadd.xlane.f32.xlu0 %v1327
        %v1329 = vpop.xlane.xlu0 %1328
        %v1330 = vsel %vm392, %v1323, 0.0
        %1331 = vadd.xlane.f32.xlu0 %v1330
        %v1332 = vpop.xlane.xlu0 %1331
        %v1333 = vmul.f32 %v1326, %v396
        %v1334 = vmul.f32 %v1329, %v396
        %v1335 = vmul.f32 %v1332, %v396
        %v1336 = vsub.f32 %v1321, %v1333
        %v1337 = vsub.f32 %v1322, %v1334
        %v1338 = vsub.f32 %v1323, %v1335
        %v1339 = vmul.f32 %v1336, %v1336
        %v1340 = vmul.f32 %v1337, %v1337
        %v1341 = vmul.f32 %v1338, %v1338
        %v1342 = vsel %vm385, %v1339, 0.0
        %1343 = vadd.xlane.f32.xlu0 %v1342
        %v1344 = vpop.xlane.xlu0 %1343
        %v1345 = vsel %vm385, %v1340, 0.0
        %1346 = vadd.xlane.f32.xlu0 %v1345
        %v1347 = vpop.xlane.xlu0 %1346
        %v1348 = vsel %vm392, %v1341, 0.0
        %1349 = vadd.xlane.f32.xlu0 %v1348
        %v1350 = vpop.xlane.xlu0 %1349
        %v1351 = vmul.f32 %v1344, %v396
        %v1352 = vmul.f32 %v1347, %v396
        %v1353 = vmul.f32 %v1350, %v396
        %v1354 = vadd.f32 %v1351, 1e-05
        %v1355 = vadd.f32 %v1352, 1e-05
        %v1356 = vadd.f32 %v1353, 1e-05
        %v1357 = vrsqrt.pop %v1354
        %v1358 = vrsqrt.pop %v1355
        %v1359 = vrsqrt.pop %v1356
        %v1360 = vmul.f32 %v1336, %v1357
        %v1361 = vmul.f32 %v1337, %v1358
        %v1362 = vmul.f32 %v1338, %v1359
        %v1363 = vlaneseq
        %v1364 = vshrl.u32 %v1363, 7
        %v1365 = vsub.s32 2, %v1364
        %v1366 = vrot.slane %v384, %v1365
        %v1367 = vmul.f32 %v1360, %v1366
        %v1368 = vmul.f32 %v1361, %v1366
        %v1369 = vmul.f32 %v1362, %v1366
        %v1370 = vlaneseq
        %v1371 = vshrl.u32 %v1370, 7
        %v1372 = vsub.s32 3, %v1371
        %v1373 = vrot.slane %v384, %v1372
        %v1374 = vadd.f32 %v1367, %v1373
        %v1375 = vadd.f32 %v1368, %v1373
        %v1376 = vadd.f32 %v1369, %v1373
        %v1377 = vld [vmem:[%s5] sm:$0xf]
        %v1378 = vld [vmem:[%s5 + $0x4] sm:$0xf]
        %v1379 = vld [vmem:[%s5 + $0x8] sm:$0xf]
        %v1380 = vld [vmem:[%s5 + $0xc] sm:$0xf]
        %v1381 = vpack.c.bf16 %v1375, %v1374
        %v1382 = vpack.c.bf16 %v1376, %v1376
        %v1383 = vld [vmem:[%s5 + $0x10] sm:$0x1]
        %v1384 = vunpack.c.l.bf16 %v1383
        %v1385 = vlaneseq
        %v1386 = vshrl.u32 %v1385, 7
        %v1387 = vsub.s32 0, %v1386
        %v1388 = vrot.slane %v1384, %v1387
        %v1393 = vunpack.c.l.b16 %v1377
        %v1394 = vunpack.c.l.b16 %v1378
        %v1395 = vunpack.c.l.b16 %v1379
        %v1396 = vunpack.c.l.b16 %v1380
        %v1397 = vpack.c.b16 %v1394, %v1393
        %v1398 = vpack.c.b16 %v1396, %v1395
        %v1402 = vsel %vm385, %v1381, 0
        %v1405 = vsel %vm385, %v1382, 0
        %1407 = vmatprep.subr.bf16.mxu0 0
        %1408 = vmatpush1.bf16.msra.mxu0 %v1397
        %1409 = vmatprep.subr.bf16.mxu0 0
        %1410 = vmatpush1.bf16.msra.mxu0 %v1398
        %1411 = vmatprep.subr.bf16.mxu0 0
        %1412 = vmatpush1.bf16.msra.mxu0 0
        %1413 = vmatprep.subr.bf16.mxu0 0
        %1414 = vmatpush1.bf16.msra.mxu0 0
        %1415 = vmatprep.subr.bf16.mxu0 0
        %1416 = vmatpush1.bf16.msra.mxu0 0
        %1417 = vmatprep.subr.bf16.mxu0 0
        %1418 = vmatpush1.bf16.msra.mxu0 0
        %1419 = vmatprep.subr.bf16.mxu0 0
        %1420 = vmatpush1.bf16.msra.mxu0 0
        %1421 = vmatprep.subr.bf16.mxu0 0
        %1422 = vmatpush1.bf16.msra.mxu0 0
        %1423 = vmatprep.subr.bf16.mxu0 0
        %1424 = vmatpush1.bf16.msra.mxu0 0
        %1425 = vmatprep.subr.bf16.mxu0 0
        %1426 = vmatpush1.bf16.msra.mxu0 0
        %1427 = vmatprep.subr.bf16.mxu0 0
        %1428 = vmatpush1.bf16.msra.mxu0 0
        %1429 = vmatprep.subr.bf16.mxu0 0
        %1430 = vmatpush1.bf16.msra.mxu0 0
        %1431 = vmatprep.subr.bf16.mxu0 0
        %1432 = vmatpush1.bf16.msra.mxu0 0
        %1433 = vmatprep.subr.bf16.mxu0 0
        %1434 = vmatpush1.bf16.msra.mxu0 0
        %1435 = vmatprep.subr.bf16.mxu0 0
        %1436 = vmatpush1.bf16.msra.mxu0 0
        %1437 = vmatprep.subr.bf16.mxu0 0
        %1438 = vmatpush1.bf16.msra.mxu0 0
        %1439 = vmatprep.mubr.bf16.mxu0 0
        %1440 = vmatmul.mubr.bf16.gmra.mrb[0].mxu0 %v1402
        %v1441 = vpop.f32.mrb[0].mxu0
        %v1442 = vadd.f32 %v1388, %v1441
        %v1443 = vpop.f32.mrb[0].mxu0
        %v1444 = vpop.f32.mrb[0].mxu0
        %v1445 = vadd.f32 %v1388, %v1444
        %v1446 = vpop.f32.mrb[0].mxu0
        %1447 = vmatprep.mubr.bf16.mxu0 0
        %1448 = vmatmul.mubr.bf16.gmra.mrb[0].mxu0 %v1405
        %v1449 = vpop.f32.mrb[0].mxu0
        %v1450 = vadd.f32 %v1388, %v1449
        %v1451 = vpop.f32.mrb[0].mxu0
        %v1452 = vpop.f32.mrb[0].mxu0
        %v1453 = vpop.f32.mrb[0].mxu0
        %1454 = vdwg.mxu0
        %v1455 = vmul.f32 %v1442, 0.5
        %v1456 = vmul.f32 %v1445, 0.5
        %v1457 = vmul.f32 %v1450, 0.5
        %v1458 = vmul.f32 %v1442, %v1442
        %v1459 = vmul.f32 %v1445, %v1445
        %v1460 = vmul.f32 %v1450, %v1450
        %v1461 = vmul.f32 %v1458, %v1442
        %v1462 = vmul.f32 %v1459, %v1445
        %v1463 = vmul.f32 %v1460, %v1450
        %v1464 = vmul.f32 %v1461, 0.044715
        %v1465 = vmul.f32 %v1462, 0.044715
        %v1466 = vmul.f32 %v1463, 0.044715
        %v1467 = vadd.f32 %v1442, %v1464
        %v1468 = vadd.f32 %v1445, %v1465
        %v1469 = vadd.f32 %v1450, %v1466
        %v1470 = vmul.f32 %v1467, 0.7978846
        %v1471 = vmul.f32 %v1468, 0.7978846
        %v1472 = vmul.f32 %v1469, 0.7978846
        %v1473 = vtanh.pop %v1470
        %v1474 = vtanh.pop %v1471
        %v1475 = vtanh.pop %v1472
        %v1476 = vadd.f32 %v1473, 1.0
        %v1477 = vadd.f32 %v1474, 1.0
        %v1478 = vadd.f32 %v1475, 1.0
        %v1479 = vmul.f32 %v1455, %v1476
        %v1480 = vmul.f32 %v1456, %v1477
        %v1481 = vmul.f32 %v1457, %v1478
        %v1482 = vld [vmem:[%s6] sm:$0xf]
        %v1483 = vld [vmem:[%s6 + $0x4] sm:$0xf]
        %v1484 = vld [vmem:[%s6 + $0x8] sm:$0xf]
        %v1485 = vld [vmem:[%s6 + $0xc] sm:$0xf]
        %v1486 = vld [vmem:[%s6 + $0x10] sm:$0xf]
        %v1487 = vld [vmem:[%s6 + $0x14] sm:$0xf]
        %v1488 = vld [vmem:[%s6 + $0x18] sm:$0xf]
        %v1489 = vld [vmem:[%s6 + $0x1c] sm:$0xf]
        %v1490 = vld [vmem:[%s6 + $0x20] sm:$0xf]
        %v1491 = vld [vmem:[%s6 + $0x24] sm:$0xf]
        %v1492 = vld [vmem:[%s6 + $0x28] sm:$0xf]
        %v1493 = vld [vmem:[%s6 + $0x2c] sm:$0xf]
        %v1494 = vld [vmem:[%s6 + $0x30] sm:$0xf]
        %v1495 = vld [vmem:[%s6 + $0x34] sm:$0xf]
        %v1496 = vld [vmem:[%s6 + $0x38] sm:$0xf]
        %v1497 = vld [vmem:[%s6 + $0x3c] sm:$0xf]
        %v1498 = vpack.c.bf16 %v1480, %v1479
        %v1499 = vpack.c.bf16 %v1481, %v1481
        %v1516 = vunpack.c.l.b16 %v1482
        %v1517 = vunpack.c.l.b16 %v1483
        %v1518 = vunpack.c.l.b16 %v1484
        %v1519 = vunpack.c.l.b16 %v1485
        %v1520 = vunpack.c.l.b16 %v1486
        %v1521 = vunpack.c.l.b16 %v1487
        %v1522 = vunpack.c.l.b16 %v1488
        %v1523 = vunpack.c.l.b16 %v1489
        %v1524 = vunpack.c.l.b16 %v1490
        %v1525 = vunpack.c.l.b16 %v1491
        %v1526 = vunpack.c.l.b16 %v1492
        %v1527 = vunpack.c.l.b16 %v1493
        %v1528 = vunpack.c.l.b16 %v1494
        %v1529 = vunpack.c.l.b16 %v1495
        %v1530 = vunpack.c.l.b16 %v1496
        %v1531 = vunpack.c.l.b16 %v1497
        %v1532 = vpack.c.b16 %v1517, %v1516
        %v1533 = vpack.c.b16 %v1519, %v1518
        %v1534 = vpack.c.b16 %v1521, %v1520
        %v1535 = vpack.c.b16 %v1523, %v1522
        %v1536 = vpack.c.b16 %v1525, %v1524
        %v1537 = vpack.c.b16 %v1527, %v1526
        %v1538 = vpack.c.b16 %v1529, %v1528
        %v1539 = vpack.c.b16 %v1531, %v1530
        %1548 = vmatprep.subr.bf16.mxu0 0
        %1549 = vmatpush1.bf16.msra.mxu0 %v1532
        %1550 = vmatprep.subr.bf16.mxu0 0
        %1551 = vmatpush1.bf16.msra.mxu0 %v1533
        %1552 = vmatprep.subr.bf16.mxu0 0
        %1553 = vmatpush1.bf16.msra.mxu0 %v1534
        %1554 = vmatprep.subr.bf16.mxu0 0
        %1555 = vmatpush1.bf16.msra.mxu0 %v1535
        %1556 = vmatprep.subr.bf16.mxu0 0
        %1557 = vmatpush1.bf16.msra.mxu0 %v1536
        %1558 = vmatprep.subr.bf16.mxu0 0
        %1559 = vmatpush1.bf16.msra.mxu0 %v1537
        %1560 = vmatprep.subr.bf16.mxu0 0
        %1561 = vmatpush1.bf16.msra.mxu0 %v1538
        %1562 = vmatprep.subr.bf16.mxu0 0
        %1563 = vmatpush1.bf16.msra.mxu0 %v1539
        %1564 = vmatprep.subr.bf16.mxu0 0
        %1565 = vmatpush1.bf16.msra.mxu0 0
        %1566 = vmatprep.subr.bf16.mxu0 0
        %1567 = vmatpush1.bf16.msra.mxu0 0
        %1568 = vmatprep.subr.bf16.mxu0 0
        %1569 = vmatpush1.bf16.msra.mxu0 0
        %1570 = vmatprep.subr.bf16.mxu0 0
        %1571 = vmatpush1.bf16.msra.mxu0 0
        %1572 = vmatprep.subr.bf16.mxu0 0
        %1573 = vmatpush1.bf16.msra.mxu0 0
        %1574 = vmatprep.subr.bf16.mxu0 0
        %1575 = vmatpush1.bf16.msra.mxu0 0
        %1576 = vmatprep.subr.bf16.mxu0 0
        %1577 = vmatpush1.bf16.msra.mxu0 0
        %1578 = vmatprep.subr.bf16.mxu0 0
        %1579 = vmatpush1.bf16.msra.mxu0 0
        %1580 = vmatprep.mubr.bf16.mxu0 0
        %1581 = vmatmul.mubr.bf16.gmra.mrb[0].mxu0 %v1498
        %v1582 = vpop.f32.mrb[0].mxu0
        %v1583 = vadd.f32 0.0, %v1582
        %v1584 = vpop.f32.mrb[0].mxu0
        %v1585 = vpop.f32.mrb[0].mxu0
        %v1586 = vadd.f32 0.0, %v1585
        %v1587 = vpop.f32.mrb[0].mxu0
        %1588 = vmatprep.mubr.bf16.mxu0 0
        %1589 = vmatmul.mubr.bf16.gmra.mrb[0].mxu0 %v1499
        %v1590 = vpop.f32.mrb[0].mxu0
        %v1591 = vadd.f32 0.0, %v1590
        %v1592 = vpop.f32.mrb[0].mxu0
        %v1593 = vpop.f32.mrb[0].mxu0
        %v1594 = vpop.f32.mrb[0].mxu0
        %1595 = vdwg.mxu0
        %v1596 = vadd.f32 %v1321, %v1583
        %v1597 = vadd.f32 %v1322, %v1586
        %v1598 = vadd.f32 %v1323, %v1591
        %v1599 = vld [vmem:[%s6 + $0x40] sm:$0x1]
        %v1600 = vunpack.c.l.bf16 %v1599
        %v1601 = vlaneseq
        %v1602 = vshrl.u32 %v1601, 7
        %v1603 = vsub.s32 0, %v1602
        %v1604 = vrot.slane %v1600, %v1603
        %v1605 = vadd.f32 %v1596, %v1604
        %v1606 = vadd.f32 %v1597, %v1604
        %v1607 = vadd.f32 %v1598, %v1604
        %s1608 = scalar_lea.vmem %s4, 4
        %v1609 = vld [vmem:[%s1608] sm:$0xf]
        %v1610 = vsel %vm385, %v1605, 0.0
        %1611 = vadd.xlane.f32.xlu0 %v1610
        %v1612 = vpop.xlane.xlu0 %1611
        %v1613 = vsel %vm385, %v1606, 0.0
        %1614 = vadd.xlane.f32.xlu0 %v1613
        %v1615 = vpop.xlane.xlu0 %1614
        %v1616 = vsel %vm392, %v1607, 0.0
        %1617 = vadd.xlane.f32.xlu0 %v1616
        %v1618 = vpop.xlane.xlu0 %1617
        %v1619 = vmul.f32 %v1612, %v396
        %v1620 = vmul.f32 %v1615, %v396
        %v1621 = vmul.f32 %v1618, %v396
        %v1622 = vsub.f32 %v1605, %v1619
        %v1623 = vsub.f32 %v1606, %v1620
        %v1624 = vsub.f32 %v1607, %v1621
        %v1625 = vmul.f32 %v1622, %v1622
        %v1626 = vmul.f32 %v1623, %v1623
        %v1627 = vmul.f32 %v1624, %v1624
        %v1628 = vsel %vm385, %v1625, 0.0
        %1629 = vadd.xlane.f32.xlu0 %v1628
        %v1630 = vpop.xlane.xlu0 %1629
        %v1631 = vsel %vm385, %v1626, 0.0
        %1632 = vadd.xlane.f32.xlu0 %v1631
        %v1633 = vpop.xlane.xlu0 %1632
        %v1634 = vsel %vm392, %v1627, 0.0
        %1635 = vadd.xlane.f32.xlu0 %v1634
        %v1636 = vpop.xlane.xlu0 %1635
        %v1637 = vmul.f32 %v1630, %v396
        %v1638 = vmul.f32 %v1633, %v396
        %v1639 = vmul.f32 %v1636, %v396
        %v1640 = vadd.f32 %v1637, 1e-05
        %v1641 = vadd.f32 %v1638, 1e-05
        %v1642 = vadd.f32 %v1639, 1e-05
        %v1643 = vrsqrt.pop %v1640
        %v1644 = vrsqrt.pop %v1641
        %v1645 = vrsqrt.pop %v1642
        %v1646 = vmul.f32 %v1622, %v1643
        %v1647 = vmul.f32 %v1623, %v1644
        %v1648 = vmul.f32 %v1624, %v1645
        %v1649 = vlaneseq
        %v1650 = vshrl.u32 %v1649, 7
        %v1651 = vsub.s32 0, %v1650
        %v1652 = vrot.slane %v1609, %v1651
        %v1653 = vmul.f32 %v1646, %v1652
        %v1654 = vmul.f32 %v1647, %v1652
        %v1655 = vmul.f32 %v1648, %v1652
        %v1656 = vlaneseq
        %v1657 = vshrl.u32 %v1656, 7
        %v1658 = vsub.s32 1, %v1657
        %v1659 = vrot.slane %v1609, %v1658
        %v1660 = vadd.f32 %v1653, %v1659
        %v1661 = vadd.f32 %v1654, %v1659
        %v1662 = vadd.f32 %v1655, %v1659
        %s1663 = scalar_lea.vmem %s2, 20
        %v1664 = vld [vmem:[%s1663] sm:$0xf]
        %v1665 = vld [vmem:[%s1663 + $0x4] sm:$0xf]
        %v1666 = vld [vmem:[%s1663 + $0x8] sm:$0xf]
        %v1667 = vld [vmem:[%s1663 + $0xc] sm:$0xf]
        %v1668 = vpack.c.bf16 %v1661, %v1660
        %v1669 = vpack.c.bf16 %v1662, %v1662
        %v1670 = vld [vmem:[%s1663 + $0x10] sm:$0x1]
        %v1671 = vunpack.c.l.bf16 %v1670
        %v1672 = vlaneseq
        %v1673 = vshrl.u32 %v1672, 7
        %v1674 = vsub.s32 0, %v1673
        %v1675 = vrot.slane %v1671, %v1674
        %v1680 = vunpack.c.l.b16 %v1664
        %v1681 = vunpack.c.l.b16 %v1665
        %v1682 = vunpack.c.l.b16 %v1666
        %v1683 = vunpack.c.l.b16 %v1667
        %v1684 = vpack.c.b16 %v1681, %v1680
        %v1685 = vpack.c.b16 %v1683, %v1682
        %v1689 = vsel %vm385, %v1668, 0
        %v1692 = vsel %vm385, %v1669, 0
        %1694 = vmatprep.subr.bf16.mxu0 0
        %1695 = vmatpush1.bf16.msra.mxu0 %v1684
        %1696 = vmatprep.subr.bf16.mxu0 0
        %1697 = vmatpush1.bf16.msra.mxu0 %v1685
        %1698 = vmatprep.subr.bf16.mxu0 0
        %1699 = vmatpush1.bf16.msra.mxu0 0
        %1700 = vmatprep.subr.bf16.mxu0 0
        %1701 = vmatpush1.bf16.msra.mxu0 0
        %1702 = vmatprep.subr.bf16.mxu0 0
        %1703 = vmatpush1.bf16.msra.mxu0 0
        %1704 = vmatprep.subr.bf16.mxu0 0
        %1705 = vmatpush1.bf16.msra.mxu0 0
        %1706 = vmatprep.subr.bf16.mxu0 0
        %1707 = vmatpush1.bf16.msra.mxu0 0
        %1708 = vmatprep.subr.bf16.mxu0 0
        %1709 = vmatpush1.bf16.msra.mxu0 0
        %1710 = vmatprep.subr.bf16.mxu0 0
        %1711 = vmatpush1.bf16.msra.mxu0 0
        %1712 = vmatprep.subr.bf16.mxu0 0
        %1713 = vmatpush1.bf16.msra.mxu0 0
        %1714 = vmatprep.subr.bf16.mxu0 0
        %1715 = vmatpush1.bf16.msra.mxu0 0
        %1716 = vmatprep.subr.bf16.mxu0 0
        %1717 = vmatpush1.bf16.msra.mxu0 0
        %1718 = vmatprep.subr.bf16.mxu0 0
        %1719 = vmatpush1.bf16.msra.mxu0 0
        %1720 = vmatprep.subr.bf16.mxu0 0
        %1721 = vmatpush1.bf16.msra.mxu0 0
        %1722 = vmatprep.subr.bf16.mxu0 0
        %1723 = vmatpush1.bf16.msra.mxu0 0
        %1724 = vmatprep.subr.bf16.mxu0 0
        %1725 = vmatpush1.bf16.msra.mxu0 0
        %1726 = vmatprep.mubr.bf16.mxu0 0
        %1727 = vmatmul.mubr.bf16.gmra.mrb[0].mxu0 %v1689
        %v1728 = vpop.f32.mrb[0].mxu0
        %v1729 = vadd.f32 %v1675, %v1728
        %v1730 = vpop.f32.mrb[0].mxu0
        %v1731 = vpop.f32.mrb[0].mxu0
        %v1732 = vadd.f32 %v1675, %v1731
        %v1733 = vpop.f32.mrb[0].mxu0
        %1734 = vmatprep.mubr.bf16.mxu0 0
        %1735 = vmatmul.mubr.bf16.gmra.mrb[0].mxu0 %v1692
        %v1736 = vpop.f32.mrb[0].mxu0
        %v1737 = vadd.f32 %v1675, %v1736
        %v1738 = vpop.f32.mrb[0].mxu0
        %v1739 = vpop.f32.mrb[0].mxu0
        %v1740 = vpop.f32.mrb[0].mxu0
        %1741 = vdwg.mxu0
        %v1742 = vpack.c.bf16 %v1729, %v1729
        %v1743 = vpack.c.bf16 %v1732, %v1729
        %v1744 = vpack.c.bf16 %v1737, %v1737
        %1747 = vrot.lane.b32.xlu0 %v1743, 96
        %v1748 = vpop.permute.xlu0 %1747
        %1749 = vrot.lane.b32.xlu0 %v1744, 96
        %v1750 = vpop.permute.xlu0 %1749
        %v1752 = vsel %vm527, %v1742, 0
        %v1755 = vsel %vm527, %v1748, 0
        %v1758 = vsel %vm527, %v1750, 0
        %1760 = vmatprep.subr.bf16.mxu0 0
        %1761 = vmatpush1.bf16.xpose.msra.mxu0 %v1755
        %1762 = vmatprep.subr.bf16.mxu0 0
        %1763 = vmatpush1.bf16.xpose.msra.mxu0 %v1758
        %1764 = vmatprep.subr.bf16.mxu0 0
        %1765 = vmatpush1.bf16.xpose.msra.mxu0 0
        %1766 = vmatprep.subr.bf16.mxu0 0
        %1767 = vmatpush1.bf16.xpose.msra.mxu0 0
        %1768 = vmatprep.subr.bf16.mxu0 0
        %1769 = vmatpush1.bf16.xpose.msra.mxu0 0
        %1770 = vmatprep.subr.bf16.mxu0 0
        %1771 = vmatpush1.bf16.xpose.msra.mxu0 0
        %1772 = vmatprep.subr.bf16.mxu0 0
        %1773 = vmatpush1.bf16.xpose.msra.mxu0 0
        %1774 = vmatprep.subr.bf16.mxu0 0
        %1775 = vmatpush1.bf16.xpose.msra.mxu0 0
        %1776 = vmatprep.subr.bf16.mxu0 0
        %1777 = vmatpush1.bf16.xpose.msra.mxu0 0
        %1778 = vmatprep.subr.bf16.mxu0 0
        %1779 = vmatpush1.bf16.xpose.msra.mxu0 0
        %1780 = vmatprep.subr.bf16.mxu0 0
        %1781 = vmatpush1.bf16.xpose.msra.mxu0 0
        %1782 = vmatprep.subr.bf16.mxu0 0
        %1783 = vmatpush1.bf16.xpose.msra.mxu0 0
        %1784 = vmatprep.subr.bf16.mxu0 0
        %1785 = vmatpush1.bf16.xpose.msra.mxu0 0
        %1786 = vmatprep.subr.bf16.mxu0 0
        %1787 = vmatpush1.bf16.xpose.msra.mxu0 0
        %1788 = vmatprep.subr.bf16.mxu0 0
        %1789 = vmatpush1.bf16.xpose.msra.mxu0 0
        %1790 = vmatprep.subr.bf16.mxu0 0
        %1791 = vmatpush1.bf16.xpose.msra.mxu0 0
        %1792 = vmatprep.mubr.bf16.mxu0 0
        %1793 = vmatmul.mubr.bf16.gmra.mrb[0].mxu0 %v1752
        %v1794 = vpop.f32.mrb[0].mxu0
        %v1795 = vadd.f32 0.0, %v1794
        %v1796 = vpop.f32.mrb[0].mxu0
        %v1797 = vpop.f32.mrb[0].mxu0
        %v1798 = vpop.f32.mrb[0].mxu0
        %1799 = vdwg.mxu0
        %v1800 = vmul.f32 %v1795, 0.35355338
        %v1801 = vsel %vm598, %v1800, -inf
        %1802 = vmax.xlane.f32.xlu0 %v1801
        %v1803 = vpop.xlane.xlu0 %1802
        %v1804 = vsub.f32 %v1800, %v1803
        %v1805 = vmul.f32 %v1804, 1.442695
        %v1806 = vpow.pop %v1805
        %v1807 = vsel %vm598, %v1806, 0.0
        %1808 = vadd.xlane.f32.xlu0 %v1807
        %v1809 = vpop.xlane.xlu0 %1808
        %v1810 = vrcp.pop %v1809
        %v1811 = vmul.f32 %v1806, %v1810
        %v1812 = vpack.c.bf16 %v1811, %v1811
        %1813 = vrot.lane.b32.xlu0 %v1743, 64
        %v1814 = vpop.permute.xlu0 %1813
        %1815 = vrot.lane.b32.xlu0 %v1744, 64
        %v1816 = vpop.permute.xlu0 %1815
        %v1819 = vsel %vm591, %v1812, 0
        %v1822 = vand.u32 %v1816, %v641
        %1824 = vmatprep.subr.bf16.mxu0 0
        %1825 = vmatpush1.bf16.msra.mxu0 %v1814
        %1826 = vmatprep.subr.bf16.mxu0 0
        %1827 = vmatpush1.bf16.msra.mxu0 %v1822
        %1828 = vmatprep.subr.bf16.mxu0 0
        %1829 = vmatpush1.bf16.msra.mxu0 0
        %1830 = vmatprep.subr.bf16.mxu0 0
        %1831 = vmatpush1.bf16.msra.mxu0 0
        %1832 = vmatprep.subr.bf16.mxu0 0
        %1833 = vmatpush1.bf16.msra.mxu0 0
        %1834 = vmatprep.subr.bf16.mxu0 0
        %1835 = vmatpush1.bf16.msra.mxu0 0
        %1836 = vmatprep.subr.bf16.mxu0 0
        %1837 = vmatpush1.bf16.msra.mxu0 0
        %1838 = vmatprep.subr.bf16.mxu0 0
        %1839 = vmatpush1.bf16.msra.mxu0 0
        %1840 = vmatprep.subr.bf16.mxu0 0
        %1841 = vmatpush1.bf16.msra.mxu0 0
        %1842 = vmatprep.subr.bf16.mxu0 0
        %1843 = vmatpush1.bf16.msra.mxu0 0
        %1844 = vmatprep.subr.bf16.mxu0 0
        %1845 = vmatpush1.bf16.msra.mxu0 0
        %1846 = vmatprep.subr.bf16.mxu0 0
        %1847 = vmatpush1.bf16.msra.mxu0 0
        %1848 = vmatprep.subr.bf16.mxu0 0
        %1849 = vmatpush1.bf16.msra.mxu0 0
        %1850 = vmatprep.subr.bf16.mxu0 0
        %1851 = vmatpush1.bf16.msra.mxu0 0
        %1852 = vmatprep.subr.bf16.mxu0 0
        %1853 = vmatpush1.bf16.msra.mxu0 0
        %1854 = vmatprep.subr.bf16.mxu0 0
        %1855 = vmatpush1.bf16.msra.mxu0 0
        %1856 = vmatprep.mubr.bf16.mxu0 0
        %1857 = vmatmul.mubr.bf16.gmra.mrb[0].mxu0 %v1819
        %v1858 = vpop.f32.mrb[0].mxu0
        %v1859 = vadd.f32 0.0, %v1858
        %v1860 = vpop.f32.mrb[0].mxu0
        %v1861 = vpop.f32.mrb[0].mxu0
        %v1862 = vpop.f32.mrb[0].mxu0
        %1863 = vdwg.mxu0
        %1865 = vrot.lane.b32.xlu0 %v1742, 120
        %v1866 = vpop.permute.xlu0 %1865
        %1867 = vrot.lane.b32.xlu0 %v1743, 88
        %v1868 = vpop.permute.xlu0 %1867
        %1869 = vrot.lane.b32.xlu0 %v1744, 88
        %v1870 = vpop.permute.xlu0 %1869
        %v1872 = vsel %vm527, %v1866, 0
        %v1875 = vsel %vm527, %v1868, 0
        %v1878 = vsel %vm527, %v1870, 0
        %1880 = vmatprep.subr.bf16.mxu0 0
        %1881 = vmatpush1.bf16.xpose.msra.mxu0 %v1875
        %1882 = vmatprep.subr.bf16.mxu0 0
        %1883 = vmatpush1.bf16.xpose.msra.mxu0 %v1878
        %1884 = vmatprep.subr.bf16.mxu0 0
        %1885 = vmatpush1.bf16.xpose.msra.mxu0 0
        %1886 = vmatprep.subr.bf16.mxu0 0
        %1887 = vmatpush1.bf16.xpose.msra.mxu0 0
        %1888 = vmatprep.subr.bf16.mxu0 0
        %1889 = vmatpush1.bf16.xpose.msra.mxu0 0
        %1890 = vmatprep.subr.bf16.mxu0 0
        %1891 = vmatpush1.bf16.xpose.msra.mxu0 0
        %1892 = vmatprep.subr.bf16.mxu0 0
        %1893 = vmatpush1.bf16.xpose.msra.mxu0 0
        %1894 = vmatprep.subr.bf16.mxu0 0
        %1895 = vmatpush1.bf16.xpose.msra.mxu0 0
        %1896 = vmatprep.subr.bf16.mxu0 0
        %1897 = vmatpush1.bf16.xpose.msra.mxu0 0
        %1898 = vmatprep.subr.bf16.mxu0 0
        %1899 = vmatpush1.bf16.xpose.msra.mxu0 0
        %1900 = vmatprep.subr.bf16.mxu0 0
        %1901 = vmatpush1.bf16.xpose.msra.mxu0 0
        %1902 = vmatprep.subr.bf16.mxu0 0
        %1903 = vmatpush1.bf16.xpose.msra.mxu0 0
        %1904 = vmatprep.subr.bf16.mxu0 0
        %1905 = vmatpush1.bf16.xpose.msra.mxu0 0
        %1906 = vmatprep.subr.bf16.mxu0 0
        %1907 = vmatpush1.bf16.xpose.msra.mxu0 0
        %1908 = vmatprep.subr.bf16.mxu0 0
        %1909 = vmatpush1.bf16.xpose.msra.mxu0 0
        %1910 = vmatprep.subr.bf16.mxu0 0
        %1911 = vmatpush1.bf16.xpose.msra.mxu0 0
        %1912 = vmatprep.mubr.bf16.mxu0 0
        %1913 = vmatmul.mubr.bf16.gmra.mrb[0].mxu0 %v1872
        %v1914 = vpop.f32.mrb[0].mxu0
        %v1915 = vadd.f32 0.0, %v1914
        %v1916 = vpop.f32.mrb[0].mxu0
        %v1917 = vpop.f32.mrb[0].mxu0
        %v1918 = vpop.f32.mrb[0].mxu0
        %1919 = vdwg.mxu0
        %v1920 = vmul.f32 %v1915, 0.35355338
        %v1921 = vsel %vm598, %v1920, -inf
        %1922 = vmax.xlane.f32.xlu0 %v1921
        %v1923 = vpop.xlane.xlu0 %1922
        %v1924 = vsub.f32 %v1920, %v1923
        %v1925 = vmul.f32 %v1924, 1.442695
        %v1926 = vpow.pop %v1925
        %v1927 = vsel %vm598, %v1926, 0.0
        %1928 = vadd.xlane.f32.xlu0 %v1927
        %v1929 = vpop.xlane.xlu0 %1928
        %v1930 = vrcp.pop %v1929
        %v1931 = vmul.f32 %v1926, %v1930
        %v1932 = vpack.c.bf16 %v1931, %v1931
        %1933 = vrot.lane.b32.xlu0 %v1743, 56
        %v1934 = vpop.permute.xlu0 %1933
        %1935 = vrot.lane.b32.xlu0 %v1744, 56
        %v1936 = vpop.permute.xlu0 %1935
        %v1939 = vsel %vm591, %v1932, 0
        %v1942 = vand.u32 %v1936, %v641
        %1944 = vmatprep.subr.bf16.mxu0 0
        %1945 = vmatpush1.bf16.msra.mxu0 %v1934
        %1946 = vmatprep.subr.bf16.mxu0 0
        %1947 = vmatpush1.bf16.msra.mxu0 %v1942
        %1948 = vmatprep.subr.bf16.mxu0 0
        %1949 = vmatpush1.bf16.msra.mxu0 0
        %1950 = vmatprep.subr.bf16.mxu0 0
        %1951 = vmatpush1.bf16.msra.mxu0 0
        %1952 = vmatprep.subr.bf16.mxu0 0
        %1953 = vmatpush1.bf16.msra.mxu0 0
        %1954 = vmatprep.subr.bf16.mxu0 0
        %1955 = vmatpush1.bf16.msra.mxu0 0
        %1956 = vmatprep.subr.bf16.mxu0 0
        %1957 = vmatpush1.bf16.msra.mxu0 0
        %1958 = vmatprep.subr.bf16.mxu0 0
        %1959 = vmatpush1.bf16.msra.mxu0 0
        %1960 = vmatprep.subr.bf16.mxu0 0
        %1961 = vmatpush1.bf16.msra.mxu0 0
        %1962 = vmatprep.subr.bf16.mxu0 0
        %1963 = vmatpush1.bf16.msra.mxu0 0
        %1964 = vmatprep.subr.bf16.mxu0 0
        %1965 = vmatpush1.bf16.msra.mxu0 0
        %1966 = vmatprep.subr.bf16.mxu0 0
        %1967 = vmatpush1.bf16.msra.mxu0 0
        %1968 = vmatprep.subr.bf16.mxu0 0
        %1969 = vmatpush1.bf16.msra.mxu0 0
        %1970 = vmatprep.subr.bf16.mxu0 0
        %1971 = vmatpush1.bf16.msra.mxu0 0
        %1972 = vmatprep.subr.bf16.mxu0 0
        %1973 = vmatpush1.bf16.msra.mxu0 0
        %1974 = vmatprep.subr.bf16.mxu0 0
        %1975 = vmatpush1.bf16.msra.mxu0 0
        %1976 = vmatprep.mubr.bf16.mxu0 0
        %1977 = vmatmul.mubr.bf16.gmra.mrb[0].mxu0 %v1939
        %v1978 = vpop.f32.mrb[0].mxu0
        %v1979 = vadd.f32 0.0, %v1978
        %v1980 = vpop.f32.mrb[0].mxu0
        %v1981 = vpop.f32.mrb[0].mxu0
        %v1982 = vpop.f32.mrb[0].mxu0
        %1983 = vdwg.mxu0
        %1984 = vrot.lane.b32.xlu0 %v1742, 112
        %v1985 = vpop.permute.xlu0 %1984
        %1986 = vrot.lane.b32.xlu0 %v1743, 80
        %v1987 = vpop.permute.xlu0 %1986
        %1988 = vrot.lane.b32.xlu0 %v1744, 80
        %v1989 = vpop.permute.xlu0 %1988
        %v1991 = vsel %vm527, %v1985, 0
        %v1994 = vsel %vm527, %v1987, 0
        %v1997 = vsel %vm527, %v1989, 0
        %1999 = vmatprep.subr.bf16.mxu0 0
        %2000 = vmatpush1.bf16.xpose.msra.mxu0 %v1994
        %2001 = vmatprep.subr.bf16.mxu0 0
        %2002 = vmatpush1.bf16.xpose.msra.mxu0 %v1997
        %2003 = vmatprep.subr.bf16.mxu0 0
        %2004 = vmatpush1.bf16.xpose.msra.mxu0 0
        %2005 = vmatprep.subr.bf16.mxu0 0
        %2006 = vmatpush1.bf16.xpose.msra.mxu0 0
        %2007 = vmatprep.subr.bf16.mxu0 0
        %2008 = vmatpush1.bf16.xpose.msra.mxu0 0
        %2009 = vmatprep.subr.bf16.mxu0 0
        %2010 = vmatpush1.bf16.xpose.msra.mxu0 0
        %2011 = vmatprep.subr.bf16.mxu0 0
        %2012 = vmatpush1.bf16.xpose.msra.mxu0 0
        %2013 = vmatprep.subr.bf16.mxu0 0
        %2014 = vmatpush1.bf16.xpose.msra.mxu0 0
        %2015 = vmatprep.subr.bf16.mxu0 0
        %2016 = vmatpush1.bf16.xpose.msra.mxu0 0
        %2017 = vmatprep.subr.bf16.mxu0 0
        %2018 = vmatpush1.bf16.xpose.msra.mxu0 0
        %2019 = vmatprep.subr.bf16.mxu0 0
        %2020 = vmatpush1.bf16.xpose.msra.mxu0 0
        %2021 = vmatprep.subr.bf16.mxu0 0
        %2022 = vmatpush1.bf16.xpose.msra.mxu0 0
        %2023 = vmatprep.subr.bf16.mxu0 0
        %2024 = vmatpush1.bf16.xpose.msra.mxu0 0
        %2025 = vmatprep.subr.bf16.mxu0 0
        %2026 = vmatpush1.bf16.xpose.msra.mxu0 0
        %2027 = vmatprep.subr.bf16.mxu0 0
        %2028 = vmatpush1.bf16.xpose.msra.mxu0 0
        %2029 = vmatprep.subr.bf16.mxu0 0
        %2030 = vmatpush1.bf16.xpose.msra.mxu0 0
        %2031 = vmatprep.mubr.bf16.mxu0 0
        %2032 = vmatmul.mubr.bf16.gmra.mrb[0].mxu0 %v1991
        %v2033 = vpop.f32.mrb[0].mxu0
        %v2034 = vadd.f32 0.0, %v2033
        %v2035 = vpop.f32.mrb[0].mxu0
        %v2036 = vpop.f32.mrb[0].mxu0
        %v2037 = vpop.f32.mrb[0].mxu0
        %2038 = vdwg.mxu0
        %v2039 = vmul.f32 %v2034, 0.35355338
        %v2040 = vsel %vm598, %v2039, -inf
        %2041 = vmax.xlane.f32.xlu0 %v2040
        %v2042 = vpop.xlane.xlu0 %2041
        %v2043 = vsub.f32 %v2039, %v2042
        %v2044 = vmul.f32 %v2043, 1.442695
        %v2045 = vpow.pop %v2044
        %v2046 = vsel %vm598, %v2045, 0.0
        %2047 = vadd.xlane.f32.xlu0 %v2046
        %v2048 = vpop.xlane.xlu0 %2047
        %v2049 = vrcp.pop %v2048
        %v2050 = vmul.f32 %v2045, %v2049
        %v2051 = vpack.c.bf16 %v2050, %v2050
        %2052 = vrot.lane.b32.xlu0 %v1743, 48
        %v2053 = vpop.permute.xlu0 %2052
        %2054 = vrot.lane.b32.xlu0 %v1744, 48
        %v2055 = vpop.permute.xlu0 %2054
        %v2058 = vsel %vm591, %v2051, 0
        %v2061 = vand.u32 %v2055, %v641
        %2063 = vmatprep.subr.bf16.mxu0 0
        %2064 = vmatpush1.bf16.msra.mxu0 %v2053
        %2065 = vmatprep.subr.bf16.mxu0 0
        %2066 = vmatpush1.bf16.msra.mxu0 %v2061
        %2067 = vmatprep.subr.bf16.mxu0 0
        %2068 = vmatpush1.bf16.msra.mxu0 0
        %2069 = vmatprep.subr.bf16.mxu0 0
        %2070 = vmatpush1.bf16.msra.mxu0 0
        %2071 = vmatprep.subr.bf16.mxu0 0
        %2072 = vmatpush1.bf16.msra.mxu0 0
        %2073 = vmatprep.subr.bf16.mxu0 0
        %2074 = vmatpush1.bf16.msra.mxu0 0
        %2075 = vmatprep.subr.bf16.mxu0 0
        %2076 = vmatpush1.bf16.msra.mxu0 0
        %2077 = vmatprep.subr.bf16.mxu0 0
        %2078 = vmatpush1.bf16.msra.mxu0 0
        %2079 = vmatprep.subr.bf16.mxu0 0
        %2080 = vmatpush1.bf16.msra.mxu0 0
        %2081 = vmatprep.subr.bf16.mxu0 0
        %2082 = vmatpush1.bf16.msra.mxu0 0
        %2083 = vmatprep.subr.bf16.mxu0 0
        %2084 = vmatpush1.bf16.msra.mxu0 0
        %2085 = vmatprep.subr.bf16.mxu0 0
        %2086 = vmatpush1.bf16.msra.mxu0 0
        %2087 = vmatprep.subr.bf16.mxu0 0
        %2088 = vmatpush1.bf16.msra.mxu0 0
        %2089 = vmatprep.subr.bf16.mxu0 0
        %2090 = vmatpush1.bf16.msra.mxu0 0
        %2091 = vmatprep.subr.bf16.mxu0 0
        %2092 = vmatpush1.bf16.msra.mxu0 0
        %2093 = vmatprep.subr.bf16.mxu0 0
        %2094 = vmatpush1.bf16.msra.mxu0 0
        %2095 = vmatprep.mubr.bf16.mxu0 0
        %2096 = vmatmul.mubr.bf16.gmra.mrb[0].mxu0 %v2058
        %v2097 = vpop.f32.mrb[0].mxu0
        %v2098 = vadd.f32 0.0, %v2097
        %v2099 = vpop.f32.mrb[0].mxu0
        %v2100 = vpop.f32.mrb[0].mxu0
        %v2101 = vpop.f32.mrb[0].mxu0
        %2102 = vdwg.mxu0
        %2103 = vrot.lane.b32.xlu0 %v1742, 104
        %v2104 = vpop.permute.xlu0 %2103
        %2105 = vrot.lane.b32.xlu0 %v1743, 72
        %v2106 = vpop.permute.xlu0 %2105
        %2107 = vrot.lane.b32.xlu0 %v1744, 72
        %v2108 = vpop.permute.xlu0 %2107
        %v2110 = vsel %vm527, %v2104, 0
        %v2113 = vsel %vm527, %v2106, 0
        %v2116 = vsel %vm527, %v2108, 0
        %2118 = vmatprep.subr.bf16.mxu0 0
        %2119 = vmatpush1.bf16.xpose.msra.mxu0 %v2113
        %2120 = vmatprep.subr.bf16.mxu0 0
        %2121 = vmatpush1.bf16.xpose.msra.mxu0 %v2116
        %2122 = vmatprep.subr.bf16.mxu0 0
        %2123 = vmatpush1.bf16.xpose.msra.mxu0 0
        %2124 = vmatprep.subr.bf16.mxu0 0
        %2125 = vmatpush1.bf16.xpose.msra.mxu0 0
        %2126 = vmatprep.subr.bf16.mxu0 0
        %2127 = vmatpush1.bf16.xpose.msra.mxu0 0
        %2128 = vmatprep.subr.bf16.mxu0 0
        %2129 = vmatpush1.bf16.xpose.msra.mxu0 0
        %2130 = vmatprep.subr.bf16.mxu0 0
        %2131 = vmatpush1.bf16.xpose.msra.mxu0 0
        %2132 = vmatprep.subr.bf16.mxu0 0
        %2133 = vmatpush1.bf16.xpose.msra.mxu0 0
        %2134 = vmatprep.subr.bf16.mxu0 0
        %2135 = vmatpush1.bf16.xpose.msra.mxu0 0
        %2136 = vmatprep.subr.bf16.mxu0 0
        %2137 = vmatpush1.bf16.xpose.msra.mxu0 0
        %2138 = vmatprep.subr.bf16.mxu0 0
        %2139 = vmatpush1.bf16.xpose.msra.mxu0 0
        %2140 = vmatprep.subr.bf16.mxu0 0
        %2141 = vmatpush1.bf16.xpose.msra.mxu0 0
        %2142 = vmatprep.subr.bf16.mxu0 0
        %2143 = vmatpush1.bf16.xpose.msra.mxu0 0
        %2144 = vmatprep.subr.bf16.mxu0 0
        %2145 = vmatpush1.bf16.xpose.msra.mxu0 0
        %2146 = vmatprep.subr.bf16.mxu0 0
        %2147 = vmatpush1.bf16.xpose.msra.mxu0 0
        %2148 = vmatprep.subr.bf16.mxu0 0
        %2149 = vmatpush1.bf16.xpose.msra.mxu0 0
        %2150 = vmatprep.mubr.bf16.mxu0 0
        %2151 = vmatmul.mubr.bf16.gmra.mrb[0].mxu0 %v2110
        %v2152 = vpop.f32.mrb[0].mxu0
        %v2153 = vadd.f32 0.0, %v2152
        %v2154 = vpop.f32.mrb[0].mxu0
        %v2155 = vpop.f32.mrb[0].mxu0
        %v2156 = vpop.f32.mrb[0].mxu0
        %2157 = vdwg.mxu0
        %v2158 = vmul.f32 %v2153, 0.35355338
        %v2159 = vsel %vm598, %v2158, -inf
        %2160 = vmax.xlane.f32.xlu0 %v2159
        %v2161 = vpop.xlane.xlu0 %2160
        %v2162 = vsub.f32 %v2158, %v2161
        %v2163 = vmul.f32 %v2162, 1.442695
        %v2164 = vpow.pop %v2163
        %v2165 = vsel %vm598, %v2164, 0.0
        %2166 = vadd.xlane.f32.xlu0 %v2165
        %v2167 = vpop.xlane.xlu0 %2166
        %v2168 = vrcp.pop %v2167
        %v2169 = vmul.f32 %v2164, %v2168
        %v2170 = vpack.c.bf16 %v2169, %v2169
        %2171 = vrot.lane.b32.xlu0 %v1743, 40
        %v2172 = vpop.permute.xlu0 %2171
        %2173 = vrot.lane.b32.xlu0 %v1744, 40
        %v2174 = vpop.permute.xlu0 %2173
        %v2177 = vsel %vm591, %v2170, 0
        %v2180 = vand.u32 %v2174, %v641
        %2182 = vmatprep.subr.bf16.mxu0 0
        %2183 = vmatpush1.bf16.msra.mxu0 %v2172
        %2184 = vmatprep.subr.bf16.mxu0 0
        %2185 = vmatpush1.bf16.msra.mxu0 %v2180
        %2186 = vmatprep.subr.bf16.mxu0 0
        %2187 = vmatpush1.bf16.msra.mxu0 0
        %2188 = vmatprep.subr.bf16.mxu0 0
        %2189 = vmatpush1.bf16.msra.mxu0 0
        %2190 = vmatprep.subr.bf16.mxu0 0
        %2191 = vmatpush1.bf16.msra.mxu0 0
        %2192 = vmatprep.subr.bf16.mxu0 0
        %2193 = vmatpush1.bf16.msra.mxu0 0
        %2194 = vmatprep.subr.bf16.mxu0 0
        %2195 = vmatpush1.bf16.msra.mxu0 0
        %2196 = vmatprep.subr.bf16.mxu0 0
        %2197 = vmatpush1.bf16.msra.mxu0 0
        %2198 = vmatprep.subr.bf16.mxu0 0
        %2199 = vmatpush1.bf16.msra.mxu0 0
        %2200 = vmatprep.subr.bf16.mxu0 0
        %2201 = vmatpush1.bf16.msra.mxu0 0
        %2202 = vmatprep.subr.bf16.mxu0 0
        %2203 = vmatpush1.bf16.msra.mxu0 0
        %2204 = vmatprep.subr.bf16.mxu0 0
        %2205 = vmatpush1.bf16.msra.mxu0 0
        %2206 = vmatprep.subr.bf16.mxu0 0
        %2207 = vmatpush1.bf16.msra.mxu0 0
        %2208 = vmatprep.subr.bf16.mxu0 0
        %2209 = vmatpush1.bf16.msra.mxu0 0
        %2210 = vmatprep.subr.bf16.mxu0 0
        %2211 = vmatpush1.bf16.msra.mxu0 0
        %2212 = vmatprep.subr.bf16.mxu0 0
        %2213 = vmatpush1.bf16.msra.mxu0 0
        %2214 = vmatprep.mubr.bf16.mxu0 0
        %2215 = vmatmul.mubr.bf16.gmra.mrb[0].mxu0 %v2177
        %v2216 = vpop.f32.mrb[0].mxu0
        %v2217 = vadd.f32 0.0, %v2216
        %v2218 = vpop.f32.mrb[0].mxu0
        %v2219 = vpop.f32.mrb[0].mxu0
        %v2220 = vpop.f32.mrb[0].mxu0
        %2221 = vdwg.mxu0
        %2223 = vrot.lane.b32.xlu0 %v1979, 8
        %v2224 = vpop.permute.xlu0 %2223
        %2227 = vrot.lane.b32.xlu0 %v2098, 16
        %v2228 = vpop.permute.xlu0 %2227
        %2231 = vrot.lane.b32.xlu0 %v2217, 24
        %v2232 = vpop.permute.xlu0 %2231
        %v2234 = vsel %vm527, %v1859, %v2224
        %v2235 = vsel %vm329, %v2234, %v2228
        %v2236 = vsel %vm1239, %v2235, %v2232
        %s2237 = scalar_lea.vmem %s3, 20
        %v2238 = vld [vmem:[%s2237] sm:$0xf]
        %v2239 = vld [vmem:[%s2237 + $0x4] sm:$0xf]
        %v2240 = vld [vmem:[%s2237 + $0x8] sm:$0xf]
        %v2241 = vld [vmem:[%s2237 + $0xc] sm:$0xf]
        %v2242 = vpack.c.bf16 %v2236, %v2236
        %v2243 = vld [vmem:[%s2237 + $0x10] sm:$0x1]
        %v2244 = vunpack.c.l.bf16 %v2243
        %v2249 = vunpack.c.l.b16 %v2238
        %v2250 = vunpack.c.l.b16 %v2239
        %v2251 = vunpack.c.l.b16 %v2240
        %v2252 = vunpack.c.l.b16 %v2241
        %v2253 = vpack.c.b16 %v2250, %v2249
        %v2254 = vpack.c.b16 %v2252, %v2251
        %v2258 = vsel %vm385, %v2242, 0
        %2260 = vmatprep.subr.bf16.mxu0 0
        %2261 = vmatpush1.bf16.msra.mxu0 %v2253
        %2262 = vmatprep.subr.bf16.mxu0 0
        %2263 = vmatpush1.bf16.msra.mxu0 %v2254
        %2264 = vmatprep.subr.bf16.mxu0 0
        %2265 = vmatpush1.bf16.msra.mxu0 0
        %2266 = vmatprep.subr.bf16.mxu0 0
        %2267 = vmatpush1.bf16.msra.mxu0 0
        %2268 = vmatprep.subr.bf16.mxu0 0
        %2269 = vmatpush1.bf16.msra.mxu0 0
        %2270 = vmatprep.subr.bf16.mxu0 0
        %2271 = vmatpush1.bf16.msra.mxu0 0
        %2272 = vmatprep.subr.bf16.mxu0 0
        %2273 = vmatpush1.bf16.msra.mxu0 0
        %2274 = vmatprep.subr.bf16.mxu0 0
        %2275 = vmatpush1.bf16.msra.mxu0 0
        %2276 = vmatprep.subr.bf16.mxu0 0
        %2277 = vmatpush1.bf16.msra.mxu0 0
        %2278 = vmatprep.subr.bf16.mxu0 0
        %2279 = vmatpush1.bf16.msra.mxu0 0
        %2280 = vmatprep.subr.bf16.mxu0 0
        %2281 = vmatpush1.bf16.msra.mxu0 0
        %2282 = vmatprep.subr.bf16.mxu0 0
        %2283 = vmatpush1.bf16.msra.mxu0 0
        %2284 = vmatprep.subr.bf16.mxu0 0
        %2285 = vmatpush1.bf16.msra.mxu0 0
        %2286 = vmatprep.subr.bf16.mxu0 0
        %2287 = vmatpush1.bf16.msra.mxu0 0
        %2288 = vmatprep.subr.bf16.mxu0 0
        %2289 = vmatpush1.bf16.msra.mxu0 0
        %2290 = vmatprep.subr.bf16.mxu0 0
        %2291 = vmatpush1.bf16.msra.mxu0 0
        %2292 = vmatprep.mubr.bf16.mxu0 0
        %2293 = vmatmul.mubr.bf16.gmra.mrb[0].mxu0 %v2258
        %v2294 = vpop.f32.mrb[0].mxu0
        %v2295 = vadd.f32 %v2244, %v2294
        %v2296 = vpop.f32.mrb[0].mxu0
        %v2297 = vpop.f32.mrb[0].mxu0
        %v2298 = vpop.f32.mrb[0].mxu0
        %2299 = vdwg.mxu0
        %v2300 = vadd.f32 %v1605, %v2295
        %v2301 = vsel %vm392, %v2300, 0.0
        %2302 = vadd.xlane.f32.xlu0 %v2301
        %v2303 = vpop.xlane.xlu0 %2302
        %v2304 = vmul.f32 %v2303, %v396
        %v2305 = vsub.f32 %v2300, %v2304
        %v2306 = vmul.f32 %v2305, %v2305
        %v2307 = vsel %vm392, %v2306, 0.0
        %2308 = vadd.xlane.f32.xlu0 %v2307
        %v2309 = vpop.xlane.xlu0 %2308
        %v2310 = vmul.f32 %v2309, %v396
        %v2311 = vadd.f32 %v2310, 1e-05
        %v2312 = vrsqrt.pop %v2311
        %v2313 = vmul.f32 %v2305, %v2312
        %v2315 = vrot.slane %v1609, 2
        %v2317 = vmul.f32 %v2313, %v2315
        %v2318 = vrot.slane %v1609, 3
        %v2320 = vadd.f32 %v2317, %v2318
        %s2321 = scalar_lea.vmem %s5, 20
        %v2322 = vld [vmem:[%s2321] sm:$0xf]
        %v2323 = vld [vmem:[%s2321 + $0x4] sm:$0xf]
        %v2324 = vld [vmem:[%s2321 + $0x8] sm:$0xf]
        %v2325 = vld [vmem:[%s2321 + $0xc] sm:$0xf]
        %v2326 = vpack.c.bf16 %v2320, %v2320
        %v2327 = vld [vmem:[%s2321 + $0x10] sm:$0x1]
        %v2328 = vunpack.c.l.bf16 %v2327
        %v2333 = vunpack.c.l.b16 %v2322
        %v2334 = vunpack.c.l.b16 %v2323
        %v2335 = vunpack.c.l.b16 %v2324
        %v2336 = vunpack.c.l.b16 %v2325
        %v2337 = vpack.c.b16 %v2334, %v2333
        %v2338 = vpack.c.b16 %v2336, %v2335
        %v2342 = vsel %vm385, %v2326, 0
        %2344 = vmatprep.subr.bf16.mxu0 0
        %2345 = vmatpush1.bf16.msra.mxu0 %v2337
        %2346 = vmatprep.subr.bf16.mxu0 0
        %2347 = vmatpush1.bf16.msra.mxu0 %v2338
        %2348 = vmatprep.subr.bf16.mxu0 0
        %2349 = vmatpush1.bf16.msra.mxu0 0
        %2350 = vmatprep.subr.bf16.mxu0 0
        %2351 = vmatpush1.bf16.msra.mxu0 0
        %2352 = vmatprep.subr.bf16.mxu0 0
        %2353 = vmatpush1.bf16.msra.mxu0 0
        %2354 = vmatprep.subr.bf16.mxu0 0
        %2355 = vmatpush1.bf16.msra.mxu0 0
        %2356 = vmatprep.subr.bf16.mxu0 0
        %2357 = vmatpush1.bf16.msra.mxu0 0
        %2358 = vmatprep.subr.bf16.mxu0 0
        %2359 = vmatpush1.bf16.msra.mxu0 0
        %2360 = vmatprep.subr.bf16.mxu0 0
        %2361 = vmatpush1.bf16.msra.mxu0 0
        %2362 = vmatprep.subr.bf16.mxu0 0
        %2363 = vmatpush1.bf16.msra.mxu0 0
        %2364 = vmatprep.subr.bf16.mxu0 0
        %2365 = vmatpush1.bf16.msra.mxu0 0
        %2366 = vmatprep.subr.bf16.mxu0 0
        %2367 = vmatpush1.bf16.msra.mxu0 0
        %2368 = vmatprep.subr.bf16.mxu0 0
        %2369 = vmatpush1.bf16.msra.mxu0 0
        %2370 = vmatprep.subr.bf16.mxu0 0
        %2371 = vmatpush1.bf16.msra.mxu0 0
        %2372 = vmatprep.subr.bf16.mxu0 0
        %2373 = vmatpush1.bf16.msra.mxu0 0
        %2374 = vmatprep.subr.bf16.mxu0 0
        %2375 = vmatpush1.bf16.msra.mxu0 0
        %2376 = vmatprep.mubr.bf16.mxu0 0
        %2377 = vmatmul.mubr.bf16.gmra.mrb[0].mxu0 %v2342
        %v2378 = vpop.f32.mrb[0].mxu0
        %v2379 = vadd.f32 %v2328, %v2378
        %v2380 = vpop.f32.mrb[0].mxu0
        %v2381 = vpop.f32.mrb[0].mxu0
        %v2382 = vpop.f32.mrb[0].mxu0
        %2383 = vdwg.mxu0
        %v2384 = vmul.f32 %v2379, 0.5
        %v2385 = vmul.f32 %v2379, %v2379
        %v2386 = vmul.f32 %v2385, %v2379
        %v2387 = vmul.f32 %v2386, 0.044715
        %v2388 = vadd.f32 %v2379, %v2387
        %v2389 = vmul.f32 %v2388, 0.7978846
        %v2390 = vtanh.pop %v2389
        %v2391 = vadd.f32 %v2390, 1.0
        %v2392 = vmul.f32 %v2384, %v2391
        %s2393 = scalar_lea.vmem %s6, 68
        %v2394 = vld [vmem:[%s2393] sm:$0xf]
        %v2395 = vld [vmem:[%s2393 + $0x4] sm:$0xf]
        %v2396 = vld [vmem:[%s2393 + $0x8] sm:$0xf]
        %v2397 = vld [vmem:[%s2393 + $0xc] sm:$0xf]
        %v2398 = vld [vmem:[%s2393 + $0x10] sm:$0xf]
        %v2399 = vld [vmem:[%s2393 + $0x14] sm:$0xf]
        %v2400 = vld [vmem:[%s2393 + $0x18] sm:$0xf]
        %v2401 = vld [vmem:[%s2393 + $0x1c] sm:$0xf]
        %v2402 = vld [vmem:[%s2393 + $0x20] sm:$0xf]
        %v2403 = vld [vmem:[%s2393 + $0x24] sm:$0xf]
        %v2404 = vld [vmem:[%s2393 + $0x28] sm:$0xf]
        %v2405 = vld [vmem:[%s2393 + $0x2c] sm:$0xf]
        %v2406 = vld [vmem:[%s2393 + $0x30] sm:$0xf]
        %v2407 = vld [vmem:[%s2393 + $0x34] sm:$0xf]
        %v2408 = vld [vmem:[%s2393 + $0x38] sm:$0xf]
        %v2409 = vld [vmem:[%s2393 + $0x3c] sm:$0xf]
        %v2410 = vpack.c.bf16 %v2392, %v2392
        %v2427 = vunpack.c.l.b16 %v2394
        %v2428 = vunpack.c.l.b16 %v2395
        %v2429 = vunpack.c.l.b16 %v2396
        %v2430 = vunpack.c.l.b16 %v2397
        %v2431 = vunpack.c.l.b16 %v2398
        %v2432 = vunpack.c.l.b16 %v2399
        %v2433 = vunpack.c.l.b16 %v2400
        %v2434 = vunpack.c.l.b16 %v2401
        %v2435 = vunpack.c.l.b16 %v2402
        %v2436 = vunpack.c.l.b16 %v2403
        %v2437 = vunpack.c.l.b16 %v2404
        %v2438 = vunpack.c.l.b16 %v2405
        %v2439 = vunpack.c.l.b16 %v2406
        %v2440 = vunpack.c.l.b16 %v2407
        %v2441 = vunpack.c.l.b16 %v2408
        %v2442 = vunpack.c.l.b16 %v2409
        %v2443 = vpack.c.b16 %v2428, %v2427
        %v2444 = vpack.c.b16 %v2430, %v2429
        %v2445 = vpack.c.b16 %v2432, %v2431
        %v2446 = vpack.c.b16 %v2434, %v2433
        %v2447 = vpack.c.b16 %v2436, %v2435
        %v2448 = vpack.c.b16 %v2438, %v2437
        %v2449 = vpack.c.b16 %v2440, %v2439
        %v2450 = vpack.c.b16 %v2442, %v2441
        %2459 = vmatprep.subr.bf16.mxu0 0
        %2460 = vmatpush1.bf16.msra.mxu0 %v2443
        %2461 = vmatprep.subr.bf16.mxu0 0
        %2462 = vmatpush1.bf16.msra.mxu0 %v2444
        %2463 = vmatprep.subr.bf16.mxu0 0
        %2464 = vmatpush1.bf16.msra.mxu0 %v2445
        %2465 = vmatprep.subr.bf16.mxu0 0
        %2466 = vmatpush1.bf16.msra.mxu0 %v2446
        %2467 = vmatprep.subr.bf16.mxu0 0
        %2468 = vmatpush1.bf16.msra.mxu0 %v2447
        %2469 = vmatprep.subr.bf16.mxu0 0
        %2470 = vmatpush1.bf16.msra.mxu0 %v2448
        %2471 = vmatprep.subr.bf16.mxu0 0
        %2472 = vmatpush1.bf16.msra.mxu0 %v2449
        %2473 = vmatprep.subr.bf16.mxu0 0
        %2474 = vmatpush1.bf16.msra.mxu0 %v2450
        %2475 = vmatprep.subr.bf16.mxu0 0
        %2476 = vmatpush1.bf16.msra.mxu0 0
        %2477 = vmatprep.subr.bf16.mxu0 0
        %2478 = vmatpush1.bf16.msra.mxu0 0
        %2479 = vmatprep.subr.bf16.mxu0 0
        %2480 = vmatpush1.bf16.msra.mxu0 0
        %2481 = vmatprep.subr.bf16.mxu0 0
        %2482 = vmatpush1.bf16.msra.mxu0 0
        %2483 = vmatprep.subr.bf16.mxu0 0
        %2484 = vmatpush1.bf16.msra.mxu0 0
        %2485 = vmatprep.subr.bf16.mxu0 0
        %2486 = vmatpush1.bf16.msra.mxu0 0
        %2487 = vmatprep.subr.bf16.mxu0 0
        %2488 = vmatpush1.bf16.msra.mxu0 0
        %2489 = vmatprep.subr.bf16.mxu0 0
        %2490 = vmatpush1.bf16.msra.mxu0 0
        %2491 = vmatprep.mubr.bf16.mxu0 0
        %2492 = vmatmul.mubr.bf16.gmra.mrb[0].mxu0 %v2410
        %v2493 = vpop.f32.mrb[0].mxu0
        %v2494 = vadd.f32 0.0, %v2493
        %v2495 = vpop.f32.mrb[0].mxu0
        %v2496 = vpop.f32.mrb[0].mxu0
        %v2497 = vpop.f32.mrb[0].mxu0
        %2498 = vdwg.mxu0
        %v2499 = vadd.f32 %v2300, %v2494
        %v2500 = vld [vmem:[%s2393 + $0x40] sm:$0x1]
        %v2501 = vunpack.c.l.bf16 %v2500
        %v2502 = vadd.f32 %v2499, %v2501
        %v2503 = vld [vmem:[%s7] sm:$0xf]
        %v2504 = vld [vmem:[%s7 + $0x4] sm:$0xf]
        %v2505 = vld [vmem:[%s7 + $0x8] sm:$0xf]
        %v2506 = vld [vmem:[%s7 + $0xc] sm:$0xf]
        %v2507 = vpack.c.bf16 %v2502, %v2502
        %v2508 = vld [vmem:[%s7 + $0x10] sm:$0x1]
        %v2509 = vunpack.c.l.bf16 %v2508
        %v2514 = vunpack.c.l.b16 %v2503
        %v2515 = vunpack.c.l.b16 %v2504
        %v2516 = vunpack.c.l.b16 %v2505
        %v2517 = vunpack.c.l.b16 %v2506
        %v2518 = vpack.c.b16 %v2515, %v2514
        %v2519 = vpack.c.b16 %v2517, %v2516
        %v2523 = vsel %vm385, %v2507, 0
        %2525 = vmatprep.subr.bf16.mxu0 0
        %2526 = vmatpush1.bf16.msra.mxu0 %v2518
        %2527 = vmatprep.subr.bf16.mxu0 0
        %2528 = vmatpush1.bf16.msra.mxu0 %v2519
        %2529 = vmatprep.subr.bf16.mxu0 0
        %2530 = vmatpush1.bf16.msra.mxu0 0
        %2531 = vmatprep.subr.bf16.mxu0 0
        %2532 = vmatpush1.bf16.msra.mxu0 0
        %2533 = vmatprep.subr.bf16.mxu0 0
        %2534 = vmatpush1.bf16.msra.mxu0 0
        %2535 = vmatprep.subr.bf16.mxu0 0
        %2536 = vmatpush1.bf16.msra.mxu0 0
        %2537 = vmatprep.subr.bf16.mxu0 0
        %2538 = vmatpush1.bf16.msra.mxu0 0
        %2539 = vmatprep.subr.bf16.mxu0 0
        %2540 = vmatpush1.bf16.msra.mxu0 0
        %2541 = vmatprep.subr.bf16.mxu0 0
        %2542 = vmatpush1.bf16.msra.mxu0 0
        %2543 = vmatprep.subr.bf16.mxu0 0
        %2544 = vmatpush1.bf16.msra.mxu0 0
        %2545 = vmatprep.subr.bf16.mxu0 0
        %2546 = vmatpush1.bf16.msra.mxu0 0
        %2547 = vmatprep.subr.bf16.mxu0 0
        %2548 = vmatpush1.bf16.msra.mxu0 0
        %2549 = vmatprep.subr.bf16.mxu0 0
        %2550 = vmatpush1.bf16.msra.mxu0 0
        %2551 = vmatprep.subr.bf16.mxu0 0
        %2552 = vmatpush1.bf16.msra.mxu0 0
        %2553 = vmatprep.subr.bf16.mxu0 0
        %2554 = vmatpush1.bf16.msra.mxu0 0
        %2555 = vmatprep.subr.bf16.mxu0 0
        %2556 = vmatpush1.bf16.msra.mxu0 0
        %2557 = vmatprep.mubr.bf16.mxu0 0
        %2558 = vmatmul.mubr.bf16.gmra.mrb[0].mxu0 %v2523
        %v2559 = vpop.f32.mrb[0].mxu0
        %v2560 = vadd.f32 %v2509, %v2559
        %v2561 = vpop.f32.mrb[0].mxu0
        %v2562 = vpop.f32.mrb[0].mxu0
        %v2563 = vpop.f32.mrb[0].mxu0
        %2564 = vdwg.mxu0
        %vm2565 = vcmask 8192
        %2566 = vst.msk [vmem:[%s297] sm:$0x1] %vm2565, %v2560
        %s2567 = sand.u32 %s203, 1
        %s2568 = scalar_lea.sflag [#allocation3], %s2567
        %s2569 = sand.u32 %s203, 1
        %s2570 = scalar_lea.vmem [#allocation2], %s2569
        // Predicated region
        $region53: #{vit_forward.1} parent=51 // pred_check
          %p2571 = pneg %p213
        $region54: #{vit_forward.1} parent=51 // pred_check_branch
          %2573 = sbr.rel (%p2571) target = $region56
        $region55: #{vit_forward.1} parent=51 // pred_region
          %s2575 = ssub.s32 16, 16
          %2576 = vsyncadd %s2568, %s2575
          %s2577 = smul.addr %s22, 16
          %s2578 = scalar_lea.hbm %s8, %s2577
          %s2580 = sshll.u32 %s2570, 4
          %s2581 = int_to_ptr.vmem [resolvable:$true] %s2580
          %2583 = dma.vmem_to_hbm [thread:$0]  %s2581, 16, %s2578, %s2568
        $region56: #{vit_forward.1} parent=51 // pred_fallthru
          _
      $region52: #{vit_forward.1} parent=5 // pred_fallthru
        _
      %p2584 = scmp.le.s32.totalorder 2, %s17
      // Predicated region
      $region57: #{vit_forward.1} parent=5 // pred_check
        %p2585 = pneg %p2584
      $region58: #{vit_forward.1} parent=5 // pred_check_branch
        %2587 = sbr.rel (%p2585) target = $region60
      $region59: #{vit_forward.1} parent=5 // pred_region
        %s2588 = ssub.s32 %s17, 2
        // Predicated region
        $region61: #{vit_forward.1} parent=59 // pred_check
          %p2589 = pneg %p219
        $region62: #{vit_forward.1} parent=59 // pred_check_branch
          %2591 = sbr.rel (%p2589) target = $region64
        $region63: #{vit_forward.1} parent=59 // pred_region
          %s2592 = sand.u32 %s204, 1
          %s2593 = scalar_lea.sflag [#allocation3], %s2592
          %s2594 = sand.u32 %s204, 1
          %s2595 = scalar_lea.vmem [#allocation2], %s2594
          %2596 = dma.done %s2593, 16
        $region64: #{vit_forward.1} parent=59 // pred_fallthru
          _
      $region60: #{vit_forward.1} parent=5 // pred_fallthru
        _
    $region6: #{vit_forward.1} parent=1 // loop_footer
      %s21 = sadd.s32 1, %s17
    $region7: #{vit_forward.1} parent=1 // loop_footer_branch
      %16 = sbr.rel target = $region3
    $region8: #{vit_forward.1} parent=1 // loop_exit
      _
    %2597 = vsyncpa [#allocation3], 1
    %s2598 = scalar_lea.sflag [#allocation3], 1
    %2599 = vsyncpa %s2598, 1

</llo_original>
